<compile_context>
chip_gen: v7x
topology: tpu7x:2x2x1
jax: 0.10.0
libtpu: 0.0.40
codegen_flags: <defaults>
</compile_context>

<pallas_src>
import functools
import math

import jax
import jax.numpy as jnp
from jax.experimental import pallas as pl
from jax.experimental.pallas import tpu as pltpu

CP = 128            # lane-padded channel width for stored activations
NUM_CLASSES = 10
CONV1_K = 160       # round_up(7*7*3, 16)


def _round_up(v, m):
    return (v + m - 1) // m * m


def _num_tensorcores():
    """Best-effort TensorCore count (v7x reports 2); defaults to 1."""
    try:
        info = pltpu.get_tpu_info()
    except Exception:
        return 1
    for name in ("num_cores", "core_count", "cores_per_chip",
                 "tensorcores_per_chip", "num_tensorcores"):
        v = getattr(info, name, None)
        if v is None:
            continue
        try:
            v = int(v)
        except Exception:
            continue
        if v >= 1:
            return v
    return 1


_NUM_TC = None


def _pick_tm(M):
    """Single grid step on 1-TC chips; 2-way split only for multi-TC (v7x)."""
    global _NUM_TC
    if _NUM_TC is None:
        _NUM_TC = _num_tensorcores()
    if _NUM_TC >= 2 and M >= 256:
        return _round_up((M + _NUM_TC - 1) // _NUM_TC, 16)
    return min(_round_up(M, 16), 512)


# --------------------------------------------------------------------------
# Pallas kernels
# --------------------------------------------------------------------------

def _mm_kernel(a_ref, b_ref, s_ref, o_ref, *, relu):
    """o = relu_opt(a @ b + shift).  BN scale pre-folded into b; the 1x1
    downsample of strided blocks is already fused into a/b along K."""
    acc = jnp.dot(a_ref[...], b_ref[...], preferred_element_type=jnp.float32)
    acc = acc + s_ref[...]
    if relu:
        acc = jnp.maximum(acc, 0.0)
    o_ref[...] = acc.astype(o_ref.dtype)


def _mm_add_kernel(a_ref, b_ref, s_ref, r_ref, o_ref):
    """o = relu(a @ b + shift + residual)  (identity-residual BasicBlock)."""
    acc = jnp.dot(a_ref[...], b_ref[...], preferred_element_type=jnp.float32)
    acc = acc + s_ref[...] + r_ref[...].astype(jnp.float32)
    o_ref[...] = jnp.maximum(acc, 0.0).astype(o_ref.dtype)


def _mm_fc_kernel(a_ref, b_ref, s_ref, fw_ref, fb_ref, o_ref):
    """Last block (spatial 1x1): relu(a @ b + shift) then fused avgpool
    (identity) + FC.  Only per-row ops -> padded garbage rows stay row-local
    and are masked on store."""
    acc = jnp.dot(a_ref[...], b_ref[...], preferred_element_type=jnp.float32)
    acc = jnp.maximum(acc + s_ref[...], 0.0)
    h = acc.astype(fw_ref.dtype)
    logits = jnp.dot(h, fw_ref[...], preferred_element_type=jnp.float32)
    o_ref[...] = logits + fb_ref[...]


def _mm_add_fc_kernel(a_ref, b_ref, s_ref, r_ref, fw_ref, fb_ref, o_ref):
    """Identity-residual variant of _mm_fc_kernel (not used in this config)."""
    acc = jnp.dot(a_ref[...], b_ref[...], preferred_element_type=jnp.float32)
    acc = jnp.maximum(acc + s_ref[...] + r_ref[...].astype(jnp.float32), 0.0)
    h = acc.astype(fw_ref.dtype)
    o_ref[...] = jnp.dot(h, fw_ref[...],
                         preferred_element_type=jnp.float32) + fb_ref[...]


def _maxpool_kernel(x_ref, o_ref, *, k2):
    """x_ref: [k*k, M, C] stacked window taps -> elementwise max over taps.
    Dense [M, C] loads/stores (M, C multiples of (16,128)); no masked access."""
    acc = x_ref[0]
    for i in range(1, k2):
        acc = jnp.maximum(acc, x_ref[i])
    o_ref[...] = acc


def _avgpool_fc_kernel(x_ref, w_ref, b_ref, o_ref, *, inv_hw):
    """Fallback tail (spatial > 1): global mean over HW then FC (bf16 MXU,
    f32 accumulation)."""
    feat = jnp.sum(x_ref[...].astype(jnp.float32), axis=1) * inv_hw
    acc = jnp.dot(feat.astype(w_ref.dtype), w_ref[...],
                  preferred_element_type=jnp.float32)
    o_ref[...] = acc + b_ref[...]


# --------------------------------------------------------------------------
# Kernel wrappers
# --------------------------------------------------------------------------

def _fused_matmul(a, b, shift, residual=None, relu=True, fc=None):
    """a:[M,K] bf16, b:[K,128] bf16, shift:[1,128] f32.

    residual : optional [M,128] bf16 identity residual (add + ReLU epilogue).
    fc       : optional (fc_w [128,128] bf16, fc_b [1,128] f32) -> the output
               becomes f32 logits (avgpool-identity + FC fused epilogue).
    """
    M, K = a.shape
    Nc = b.shape[1]
    tm = _pick_tm(M)
    grid = (pl.cdiv(M, tm),)

    a_spec = pl.BlockSpec((tm, K), lambda i: (i, 0))

    def full(arr):
        return pl.BlockSpec(arr.shape, lambda i: (0, 0))

    in_specs = [a_spec, full(b), full(shift)]
    args = [a, b, shift]
    if residual is not None:
        in_specs.append(pl.BlockSpec((tm, residual.shape[1]), lambda i: (i, 0)))
        args.append(residual)

    if fc is None:
        kernel = (functools.partial(_mm_kernel, relu=relu)
                  if residual is None else _mm_add_kernel)
        n_out, out_dtype = Nc, jnp.bfloat16
    else:
        fw, fb = fc
        in_specs += [full(fw), full(fb)]
        args += [fw, fb]
        kernel = _mm_fc_kernel if residual is None else _mm_add_fc_kernel
        n_out, out_dtype = fw.shape[1], jnp.float32

    out_spec = pl.BlockSpec((tm, n_out), lambda i: (i, 0))

    return pl.pallas_call(
        kernel,
        out_shape=jax.ShapeDtypeStruct((M, n_out), out_dtype),
        grid_spec=pltpu.PrefetchScalarGridSpec(
            num_scalar_prefetch=0,
            grid=grid,
            in_specs=in_specs,
            out_specs=out_spec),
        compiler_params=pltpu.CompilerParams(
            dimension_semantics=("parallel",)),
    )(*args)


def _im2col_mat(x, kh, kw, stride, padding, cin, k_pad=None):
    """NHWC -> patches [N*Ho*Wo, kh*kw*cin] (bf16, wrapper-side glue).

    Only the first `cin` (real, 16-rounded) channels are gathered, so K and
    the patch HBM traffic scale with the real layer width, not 128.
    """
    N, H, W, C = x.shape
    if cin < C:
        x = x[..., :cin]
    Ho = (H + 2 * padding - kh) // stride + 1
    Wo = (W + 2 * padding - kw) // stride + 1
    if padding:
        x = jnp.pad(x, ((0, 0), (padding, padding), (padding, padding), (0, 0)))
    cols = []
    for di in range(kh):
        for dj in range(kw):
            cols.append(x[:, di:di + stride * (Ho - 1) + 1:stride,
                          dj:dj + stride * (Wo - 1) + 1:stride, :])
    patches = jnp.concatenate(cols, axis=-1).reshape(N * Ho * Wo, kh * kw * cin)
    if k_pad is not None and k_pad > kh * kw * cin:
        patches = jnp.pad(patches, ((0, 0), (0, k_pad - kh * kw * cin)))
    return patches, N, Ho, Wo


def conv_bn(x, w, shift, *, cin, kh, kw, stride, padding, relu, k_pad=None):
    """conv + folded BN (+ optional ReLU).  w: [K, 128] bf16."""
    patches, N, Ho, Wo = _im2col_mat(x, kh, kw, stride, padding,
                                     cin=cin, k_pad=k_pad)
    out = _fused_matmul(patches, w, shift, relu=relu)
    return out.reshape(N, Ho, Wo, w.shape[1])


def maxpool2d_3x3s2(x):
    """3x3 / stride-2 / pad-1 max pool on NHWC bf16."""
    N, H, W, C = x.shape
    k, stride, pad = 3, 2, 1
    Ho = (H + 2 * pad - k) // stride + 1
    Wo = (W + 2 * pad - k) // stride + 1
    neg = float(jnp.finfo(x.dtype).min)
    xp = jnp.pad(x, ((0, 0), (pad, pad), (pad, pad), (0, 0)),
                 constant_values=neg)
    # 9 downsampled window taps, each the size of the OUTPUT (tiny); the
    # kernel is then a dense, unmasked elementwise max.
    taps = [xp[:, ki:ki + stride * (Ho - 1) + 1:stride,
               kj:kj + stride * (Wo - 1) + 1:stride, :]
            for ki in range(k) for kj in range(k)]
    stacked = jnp.stack(taps, axis=0).reshape(k * k, N * Ho * Wo, C)
    # TODO(synk): add a grid over N (and vmem_limit_bytes) before scaling the
    # batch so this whole-array VMEM kernel stays under v7x's 64 MiB VMEM.
    out = pl.pallas_call(
        functools.partial(_maxpool_kernel, k2=k * k),
        out_shape=jax.ShapeDtypeStruct((N * Ho * Wo, C), x.dtype),
        in_specs=[pl.BlockSpec(memory_space=pltpu.MemorySpace.VMEM)],
        out_specs=pl.BlockSpec(memory_space=pltpu.MemorySpace.VMEM),
    )(stacked)
    return out.reshape(N, Ho, Wo, C)


def avgpool_fc(x, fc_w, fc_b):
    """Fallback: global average pool fused with the final FC layer."""
    N, H, W, C = x.shape
    xr = x.reshape(N, H * W, C)
    return pl.pallas_call(
        functools.partial(_avgpool_fc_kernel, inv_hw=1.0 / float(H * W)),
        out_shape=jax.ShapeDtypeStruct((N, fc_w.shape[1]), jnp.float32),
        in_specs=[pl.BlockSpec(memory_space=pltpu.MemorySpace.VMEM)] * 3,
        out_specs=pl.BlockSpec(memory_space=pltpu.MemorySpace.VMEM),
    )(xr, fc_w, fc_b)


# --------------------------------------------------------------------------
# Model
# --------------------------------------------------------------------------

def basic_block(x, p, *, stride, cin, cout, fc=None):
    """conv1->bn1->relu->dropout(0)->conv2->bn2 ; relu(out + residual).

    cin / cout are the 16-rounded real channel counts (static Python ints).
    Strided / widening blocks have their 1x1 downsample conv fused along K
    into the conv2 GEMM (weights pre-concatenated, shifts pre-summed).
    If `fc` is given and the output spatial is 1x1, the avgpool(identity)+FC
    tail is fused into the conv2 kernel and f32 logits are returned.
    """
    h = conv_bn(x, p['w1'], p['s1'], cin=cin, kh=3, kw=3, stride=stride,
                padding=1, relu=True)
    patches, N, Ho, Wo = _im2col_mat(h, 3, 3, 1, 1, cin=cout)
    has_down = (stride != 1) or (cin != cout)
    if has_down:
        # Downsample residual enters the GEMM as extra K columns.
        xs = x[:, ::stride, ::stride, :cin].reshape(N * Ho * Wo, cin)
        a = jnp.concatenate([patches, xs], axis=1)
        residual = None
    else:
        a = patches
        residual = x.reshape(N * Ho * Wo, x.shape[3])

    fuse_fc = (fc is not None) and (Ho * Wo == 1)
    out = _fused_matmul(a, p['w2'], p['s2'], residual=residual,
                        fc=fc if fuse_fc else None)
    if fuse_fc:
        return out                              # [N, CP] f32 logits
    return out.reshape(N, Ho, Wo, CP)


def resnet_forward(x_nchw, params):
    x = jnp.transpose(x_nchw, (0, 2, 3, 1)).astype(jnp.bfloat16)  # NCHW->NHWC
    x = conv_bn(x, params['conv1_w'], params['conv1_s'],
                cin=3, k_pad=CONV1_K, kh=7, kw=7, stride=2, padding=3,
                relu=True)
    x = maxpool2d_3x3s2(x)
    # TODO(synk): each BasicBlock could be fused into a single pallas_call
    # with the activation resident in VMEM (in-kernel 9-tap im2col); kept as
    # one GEMM kernel per conv for robust lowering.
    x = basic_block(x, params['layer1'], stride=1, cin=16, cout=16)
    x = basic_block(x, params['layer2'], stride=2, cin=16, cout=32)
    x = basic_block(x, params['layer3'], stride=2, cin=32, cout=64)
    out = basic_block(x, params['layer4'], stride=2, cin=64, cout=128,
                      fc=(params['fc_w'], params['fc_b']))
    if out.ndim == 4:        # FC not fused (spatial > 1): separate tail kernel
        out = avgpool_fc(out, params['fc_w'], params['fc_b'])
    return out[:, :NUM_CLASSES]


# --------------------------------------------------------------------------
# Deterministic parameter init (eval-mode BN folded into weights/shifts;
# Cout lane-padded to 128; K built from real channels rounded to 16;
# downsample conv pre-fused into conv2 along K; weights cast to bf16)
# --------------------------------------------------------------------------

def _fold_bn(key, c, eps=1e-5):
    k1, k2, k3, k4 = jax.random.split(key, 4)
    gamma = 1.0 + 0.1 * jax.random.normal(k1, (c,), jnp.float32)
    beta = 0.1 * jax.random.normal(k2, (c,), jnp.float32)
    mean = 0.1 * jax.random.normal(k3, (c,), jnp.float32)
    var = 0.5 + jax.random.uniform(k4, (c,), jnp.float32)
    scale = gamma / jnp.sqrt(var + eps)
    shift = beta - mean * scale
    return scale, shift


def _conv_bn_params(key, kh, kw, cin_real, cout_real, cin_eff, k_pad=None):
    kw_key, bn_key = jax.random.split(key)
    std = 1.0 / math.sqrt(kh * kw * cin_real)
    w = jax.random.normal(kw_key, (kh, kw, cin_real, cout_real),
                          jnp.float32) * std
    scale, shift = _fold_bn(bn_key, cout_real)
    w = w * scale                                # fold BN scale into weights
    w_p = jnp.zeros((kh, kw, cin_eff, CP), jnp.float32)
    w_p = w_p.at[:, :, :cin_real, :cout_real].set(w)
    w_flat = w_p.reshape(kh * kw * cin_eff, CP)
    k_raw = kh * kw * cin_eff
    K = k_pad if k_pad is not None else _round_up(k_raw, 16)
    if K > k_raw:
        w_flat = jnp.pad(w_flat, ((0, K - k_raw), (0, 0)))
    s_p = jnp.zeros((1, CP), jnp.float32).at[0, :cout_real].set(shift)
    return w_flat.astype(jnp.bfloat16), s_p


def _block_params(key, cin_real, cout_real, stride):
    k1, k2, k3 = jax.random.split(key, 3)
    cin_r = _round_up(cin_real, 16)
    cout_r = _round_up(cout_real, 16)
    p = {}
    p['w1'], p['s1'] = _conv_bn_params(k1, 3, 3, cin_real, cout_real,
                                       cin_eff=cin_r)
    w2, s2 = _conv_bn_params(k2, 3, 3, cout_real, cout_real, cin_eff=cout_r)
    if stride != 1 or cin_real != cout_real:
        # 1x1 downsample conv + BN, fused under conv2 along K.
        wd, sd = _conv_bn_params(k3, 1, 1, cin_real, cout_real, cin_eff=cin_r)
        p['w2'] = jnp.concatenate([w2, wd], axis=0)
        p['s2'] = s2 + sd
    else:
        p['w2'], p['s2'] = w2, s2
    return p


def init_params(key):
    ks = jax.random.split(key, 7)
    params = {}
    params['conv1_w'], params['conv1_s'] = _conv_bn_params(
        ks[0], 7, 7, 3, 16, cin_eff=3, k_pad=CONV1_K)
    params['layer1'] = _block_params(ks[1], 16, 16, stride=1)
    params['layer2'] = _block_params(ks[2], 16, 32, stride=2)
    params['layer3'] = _block_params(ks[3], 32, 64, stride=2)
    params['layer4'] = _block_params(ks[4], 64, 128, stride=2)
    fc_w = jax.random.normal(ks[5], (128, NUM_CLASSES),
                             jnp.float32) / math.sqrt(128)
    fc_b = 0.01 * jax.random.normal(ks[6], (NUM_CLASSES,), jnp.float32)
    params['fc_w'] = (jnp.zeros((CP, CP), jnp.float32)
                      .at[:, :NUM_CLASSES].set(fc_w).astype(jnp.bfloat16))
    params['fc_b'] = jnp.zeros((1, CP), jnp.float32).at[0, :NUM_CLASSES].set(fc_b)
    return params


# TODO(synk): `residual_block` / MixUp hooks of the PyTorch base class are None
# in this config and are not modeled; BN is eval-mode (running stats folded).

if __name__ == "__main__":
    key = jax.random.PRNGKey(0)
    kx, kp = jax.random.split(key)
    x = jax.random.normal(kx, (2, 3, 32, 32), jnp.float32)   # NCHW like PyTorch
    params = init_params(kp)

    fwd = jax.jit(resnet_forward)
    logits = fwd(x, params)
    jax.block_until_ready(logits)
    assert logits.shape == (2, NUM_CLASSES), logits.shape
    assert bool(jnp.all(jnp.isfinite(logits)))
    print("KERNEL_OK")
</pallas_src>

<mosaic_0001>
module attributes {stable_mosaic.version = 11 : i64} {
  func.func @_mm_kernel(%arg0: i32, %arg1: memref<512x160xbf16, #tpu.memory_space<vmem>>, %arg2: memref<160x128xbf16, #tpu.memory_space<vmem>>, %arg3: memref<1x128xf32, #tpu.memory_space<vmem>>, %arg4: memref<512x128xbf16, #tpu.memory_space<vmem>>) attributes {dimension_semantics = [#tpu.dimension_semantics<parallel>], iteration_bounds = array<i64: 1>, scalar_prefetch = 0 : i64, scratch_operands = 0 : i64, tpu.core_type = #tpu.core_type<tc>, window_params = [{transform_indices = @transform_0, window_bounds = array<i64: 512, 160>}, {pipeline_mode = #tpu.pipeline_mode<synchronous>, transform_indices = @transform_1, window_bounds = array<i64: 160, 128>}, {pipeline_mode = #tpu.pipeline_mode<synchronous>, transform_indices = @transform_2, window_bounds = array<i64: 1, 128>}, {transform_indices = @transform_3, window_bounds = array<i64: 512, 128>}]} {
    %c0 = arith.constant 0 : index
    %c0_0 = arith.constant 0 : index
    %0 = vector.load %arg1[%c0, %c0_0] : memref<512x160xbf16, #tpu.memory_space<vmem>>, vector<512x160xbf16>
    %c0_1 = arith.constant 0 : index
    %c0_2 = arith.constant 0 : index
    %1 = vector.load %arg2[%c0_1, %c0_2] : memref<160x128xbf16, #tpu.memory_space<vmem>>, vector<160x128xbf16>
    %cst = arith.constant dense<0.000000e+00> : vector<512x128xf32>
    %2 = tpu.matmul %0, %1, %cst {dimension_numbers = #tpu.dot_dimension_numbers<[1], [0], [0], [1], [0, 0, 1, 1], [], []>} : vector<512x160xbf16>, vector<160x128xbf16>, vector<512x128xf32> -> vector<512x128xf32>
    %c0_3 = arith.constant 0 : index
    %c0_4 = arith.constant 0 : index
    %3 = vector.load %arg3[%c0_3, %c0_4] : memref<1x128xf32, #tpu.memory_space<vmem>>, vector<1x128xf32>
    %4 = vector.broadcast %3 : vector<1x128xf32> to vector<512x128xf32>
    %5 = arith.addf %2, %4 : vector<512x128xf32>
    %cst_5 = arith.constant 0.000000e+00 : f32
    %6 = vector.broadcast %cst_5 : f32 to vector<512x128xf32>
    %7 = arith.maximumf %5, %6 : vector<512x128xf32>
    %8 = arith.truncf %7 : vector<512x128xf32> to vector<512x128xbf16>
    %c0_6 = arith.constant 0 : index
    %c0_7 = arith.constant 0 : index
    %9 = vector.load %arg4[%c0_6, %c0_7] : memref<512x128xbf16, #tpu.memory_space<vmem>>, vector<512x128xbf16>
    tpu.vector_store %arg4[%c0_6, %c0_7], %8 {strides = array<i32>} : memref<512x128xbf16, #tpu.memory_space<vmem>>, vector<512x128xbf16>,
    return
  }
  func.func @transform_0(%arg0: i32) -> (i32, i32) {
    %c0_i32 = arith.constant 0 : i32
    %c0_i32_0 = arith.constant 0 : i32
    return %arg0, %c0_i32 : i32, i32
  }
  func.func @transform_1(%arg0: i32) -> (i32, i32) {
    %c0_i32 = arith.constant 0 : i32
    %c0_i32_0 = arith.constant 0 : i32
    %c0_i32_1 = arith.constant 0 : i32
    return %c0_i32, %c0_i32_0 : i32, i32
  }
  func.func @transform_2(%arg0: i32) -> (i32, i32) {
    %c0_i32 = arith.constant 0 : i32
    %c0_i32_0 = arith.constant 0 : i32
    %c0_i32_1 = arith.constant 0 : i32
    return %c0_i32, %c0_i32_0 : i32, i32
  }
  func.func @transform_3(%arg0: i32) -> (i32, i32) {
    %c0_i32 = arith.constant 0 : i32
    %c0_i32_0 = arith.constant 0 : i32
    return %arg0, %c0_i32 : i32, i32
  }
}

module attributes {stable_mosaic.version = 11 : i64} {
  func.func @_maxpool_kernel(%arg0: memref<9x128x128xbf16, #tpu.memory_space<vmem>>, %arg1: memref<128x128xbf16, #tpu.memory_space<vmem>>) attributes {dimension_semantics = [], scalar_prefetch = 0 : i64, scratch_operands = 0 : i64, tpu.core_type = #tpu.core_type<tc>} {
    %c0 = arith.constant 0 : index
    %c0_0 = arith.constant 0 : index
    %c0_1 = arith.constant 0 : index
    %0 = vector.load %arg0[%c0, %c0_0, %c0_1] : memref<9x128x128xbf16, #tpu.memory_space<vmem>>, vector<1x128x128xbf16>
    %1 = vector.shape_cast %0 : vector<1x128x128xbf16> to vector<128x128xbf16>
    %c1 = arith.constant 1 : index
    %c0_2 = arith.constant 0 : index
    %c0_3 = arith.constant 0 : index
    %2 = vector.load %arg0[%c1, %c0_2, %c0_3] : memref<9x128x128xbf16, #tpu.memory_space<vmem>>, vector<1x128x128xbf16>
    %3 = vector.shape_cast %2 : vector<1x128x128xbf16> to vector<128x128xbf16>
    %4 = arith.maximumf %1, %3 : vector<128x128xbf16>
    %c2 = arith.constant 2 : index
    %c0_4 = arith.constant 0 : index
    %c0_5 = arith.constant 0 : index
    %5 = vector.load %arg0[%c2, %c0_4, %c0_5] : memref<9x128x128xbf16, #tpu.memory_space<vmem>>, vector<1x128x128xbf16>
    %6 = vector.shape_cast %5 : vector<1x128x128xbf16> to vector<128x128xbf16>
    %7 = arith.maximumf %4, %6 : vector<128x128xbf16>
    %c3 = arith.constant 3 : index
    %c0_6 = arith.constant 0 : index
    %c0_7 = arith.constant 0 : index
    %8 = vector.load %arg0[%c3, %c0_6, %c0_7] : memref<9x128x128xbf16, #tpu.memory_space<vmem>>, vector<1x128x128xbf16>
    %9 = vector.shape_cast %8 : vector<1x128x128xbf16> to vector<128x128xbf16>
    %10 = arith.maximumf %7, %9 : vector<128x128xbf16>
    %c4 = arith.constant 4 : index
    %c0_8 = arith.constant 0 : index
    %c0_9 = arith.constant 0 : index
    %11 = vector.load %arg0[%c4, %c0_8, %c0_9] : memref<9x128x128xbf16, #tpu.memory_space<vmem>>, vector<1x128x128xbf16>
    %12 = vector.shape_cast %11 : vector<1x128x128xbf16> to vector<128x128xbf16>
    %13 = arith.maximumf %10, %12 : vector<128x128xbf16>
    %c5 = arith.constant 5 : index
    %c0_10 = arith.constant 0 : index
    %c0_11 = arith.constant 0 : index
    %14 = vector.load %arg0[%c5, %c0_10, %c0_11] : memref<9x128x128xbf16, #tpu.memory_space<vmem>>, vector<1x128x128xbf16>
    %15 = vector.shape_cast %14 : vector<1x128x128xbf16> to vector<128x128xbf16>
    %16 = arith.maximumf %13, %15 : vector<128x128xbf16>
    %c6 = arith.constant 6 : index
    %c0_12 = arith.constant 0 : index
    %c0_13 = arith.constant 0 : index
    %17 = vector.load %arg0[%c6, %c0_12, %c0_13] : memref<9x128x128xbf16, #tpu.memory_space<vmem>>, vector<1x128x128xbf16>
    %18 = vector.shape_cast %17 : vector<1x128x128xbf16> to vector<128x128xbf16>
    %19 = arith.maximumf %16, %18 : vector<128x128xbf16>
    %c7 = arith.constant 7 : index
    %c0_14 = arith.constant 0 : index
    %c0_15 = arith.constant 0 : index
    %20 = vector.load %arg0[%c7, %c0_14, %c0_15] : memref<9x128x128xbf16, #tpu.memory_space<vmem>>, vector<1x128x128xbf16>
    %21 = vector.shape_cast %20 : vector<1x128x128xbf16> to vector<128x128xbf16>
    %22 = arith.maximumf %19, %21 : vector<128x128xbf16>
    %c8 = arith.constant 8 : index
    %c0_16 = arith.constant 0 : index
    %c0_17 = arith.constant 0 : index
    %23 = vector.load %arg0[%c8, %c0_16, %c0_17] : memref<9x128x128xbf16, #tpu.memory_space<vmem>>, vector<1x128x128xbf16>
    %24 = vector.shape_cast %23 : vector<1x128x128xbf16> to vector<128x128xbf16>
    %25 = arith.maximumf %22, %24 : vector<128x128xbf16>
    %c0_18 = arith.constant 0 : index
    %c0_19 = arith.constant 0 : index
    %26 = vector.load %arg1[%c0_18, %c0_19] : memref<128x128xbf16, #tpu.memory_space<vmem>>, vector<128x128xbf16>
    tpu.vector_store %arg1[%c0_18, %c0_19], %25 {strides = array<i32>} : memref<128x128xbf16, #tpu.memory_space<vmem>>, vector<128x128xbf16>,
    return
  }
}

module attributes {stable_mosaic.version = 11 : i64} {
  func.func @_mm_kernel(%arg0: i32, %arg1: memref<128x144xbf16, #tpu.memory_space<vmem>>, %arg2: memref<144x128xbf16, #tpu.memory_space<vmem>>, %arg3: memref<1x128xf32, #tpu.memory_space<vmem>>, %arg4: memref<128x128xbf16, #tpu.memory_space<vmem>>) attributes {dimension_semantics = [#tpu.dimension_semantics<parallel>], iteration_bounds = array<i64: 1>, scalar_prefetch = 0 : i64, scratch_operands = 0 : i64, tpu.core_type = #tpu.core_type<tc>, window_params = [{transform_indices = @transform_0, window_bounds = array<i64: 128, 144>}, {pipeline_mode = #tpu.pipeline_mode<synchronous>, transform_indices = @transform_1, window_bounds = array<i64: 144, 128>}, {pipeline_mode = #tpu.pipeline_mode<synchronous>, transform_indices = @transform_2, window_bounds = array<i64: 1, 128>}, {transform_indices = @transform_3, window_bounds = array<i64: 128, 128>}]} {
    %c0 = arith.constant 0 : index
    %c0_0 = arith.constant 0 : index
    %0 = vector.load %arg1[%c0, %c0_0] : memref<128x144xbf16, #tpu.memory_space<vmem>>, vector<128x144xbf16>
    %c0_1 = arith.constant 0 : index
    %c0_2 = arith.constant 0 : index
    %1 = vector.load %arg2[%c0_1, %c0_2] : memref<144x128xbf16, #tpu.memory_space<vmem>>, vector<144x128xbf16>
    %cst = arith.constant dense<0.000000e+00> : vector<128x128xf32>
    %2 = tpu.matmul %0, %1, %cst {dimension_numbers = #tpu.dot_dimension_numbers<[1], [0], [0], [1], [0, 0, 1, 1], [], []>} : vector<128x144xbf16>, vector<144x128xbf16>, vector<128x128xf32> -> vector<128x128xf32>
    %c0_3 = arith.constant 0 : index
    %c0_4 = arith.constant 0 : index
    %3 = vector.load %arg3[%c0_3, %c0_4] : memref<1x128xf32, #tpu.memory_space<vmem>>, vector<1x128xf32>
    %4 = vector.broadcast %3 : vector<1x128xf32> to vector<128x128xf32>
    %5 = arith.addf %2, %4 : vector<128x128xf32>
    %cst_5 = arith.constant 0.000000e+00 : f32
    %6 = vector.broadcast %cst_5 : f32 to vector<128x128xf32>
    %7 = arith.maximumf %5, %6 : vector<128x128xf32>
    %8 = arith.truncf %7 : vector<128x128xf32> to vector<128x128xbf16>
    %c0_6 = arith.constant 0 : index
    %c0_7 = arith.constant 0 : index
    %9 = vector.load %arg4[%c0_6, %c0_7] : memref<128x128xbf16, #tpu.memory_space<vmem>>, vector<128x128xbf16>
    tpu.vector_store %arg4[%c0_6, %c0_7], %8 {strides = array<i32>} : memref<128x128xbf16, #tpu.memory_space<vmem>>, vector<128x128xbf16>,
    return
  }
  func.func @transform_0(%arg0: i32) -> (i32, i32) {
    %c0_i32 = arith.constant 0 : i32
    %c0_i32_0 = arith.constant 0 : i32
    return %arg0, %c0_i32 : i32, i32
  }
  func.func @transform_1(%arg0: i32) -> (i32, i32) {
    %c0_i32 = arith.constant 0 : i32
    %c0_i32_0 = arith.constant 0 : i32
    %c0_i32_1 = arith.constant 0 : i32
    return %c0_i32, %c0_i32_0 : i32, i32
  }
  func.func @transform_2(%arg0: i32) -> (i32, i32) {
    %c0_i32 = arith.constant 0 : i32
    %c0_i32_0 = arith.constant 0 : i32
    %c0_i32_1 = arith.constant 0 : i32
    return %c0_i32, %c0_i32_0 : i32, i32
  }
  func.func @transform_3(%arg0: i32) -> (i32, i32) {
    %c0_i32 = arith.constant 0 : i32
    %c0_i32_0 = arith.constant 0 : i32
    return %arg0, %c0_i32 : i32, i32
  }
}

module attributes {stable_mosaic.version = 11 : i64} {
  func.func @_mm_add_kernel(%arg0: i32, %arg1: memref<128x144xbf16, #tpu.memory_space<vmem>>, %arg2: memref<144x128xbf16, #tpu.memory_space<vmem>>, %arg3: memref<1x128xf32, #tpu.memory_space<vmem>>, %arg4: memref<128x128xbf16, #tpu.memory_space<vmem>>, %arg5: memref<128x128xbf16, #tpu.memory_space<vmem>>) attributes {dimension_semantics = [#tpu.dimension_semantics<parallel>], iteration_bounds = array<i64: 1>, scalar_prefetch = 0 : i64, scratch_operands = 0 : i64, tpu.core_type = #tpu.core_type<tc>, window_params = [{transform_indices = @transform_0, window_bounds = array<i64: 128, 144>}, {pipeline_mode = #tpu.pipeline_mode<synchronous>, transform_indices = @transform_1, window_bounds = array<i64: 144, 128>}, {pipeline_mode = #tpu.pipeline_mode<synchronous>, transform_indices = @transform_2, window_bounds = array<i64: 1, 128>}, {transform_indices = @transform_3, window_bounds = array<i64: 128, 128>}, {transform_indices = @transform_4, window_bounds = array<i64: 128, 128>}]} {
    %c0 = arith.constant 0 : index
    %c0_0 = arith.constant 0 : index
    %0 = vector.load %arg1[%c0, %c0_0] : memref<128x144xbf16, #tpu.memory_space<vmem>>, vector<128x144xbf16>
    %c0_1 = arith.constant 0 : index
    %c0_2 = arith.constant 0 : index
    %1 = vector.load %arg2[%c0_1, %c0_2] : memref<144x128xbf16, #tpu.memory_space<vmem>>, vector<144x128xbf16>
    %cst = arith.constant dense<0.000000e+00> : vector<128x128xf32>
    %2 = tpu.matmul %0, %1, %cst {dimension_numbers = #tpu.dot_dimension_numbers<[1], [0], [0], [1], [0, 0, 1, 1], [], []>} : vector<128x144xbf16>, vector<144x128xbf16>, vector<128x128xf32> -> vector<128x128xf32>
    %c0_3 = arith.constant 0 : index
    %c0_4 = arith.constant 0 : index
    %3 = vector.load %arg3[%c0_3, %c0_4] : memref<1x128xf32, #tpu.memory_space<vmem>>, vector<1x128xf32>
    %4 = vector.broadcast %3 : vector<1x128xf32> to vector<128x128xf32>
    %5 = arith.addf %2, %4 : vector<128x128xf32>
    %c0_5 = arith.constant 0 : index
    %c0_6 = arith.constant 0 : index
    %6 = vector.load %arg4[%c0_5, %c0_6] : memref<128x128xbf16, #tpu.memory_space<vmem>>, vector<128x128xbf16>
    %7 = arith.extf %6 : vector<128x128xbf16> to vector<128x128xf32>
    %8 = arith.addf %5, %7 : vector<128x128xf32>
    %cst_7 = arith.constant 0.000000e+00 : f32
    %9 = vector.broadcast %cst_7 : f32 to vector<128x128xf32>
    %10 = arith.maximumf %8, %9 : vector<128x128xf32>
    %11 = arith.truncf %10 : vector<128x128xf32> to vector<128x128xbf16>
    %c0_8 = arith.constant 0 : index
    %c0_9 = arith.constant 0 : index
    %12 = vector.load %arg5[%c0_8, %c0_9] : memref<128x128xbf16, #tpu.memory_space<vmem>>, vector<128x128xbf16>
    tpu.vector_store %arg5[%c0_8, %c0_9], %11 {strides = array<i32>} : memref<128x128xbf16, #tpu.memory_space<vmem>>, vector<128x128xbf16>,
    return
  }
  func.func @transform_0(%arg0: i32) -> (i32, i32) {
    %c0_i32 = arith.constant 0 : i32
    %c0_i32_0 = arith.constant 0 : i32
    return %arg0, %c0_i32 : i32, i32
  }
  func.func @transform_1(%arg0: i32) -> (i32, i32) {
    %c0_i32 = arith.constant 0 : i32
    %c0_i32_0 = arith.constant 0 : i32
    %c0_i32_1 = arith.constant 0 : i32
    return %c0_i32, %c0_i32_0 : i32, i32
  }
  func.func @transform_2(%arg0: i32) -> (i32, i32) {
    %c0_i32 = arith.constant 0 : i32
    %c0_i32_0 = arith.constant 0 : i32
    %c0_i32_1 = arith.constant 0 : i32
    return %c0_i32, %c0_i32_0 : i32, i32
  }
  func.func @transform_3(%arg0: i32) -> (i32, i32) {
    %c0_i32 = arith.constant 0 : i32
    %c0_i32_0 = arith.constant 0 : i32
    return %arg0, %c0_i32 : i32, i32
  }
  func.func @transform_4(%arg0: i32) -> (i32, i32) {
    %c0_i32 = arith.constant 0 : i32
    %c0_i32_0 = arith.constant 0 : i32
    return %arg0, %c0_i32 : i32, i32
  }
}

module attributes {stable_mosaic.version = 11 : i64} {
  func.func @_mm_kernel(%arg0: i32, %arg1: memref<32x144xbf16, #tpu.memory_space<vmem>>, %arg2: memref<144x128xbf16, #tpu.memory_space<vmem>>, %arg3: memref<1x128xf32, #tpu.memory_space<vmem>>, %arg4: memref<32x128xbf16, #tpu.memory_space<vmem>>) attributes {dimension_semantics = [#tpu.dimension_semantics<parallel>], iteration_bounds = array<i64: 1>, scalar_prefetch = 0 : i64, scratch_operands = 0 : i64, tpu.core_type = #tpu.core_type<tc>, window_params = [{transform_indices = @transform_0, window_bounds = array<i64: 32, 144>}, {pipeline_mode = #tpu.pipeline_mode<synchronous>, transform_indices = @transform_1, window_bounds = array<i64: 144, 128>}, {pipeline_mode = #tpu.pipeline_mode<synchronous>, transform_indices = @transform_2, window_bounds = array<i64: 1, 128>}, {transform_indices = @transform_3, window_bounds = array<i64: 32, 128>}]} {
    %c0 = arith.constant 0 : index
    %c0_0 = arith.constant 0 : index
    %0 = vector.load %arg1[%c0, %c0_0] : memref<32x144xbf16, #tpu.memory_space<vmem>>, vector<32x144xbf16>
    %c0_1 = arith.constant 0 : index
    %c0_2 = arith.constant 0 : index
    %1 = vector.load %arg2[%c0_1, %c0_2] : memref<144x128xbf16, #tpu.memory_space<vmem>>, vector<144x128xbf16>
    %cst = arith.constant dense<0.000000e+00> : vector<32x128xf32>
    %2 = tpu.matmul %0, %1, %cst {dimension_numbers = #tpu.dot_dimension_numbers<[1], [0], [0], [1], [0, 0, 1, 1], [], []>} : vector<32x144xbf16>, vector<144x128xbf16>, vector<32x128xf32> -> vector<32x128xf32>
    %c0_3 = arith.constant 0 : index
    %c0_4 = arith.constant 0 : index
    %3 = vector.load %arg3[%c0_3, %c0_4] : memref<1x128xf32, #tpu.memory_space<vmem>>, vector<1x128xf32>
    %4 = vector.broadcast %3 : vector<1x128xf32> to vector<32x128xf32>
    %5 = arith.addf %2, %4 : vector<32x128xf32>
    %cst_5 = arith.constant 0.000000e+00 : f32
    %6 = vector.broadcast %cst_5 : f32 to vector<32x128xf32>
    %7 = arith.maximumf %5, %6 : vector<32x128xf32>
    %8 = arith.truncf %7 : vector<32x128xf32> to vector<32x128xbf16>
    %c0_6 = arith.constant 0 : index
    %c0_7 = arith.constant 0 : index
    %9 = vector.load %arg4[%c0_6, %c0_7] : memref<32x128xbf16, #tpu.memory_space<vmem>>, vector<32x128xbf16>
    tpu.vector_store %arg4[%c0_6, %c0_7], %8 {strides = array<i32>} : memref<32x128xbf16, #tpu.memory_space<vmem>>, vector<32x128xbf16>,
    return
  }
  func.func @transform_0(%arg0: i32) -> (i32, i32) {
    %c0_i32 = arith.constant 0 : i32
    %c0_i32_0 = arith.constant 0 : i32
    return %arg0, %c0_i32 : i32, i32
  }
  func.func @transform_1(%arg0: i32) -> (i32, i32) {
    %c0_i32 = arith.constant 0 : i32
    %c0_i32_0 = arith.constant 0 : i32
    %c0_i32_1 = arith.constant 0 : i32
    return %c0_i32, %c0_i32_0 : i32, i32
  }
  func.func @transform_2(%arg0: i32) -> (i32, i32) {
    %c0_i32 = arith.constant 0 : i32
    %c0_i32_0 = arith.constant 0 : i32
    %c0_i32_1 = arith.constant 0 : i32
    return %c0_i32, %c0_i32_0 : i32, i32
  }
  func.func @transform_3(%arg0: i32) -> (i32, i32) {
    %c0_i32 = arith.constant 0 : i32
    %c0_i32_0 = arith.constant 0 : i32
    return %arg0, %c0_i32 : i32, i32
  }
}

module attributes {stable_mosaic.version = 11 : i64} {
  func.func @_mm_kernel(%arg0: i32, %arg1: memref<32x304xbf16, #tpu.memory_space<vmem>>, %arg2: memref<304x128xbf16, #tpu.memory_space<vmem>>, %arg3: memref<1x128xf32, #tpu.memory_space<vmem>>, %arg4: memref<32x128xbf16, #tpu.memory_space<vmem>>) attributes {dimension_semantics = [#tpu.dimension_semantics<parallel>], iteration_bounds = array<i64: 1>, scalar_prefetch = 0 : i64, scratch_operands = 0 : i64, tpu.core_type = #tpu.core_type<tc>, window_params = [{transform_indices = @transform_0, window_bounds = array<i64: 32, 304>}, {pipeline_mode = #tpu.pipeline_mode<synchronous>, transform_indices = @transform_1, window_bounds = array<i64: 304, 128>}, {pipeline_mode = #tpu.pipeline_mode<synchronous>, transform_indices = @transform_2, window_bounds = array<i64: 1, 128>}, {transform_indices = @transform_3, window_bounds = array<i64: 32, 128>}]} {
    %c0 = arith.constant 0 : index
    %c0_0 = arith.constant 0 : index
    %0 = vector.load %arg1[%c0, %c0_0] : memref<32x304xbf16, #tpu.memory_space<vmem>>, vector<32x304xbf16>
    %c0_1 = arith.constant 0 : index
    %c0_2 = arith.constant 0 : index
    %1 = vector.load %arg2[%c0_1, %c0_2] : memref<304x128xbf16, #tpu.memory_space<vmem>>, vector<304x128xbf16>
    %cst = arith.constant dense<0.000000e+00> : vector<32x128xf32>
    %2 = tpu.matmul %0, %1, %cst {dimension_numbers = #tpu.dot_dimension_numbers<[1], [0], [0], [1], [0, 0, 1, 1], [], []>} : vector<32x304xbf16>, vector<304x128xbf16>, vector<32x128xf32> -> vector<32x128xf32>
    %c0_3 = arith.constant 0 : index
    %c0_4 = arith.constant 0 : index
    %3 = vector.load %arg3[%c0_3, %c0_4] : memref<1x128xf32, #tpu.memory_space<vmem>>, vector<1x128xf32>
    %4 = vector.broadcast %3 : vector<1x128xf32> to vector<32x128xf32>
    %5 = arith.addf %2, %4 : vector<32x128xf32>
    %cst_5 = arith.constant 0.000000e+00 : f32
    %6 = vector.broadcast %cst_5 : f32 to vector<32x128xf32>
    %7 = arith.maximumf %5, %6 : vector<32x128xf32>
    %8 = arith.truncf %7 : vector<32x128xf32> to vector<32x128xbf16>
    %c0_6 = arith.constant 0 : index
    %c0_7 = arith.constant 0 : index
    %9 = vector.load %arg4[%c0_6, %c0_7] : memref<32x128xbf16, #tpu.memory_space<vmem>>, vector<32x128xbf16>
    tpu.vector_store %arg4[%c0_6, %c0_7], %8 {strides = array<i32>} : memref<32x128xbf16, #tpu.memory_space<vmem>>, vector<32x128xbf16>,
    return
  }
  func.func @transform_0(%arg0: i32) -> (i32, i32) {
    %c0_i32 = arith.constant 0 : i32
    %c0_i32_0 = arith.constant 0 : i32
    return %arg0, %c0_i32 : i32, i32
  }
  func.func @transform_1(%arg0: i32) -> (i32, i32) {
    %c0_i32 = arith.constant 0 : i32
    %c0_i32_0 = arith.constant 0 : i32
    %c0_i32_1 = arith.constant 0 : i32
    return %c0_i32, %c0_i32_0 : i32, i32
  }
  func.func @transform_2(%arg0: i32) -> (i32, i32) {
    %c0_i32 = arith.constant 0 : i32
    %c0_i32_0 = arith.constant 0 : i32
    %c0_i32_1 = arith.constant 0 : i32
    return %c0_i32, %c0_i32_0 : i32, i32
  }
  func.func @transform_3(%arg0: i32) -> (i32, i32) {
    %c0_i32 = arith.constant 0 : i32
    %c0_i32_0 = arith.constant 0 : i32
    return %arg0, %c0_i32 : i32, i32
  }
}

module attributes {stable_mosaic.version = 11 : i64} {
  func.func @_mm_kernel(%arg0: i32, %arg1: memref<16x288xbf16, #tpu.memory_space<vmem>>, %arg2: memref<288x128xbf16, #tpu.memory_space<vmem>>, %arg3: memref<1x128xf32, #tpu.memory_space<vmem>>, %arg4: memref<16x128xbf16, #tpu.memory_space<vmem>>) attributes {dimension_semantics = [#tpu.dimension_semantics<parallel>], iteration_bounds = array<i64: 1>, scalar_prefetch = 0 : i64, scratch_operands = 0 : i64, tpu.core_type = #tpu.core_type<tc>, window_params = [{transform_indices = @transform_0, window_bounds = array<i64: 16, 288>}, {pipeline_mode = #tpu.pipeline_mode<synchronous>, transform_indices = @transform_1, window_bounds = array<i64: 288, 128>}, {pipeline_mode = #tpu.pipeline_mode<synchronous>, transform_indices = @transform_2, window_bounds = array<i64: 1, 128>}, {transform_indices = @transform_3, window_bounds = array<i64: 16, 128>}]} {
    %c0 = arith.constant 0 : index
    %c0_0 = arith.constant 0 : index
    %0 = vector.load %arg1[%c0, %c0_0] : memref<16x288xbf16, #tpu.memory_space<vmem>>, vector<16x288xbf16>
    %c0_1 = arith.constant 0 : index
    %c0_2 = arith.constant 0 : index
    %1 = vector.load %arg2[%c0_1, %c0_2] : memref<288x128xbf16, #tpu.memory_space<vmem>>, vector<288x128xbf16>
    %cst = arith.constant dense<0.000000e+00> : vector<16x128xf32>
    %2 = tpu.matmul %0, %1, %cst {dimension_numbers = #tpu.dot_dimension_numbers<[1], [0], [0], [1], [0, 0, 1, 1], [], []>} : vector<16x288xbf16>, vector<288x128xbf16>, vector<16x128xf32> -> vector<16x128xf32>
    %c0_3 = arith.constant 0 : index
    %c0_4 = arith.constant 0 : index
    %3 = vector.load %arg3[%c0_3, %c0_4] : memref<1x128xf32, #tpu.memory_space<vmem>>, vector<1x128xf32>
    %4 = vector.broadcast %3 : vector<1x128xf32> to vector<16x128xf32>
    %5 = arith.addf %2, %4 : vector<16x128xf32>
    %cst_5 = arith.constant 0.000000e+00 : f32
    %6 = vector.broadcast %cst_5 : f32 to vector<16x128xf32>
    %7 = arith.maximumf %5, %6 : vector<16x128xf32>
    %8 = arith.truncf %7 : vector<16x128xf32> to vector<16x128xbf16>
    %c0_6 = arith.constant 0 : index
    %c0_7 = arith.constant 0 : index
    %9 = vector.load %arg4[%c0_6, %c0_7] : memref<16x128xbf16, #tpu.memory_space<vmem>>, vector<16x128xbf16>
    tpu.vector_store %arg4[%c0_6, %c0_7], %8 {strides = array<i32>} : memref<16x128xbf16, #tpu.memory_space<vmem>>, vector<16x128xbf16>,
    return
  }
  func.func @transform_0(%arg0: i32) -> (i32, i32) {
    %c0_i32 = arith.constant 0 : i32
    %c0_i32_0 = arith.constant 0 : i32
    return %arg0, %c0_i32 : i32, i32
  }
  func.func @transform_1(%arg0: i32) -> (i32, i32) {
    %c0_i32 = arith.constant 0 : i32
    %c0_i32_0 = arith.constant 0 : i32
    %c0_i32_1 = arith.constant 0 : i32
    return %c0_i32, %c0_i32_0 : i32, i32
  }
  func.func @transform_2(%arg0: i32) -> (i32, i32) {
    %c0_i32 = arith.constant 0 : i32
    %c0_i32_0 = arith.constant 0 : i32
    %c0_i32_1 = arith.constant 0 : i32
    return %c0_i32, %c0_i32_0 : i32, i32
  }
  func.func @transform_3(%arg0: i32) -> (i32, i32) {
    %c0_i32 = arith.constant 0 : i32
    %c0_i32_0 = arith.constant 0 : i32
    return %arg0, %c0_i32 : i32, i32
  }
}

module attributes {stable_mosaic.version = 11 : i64} {
  func.func @_mm_kernel(%arg0: i32, %arg1: memref<16x608xbf16, #tpu.memory_space<vmem>>, %arg2: memref<608x128xbf16, #tpu.memory_space<vmem>>, %arg3: memref<1x128xf32, #tpu.memory_space<vmem>>, %arg4: memref<16x128xbf16, #tpu.memory_space<vmem>>) attributes {dimension_semantics = [#tpu.dimension_semantics<parallel>], iteration_bounds = array<i64: 1>, scalar_prefetch = 0 : i64, scratch_operands = 0 : i64, tpu.core_type = #tpu.core_type<tc>, window_params = [{transform_indices = @transform_0, window_bounds = array<i64: 16, 608>}, {pipeline_mode = #tpu.pipeline_mode<synchronous>, transform_indices = @transform_1, window_bounds = array<i64: 608, 128>}, {pipeline_mode = #tpu.pipeline_mode<synchronous>, transform_indices = @transform_2, window_bounds = array<i64: 1, 128>}, {transform_indices = @transform_3, window_bounds = array<i64: 16, 128>}]} {
    %c0 = arith.constant 0 : index
    %c0_0 = arith.constant 0 : index
    %0 = vector.load %arg1[%c0, %c0_0] : memref<16x608xbf16, #tpu.memory_space<vmem>>, vector<16x608xbf16>
    %c0_1 = arith.constant 0 : index
    %c0_2 = arith.constant 0 : index
    %1 = vector.load %arg2[%c0_1, %c0_2] : memref<608x128xbf16, #tpu.memory_space<vmem>>, vector<608x128xbf16>
    %cst = arith.constant dense<0.000000e+00> : vector<16x128xf32>
    %2 = tpu.matmul %0, %1, %cst {dimension_numbers = #tpu.dot_dimension_numbers<[1], [0], [0], [1], [0, 0, 1, 1], [], []>} : vector<16x608xbf16>, vector<608x128xbf16>, vector<16x128xf32> -> vector<16x128xf32>
    %c0_3 = arith.constant 0 : index
    %c0_4 = arith.constant 0 : index
    %3 = vector.load %arg3[%c0_3, %c0_4] : memref<1x128xf32, #tpu.memory_space<vmem>>, vector<1x128xf32>
    %4 = vector.broadcast %3 : vector<1x128xf32> to vector<16x128xf32>
    %5 = arith.addf %2, %4 : vector<16x128xf32>
    %cst_5 = arith.constant 0.000000e+00 : f32
    %6 = vector.broadcast %cst_5 : f32 to vector<16x128xf32>
    %7 = arith.maximumf %5, %6 : vector<16x128xf32>
    %8 = arith.truncf %7 : vector<16x128xf32> to vector<16x128xbf16>
    %c0_6 = arith.constant 0 : index
    %c0_7 = arith.constant 0 : index
    %9 = vector.load %arg4[%c0_6, %c0_7] : memref<16x128xbf16, #tpu.memory_space<vmem>>, vector<16x128xbf16>
    tpu.vector_store %arg4[%c0_6, %c0_7], %8 {strides = array<i32>} : memref<16x128xbf16, #tpu.memory_space<vmem>>, vector<16x128xbf16>,
    return
  }
  func.func @transform_0(%arg0: i32) -> (i32, i32) {
    %c0_i32 = arith.constant 0 : i32
    %c0_i32_0 = arith.constant 0 : i32
    return %arg0, %c0_i32 : i32, i32
  }
  func.func @transform_1(%arg0: i32) -> (i32, i32) {
    %c0_i32 = arith.constant 0 : i32
    %c0_i32_0 = arith.constant 0 : i32
    %c0_i32_1 = arith.constant 0 : i32
    return %c0_i32, %c0_i32_0 : i32, i32
  }
  func.func @transform_2(%arg0: i32) -> (i32, i32) {
    %c0_i32 = arith.constant 0 : i32
    %c0_i32_0 = arith.constant 0 : i32
    %c0_i32_1 = arith.constant 0 : i32
    return %c0_i32, %c0_i32_0 : i32, i32
  }
  func.func @transform_3(%arg0: i32) -> (i32, i32) {
    %c0_i32 = arith.constant 0 : i32
    %c0_i32_0 = arith.constant 0 : i32
    return %arg0, %c0_i32 : i32, i32
  }
}

module attributes {stable_mosaic.version = 11 : i64} {
  func.func @_mm_kernel(%arg0: i32, %arg1: memref<16x576xbf16, #tpu.memory_space<vmem>>, %arg2: memref<576x128xbf16, #tpu.memory_space<vmem>>, %arg3: memref<1x128xf32, #tpu.memory_space<vmem>>, %arg4: memref<16x128xbf16, #tpu.memory_space<vmem>>) attributes {dimension_semantics = [#tpu.dimension_semantics<parallel>], iteration_bounds = array<i64: 1>, scalar_prefetch = 0 : i64, scratch_operands = 0 : i64, tpu.core_type = #tpu.core_type<tc>, window_params = [{transform_indices = @transform_0, window_bounds = array<i64: 16, 576>}, {pipeline_mode = #tpu.pipeline_mode<synchronous>, transform_indices = @transform_1, window_bounds = array<i64: 576, 128>}, {pipeline_mode = #tpu.pipeline_mode<synchronous>, transform_indices = @transform_2, window_bounds = array<i64: 1, 128>}, {transform_indices = @transform_3, window_bounds = array<i64: 16, 128>}]} {
    %c0 = arith.constant 0 : index
    %c0_0 = arith.constant 0 : index
    %0 = vector.load %arg1[%c0, %c0_0] : memref<16x576xbf16, #tpu.memory_space<vmem>>, vector<16x576xbf16>
    %c0_1 = arith.constant 0 : index
    %c0_2 = arith.constant 0 : index
    %1 = vector.load %arg2[%c0_1, %c0_2] : memref<576x128xbf16, #tpu.memory_space<vmem>>, vector<576x128xbf16>
    %cst = arith.constant dense<0.000000e+00> : vector<16x128xf32>
    %2 = tpu.matmul %0, %1, %cst {dimension_numbers = #tpu.dot_dimension_numbers<[1], [0], [0], [1], [0, 0, 1, 1], [], []>} : vector<16x576xbf16>, vector<576x128xbf16>, vector<16x128xf32> -> vector<16x128xf32>
    %c0_3 = arith.constant 0 : index
    %c0_4 = arith.constant 0 : index
    %3 = vector.load %arg3[%c0_3, %c0_4] : memref<1x128xf32, #tpu.memory_space<vmem>>, vector<1x128xf32>
    %4 = vector.broadcast %3 : vector<1x128xf32> to vector<16x128xf32>
    %5 = arith.addf %2, %4 : vector<16x128xf32>
    %cst_5 = arith.constant 0.000000e+00 : f32
    %6 = vector.broadcast %cst_5 : f32 to vector<16x128xf32>
    %7 = arith.maximumf %5, %6 : vector<16x128xf32>
    %8 = arith.truncf %7 : vector<16x128xf32> to vector<16x128xbf16>
    %c0_6 = arith.constant 0 : index
    %c0_7 = arith.constant 0 : index
    %9 = vector.load %arg4[%c0_6, %c0_7] : memref<16x128xbf16, #tpu.memory_space<vmem>>, vector<16x128xbf16>
    tpu.vector_store %arg4[%c0_6, %c0_7], %8 {strides = array<i32>} : memref<16x128xbf16, #tpu.memory_space<vmem>>, vector<16x128xbf16>,
    return
  }
  func.func @transform_0(%arg0: i32) -> (i32, i32) {
    %c0_i32 = arith.constant 0 : i32
    %c0_i32_0 = arith.constant 0 : i32
    return %arg0, %c0_i32 : i32, i32
  }
  func.func @transform_1(%arg0: i32) -> (i32, i32) {
    %c0_i32 = arith.constant 0 : i32
    %c0_i32_0 = arith.constant 0 : i32
    %c0_i32_1 = arith.constant 0 : i32
    return %c0_i32, %c0_i32_0 : i32, i32
  }
  func.func @transform_2(%arg0: i32) -> (i32, i32) {
    %c0_i32 = arith.constant 0 : i32
    %c0_i32_0 = arith.constant 0 : i32
    %c0_i32_1 = arith.constant 0 : i32
    return %c0_i32, %c0_i32_0 : i32, i32
  }
  func.func @transform_3(%arg0: i32) -> (i32, i32) {
    %c0_i32 = arith.constant 0 : i32
    %c0_i32_0 = arith.constant 0 : i32
    return %arg0, %c0_i32 : i32, i32
  }
}

module attributes {stable_mosaic.version = 11 : i64} {
  func.func @_mm_fc_kernel(%arg0: i32, %arg1: memref<16x1216xbf16, #tpu.memory_space<vmem>>, %arg2: memref<1216x128xbf16, #tpu.memory_space<vmem>>, %arg3: memref<1x128xf32, #tpu.memory_space<vmem>>, %arg4: memref<128x128xbf16, #tpu.memory_space<vmem>>, %arg5: memref<1x128xf32, #tpu.memory_space<vmem>>, %arg6: memref<16x128xf32, #tpu.memory_space<vmem>>) attributes {dimension_semantics = [#tpu.dimension_semantics<parallel>], iteration_bounds = array<i64: 1>, scalar_prefetch = 0 : i64, scratch_operands = 0 : i64, tpu.core_type = #tpu.core_type<tc>, window_params = [{transform_indices = @transform_0, window_bounds = array<i64: 16, 1216>}, {pipeline_mode = #tpu.pipeline_mode<synchronous>, transform_indices = @transform_1, window_bounds = array<i64: 1216, 128>}, {pipeline_mode = #tpu.pipeline_mode<synchronous>, transform_indices = @transform_2, window_bounds = array<i64: 1, 128>}, {pipeline_mode = #tpu.pipeline_mode<synchronous>, transform_indices = @transform_3, window_bounds = array<i64: 128, 128>}, {pipeline_mode = #tpu.pipeline_mode<synchronous>, transform_indices = @transform_4, window_bounds = array<i64: 1, 128>}, {transform_indices = @transform_5, window_bounds = array<i64: 16, 128>}]} {
    %c0 = arith.constant 0 : index
    %c0_0 = arith.constant 0 : index
    %0 = vector.load %arg1[%c0, %c0_0] : memref<16x1216xbf16, #tpu.memory_space<vmem>>, vector<16x1216xbf16>
    %c0_1 = arith.constant 0 : index
    %c0_2 = arith.constant 0 : index
    %1 = vector.load %arg2[%c0_1, %c0_2] : memref<1216x128xbf16, #tpu.memory_space<vmem>>, vector<1216x128xbf16>
    %cst = arith.constant dense<0.000000e+00> : vector<16x128xf32>
    %2 = tpu.matmul %0, %1, %cst {dimension_numbers = #tpu.dot_dimension_numbers<[1], [0], [0], [1], [0, 0, 1, 1], [], []>} : vector<16x1216xbf16>, vector<1216x128xbf16>, vector<16x128xf32> -> vector<16x128xf32>
    %c0_3 = arith.constant 0 : index
    %c0_4 = arith.constant 0 : index
    %3 = vector.load %arg3[%c0_3, %c0_4] : memref<1x128xf32, #tpu.memory_space<vmem>>, vector<1x128xf32>
    %4 = vector.broadcast %3 : vector<1x128xf32> to vector<16x128xf32>
    %5 = arith.addf %2, %4 : vector<16x128xf32>
    %cst_5 = arith.constant 0.000000e+00 : f32
    %6 = vector.broadcast %cst_5 : f32 to vector<16x128xf32>
    %7 = arith.maximumf %5, %6 : vector<16x128xf32>
    %8 = arith.truncf %7 : vector<16x128xf32> to vector<16x128xbf16>
    %c0_6 = arith.constant 0 : index
    %c0_7 = arith.constant 0 : index
    %9 = vector.load %arg4[%c0_6, %c0_7] : memref<128x128xbf16, #tpu.memory_space<vmem>>, vector<128x128xbf16>
    %cst_8 = arith.constant dense<0.000000e+00> : vector<16x128xf32>
    %10 = tpu.matmul %8, %9, %cst_8 {dimension_numbers = #tpu.dot_dimension_numbers<[1], [0], [0], [1], [0, 0, 1, 1], [], []>} : vector<16x128xbf16>, vector<128x128xbf16>, vector<16x128xf32> -> vector<16x128xf32>
    %c0_9 = arith.constant 0 : index
    %c0_10 = arith.constant 0 : index
    %11 = vector.load %arg5[%c0_9, %c0_10] : memref<1x128xf32, #tpu.memory_space<vmem>>, vector<1x128xf32>
    %12 = vector.broadcast %11 : vector<1x128xf32> to vector<16x128xf32>
    %13 = arith.addf %10, %12 : vector<16x128xf32>
    %c0_11 = arith.constant 0 : index
    %c0_12 = arith.constant 0 : index
    %14 = vector.load %arg6[%c0_11, %c0_12] : memref<16x128xf32, #tpu.memory_space<vmem>>, vector<16x128xf32>
    tpu.vector_store %arg6[%c0_11, %c0_12], %13 {strides = array<i32>} : memref<16x128xf32, #tpu.memory_space<vmem>>, vector<16x128xf32>,
    return
  }
  func.func @transform_0(%arg0: i32) -> (i32, i32) {
    %c0_i32 = arith.constant 0 : i32
    %c0_i32_0 = arith.constant 0 : i32
    return %arg0, %c0_i32 : i32, i32
  }
  func.func @transform_1(%arg0: i32) -> (i32, i32) {
    %c0_i32 = arith.constant 0 : i32
    %c0_i32_0 = arith.constant 0 : i32
    %c0_i32_1 = arith.constant 0 : i32
    return %c0_i32, %c0_i32_0 : i32, i32
  }
  func.func @transform_2(%arg0: i32) -> (i32, i32) {
    %c0_i32 = arith.constant 0 : i32
    %c0_i32_0 = arith.constant 0 : i32
    %c0_i32_1 = arith.constant 0 : i32
    return %c0_i32, %c0_i32_0 : i32, i32
  }
  func.func @transform_3(%arg0: i32) -> (i32, i32) {
    %c0_i32 = arith.constant 0 : i32
    %c0_i32_0 = arith.constant 0 : i32
    %c0_i32_1 = arith.constant 0 : i32
    return %c0_i32, %c0_i32_0 : i32, i32
  }
  func.func @transform_4(%arg0: i32) -> (i32, i32) {
    %c0_i32 = arith.constant 0 : i32
    %c0_i32_0 = arith.constant 0 : i32
    %c0_i32_1 = arith.constant 0 : i32
    return %c0_i32, %c0_i32_0 : i32, i32
  }
  func.func @transform_5(%arg0: i32) -> (i32, i32) {
    %c0_i32 = arith.constant 0 : i32
    %c0_i32_0 = arith.constant 0 : i32
    return %arg0, %c0_i32 : i32, i32
  }
}

</mosaic_0001>

<llo_original>
// kernel: resnet_forward.10
$region0: #{resnet_forward.10}
  #allocation0 [shape = 'u32[]', space=smem, size = 0x4, offset = 0x4, fixed_abs, tag = 'smem constant byte address 0x4 - core index']
  #allocation1 [shape = 'u32[144,128]{1,0:T(1,128)}', space=vmem, size = 0x12000, scoped, tag = 'internal scratch']
  %s0 = inlined_call_operand.vmem [shape: bf16[512,160], index: 0, kind: input, shape index: {}]
  %s1 = inlined_call_operand.vmem [shape: bf16[160,128], index: 1, kind: input, shape index: {}]
  %s2 = inlined_call_operand.vmem [shape: f32[1,128], index: 2, kind: input, shape index: {}]
  %s3 = inlined_call_operand.vmem [shape: bf16[512,128], index: 3, kind: output, shape index: {}]
  %s4 = sld [smem:[#allocation0]]
  $region22: #{resnet_forward.10} parent=0
    _
  %s6 = ssub.s32 1, %s4
  %s7 = scalar_select 0, %s6, %s4
  // Predicated region
  $region2: #{resnet_forward.10} parent=0 // pred_check
    _
  $region3: #{resnet_forward.10} parent=0 // pred_check_branch
    %9 = sbr.rel (0) target = $region5
  $region4: #{resnet_forward.10} parent=0 // pred_region
    _
  $region5: #{resnet_forward.10} parent=0 // pred_fallthru
    _
  // Predicated region
  $region6: #{resnet_forward.10} parent=0 // pred_check
    _
  $region7: #{resnet_forward.10} parent=0 // pred_check_branch
    %11 = sbr.rel (0) target = $region9
  $region8: #{resnet_forward.10} parent=0 // pred_region
    _
  $region9: #{resnet_forward.10} parent=0 // pred_fallthru
    _
  // Predicated region
  $region10: #{resnet_forward.10} parent=0 // pred_check
    _
  $region11: #{resnet_forward.10} parent=0 // pred_check_branch
    %13 = sbr.rel (0) target = $region13
  $region12: #{resnet_forward.10} parent=0 // pred_region
    _
  $region13: #{resnet_forward.10} parent=0 // pred_fallthru
    _
  %v15 = vld [vmem:[%s0] sm:$0xff]
  %v16 = vld [vmem:[%s0 + $0x8] sm:$0xff]
  %v17 = vld [vmem:[%s0 + $0x10] sm:$0xff]
  %v18 = vld [vmem:[%s0 + $0x18] sm:$0xff]
  %v19 = vld [vmem:[%s0 + $0x20] sm:$0xff]
  %v20 = vld [vmem:[%s0 + $0x28] sm:$0xff]
  %v21 = vld [vmem:[%s0 + $0x30] sm:$0xff]
  %v22 = vld [vmem:[%s0 + $0x38] sm:$0xff]
  %v23 = vld [vmem:[%s0 + $0x40] sm:$0xff]
  %v24 = vld [vmem:[%s0 + $0x48] sm:$0xff]
  %v25 = vld [vmem:[%s0 + $0x50] sm:$0xff]
  %v26 = vld [vmem:[%s0 + $0x58] sm:$0xff]
  %v27 = vld [vmem:[%s0 + $0x60] sm:$0xff]
  %v28 = vld [vmem:[%s0 + $0x68] sm:$0xff]
  %v29 = vld [vmem:[%s0 + $0x70] sm:$0xff]
  %v30 = vld [vmem:[%s0 + $0x78] sm:$0xff]
  %v31 = vld [vmem:[%s0 + $0x80] sm:$0xff]
  %v32 = vld [vmem:[%s0 + $0x88] sm:$0xff]
  %v33 = vld [vmem:[%s0 + $0x90] sm:$0xff]
  %v34 = vld [vmem:[%s0 + $0x98] sm:$0xff]
  %v35 = vld [vmem:[%s0 + $0xa0] sm:$0xff]
  %v36 = vld [vmem:[%s0 + $0xa8] sm:$0xff]
  %v37 = vld [vmem:[%s0 + $0xb0] sm:$0xff]
  %v38 = vld [vmem:[%s0 + $0xb8] sm:$0xff]
  %v39 = vld [vmem:[%s0 + $0xc0] sm:$0xff]
  %v40 = vld [vmem:[%s0 + $0xc8] sm:$0xff]
  %v41 = vld [vmem:[%s0 + $0xd0] sm:$0xff]
  %v42 = vld [vmem:[%s0 + $0xd8] sm:$0xff]
  %v43 = vld [vmem:[%s0 + $0xe0] sm:$0xff]
  %v44 = vld [vmem:[%s0 + $0xe8] sm:$0xff]
  %v45 = vld [vmem:[%s0 + $0xf0] sm:$0xff]
  %v46 = vld [vmem:[%s0 + $0xf8] sm:$0xff]
  %v47 = vld [vmem:[%s0 + $0x100] sm:$0xff]
  %v48 = vld [vmem:[%s0 + $0x108] sm:$0xff]
  %v49 = vld [vmem:[%s0 + $0x110] sm:$0xff]
  %v50 = vld [vmem:[%s0 + $0x118] sm:$0xff]
  %v51 = vld [vmem:[%s0 + $0x120] sm:$0xff]
  %v52 = vld [vmem:[%s0 + $0x128] sm:$0xff]
  %v53 = vld [vmem:[%s0 + $0x130] sm:$0xff]
  %v54 = vld [vmem:[%s0 + $0x138] sm:$0xff]
  %v55 = vld [vmem:[%s0 + $0x140] sm:$0xff]
  %v56 = vld [vmem:[%s0 + $0x148] sm:$0xff]
  %v57 = vld [vmem:[%s0 + $0x150] sm:$0xff]
  %v58 = vld [vmem:[%s0 + $0x158] sm:$0xff]
  %v59 = vld [vmem:[%s0 + $0x160] sm:$0xff]
  %v60 = vld [vmem:[%s0 + $0x168] sm:$0xff]
  %v61 = vld [vmem:[%s0 + $0x170] sm:$0xff]
  %v62 = vld [vmem:[%s0 + $0x178] sm:$0xff]
  %v63 = vld [vmem:[%s0 + $0x180] sm:$0xff]
  %v64 = vld [vmem:[%s0 + $0x188] sm:$0xff]
  %v65 = vld [vmem:[%s0 + $0x190] sm:$0xff]
  %v66 = vld [vmem:[%s0 + $0x198] sm:$0xff]
  %v67 = vld [vmem:[%s0 + $0x1a0] sm:$0xff]
  %v68 = vld [vmem:[%s0 + $0x1a8] sm:$0xff]
  %v69 = vld [vmem:[%s0 + $0x1b0] sm:$0xff]
  %v70 = vld [vmem:[%s0 + $0x1b8] sm:$0xff]
  %v71 = vld [vmem:[%s0 + $0x1c0] sm:$0xff]
  %v72 = vld [vmem:[%s0 + $0x1c8] sm:$0xff]
  %v73 = vld [vmem:[%s0 + $0x1d0] sm:$0xff]
  %v74 = vld [vmem:[%s0 + $0x1d8] sm:$0xff]
  %v75 = vld [vmem:[%s0 + $0x1e0] sm:$0xff]
  %v76 = vld [vmem:[%s0 + $0x1e8] sm:$0xff]
  %v77 = vld [vmem:[%s0 + $0x1f0] sm:$0xff]
  %v78 = vld [vmem:[%s0 + $0x1f8] sm:$0xff]
  %v79 = vld [vmem:[%s1] sm:$0xf]
  %v80 = vld [vmem:[%s1 + $0x4] sm:$0xf]
  %v81 = vld [vmem:[%s1 + $0x8] sm:$0xf]
  %v82 = vld [vmem:[%s1 + $0xc] sm:$0xf]
  %v83 = vld [vmem:[%s1 + $0x10] sm:$0xf]
  %v84 = vld [vmem:[%s1 + $0x14] sm:$0xf]
  %v85 = vld [vmem:[%s1 + $0x18] sm:$0xf]
  %v86 = vld [vmem:[%s1 + $0x1c] sm:$0xf]
  %v87 = vld [vmem:[%s1 + $0x20] sm:$0xf]
  %v88 = vld [vmem:[%s1 + $0x24] sm:$0xf]
  %v89 = vld [vmem:[%s1 + $0x28] sm:$0xf]
  %v90 = vld [vmem:[%s1 + $0x2c] sm:$0xf]
  %v91 = vld [vmem:[%s1 + $0x30] sm:$0xf]
  %v92 = vld [vmem:[%s1 + $0x34] sm:$0xf]
  %v93 = vld [vmem:[%s1 + $0x38] sm:$0xf]
  %v94 = vld [vmem:[%s1 + $0x3c] sm:$0xf]
  %v95 = vld [vmem:[%s1 + $0x40] sm:$0xf]
  %v96 = vld [vmem:[%s1 + $0x44] sm:$0xf]
  %v97 = vld [vmem:[%s1 + $0x48] sm:$0xf]
  %v98 = vld [vmem:[%s1 + $0x4c] sm:$0xf]
  %v99 = vld [vmem:[%s2] sm:$0x1]
  %v101 = vlaneseq
  %v102 = vshrl.u32 %v101, 7
  %v103 = vsub.s32 0, %v102
  %v104 = vrot.slane %v99, %v103
  %v170 = vunpack.c.l.b16 %v15
  %v171 = vunpack.c.h.b16 %v15
  %v172 = vunpack.c.l.b16 %v16
  %v173 = vunpack.c.h.b16 %v16
  %v174 = vunpack.c.l.b16 %v17
  %v175 = vunpack.c.h.b16 %v17
  %v176 = vunpack.c.l.b16 %v18
  %v177 = vunpack.c.h.b16 %v18
  %v178 = vunpack.c.l.b16 %v19
  %v179 = vunpack.c.h.b16 %v19
  %v180 = vunpack.c.l.b16 %v20
  %v181 = vunpack.c.h.b16 %v20
  %v182 = vunpack.c.l.b16 %v21
  %v183 = vunpack.c.h.b16 %v21
  %v184 = vunpack.c.l.b16 %v22
  %v185 = vunpack.c.h.b16 %v22
  %v186 = vunpack.c.l.b16 %v23
  %v187 = vunpack.c.h.b16 %v23
  %v188 = vunpack.c.l.b16 %v24
  %v189 = vunpack.c.h.b16 %v24
  %v190 = vunpack.c.l.b16 %v25
  %v191 = vunpack.c.h.b16 %v25
  %v192 = vunpack.c.l.b16 %v26
  %v193 = vunpack.c.h.b16 %v26
  %v194 = vunpack.c.l.b16 %v27
  %v195 = vunpack.c.h.b16 %v27
  %v196 = vunpack.c.l.b16 %v28
  %v197 = vunpack.c.h.b16 %v28
  %v198 = vunpack.c.l.b16 %v29
  %v199 = vunpack.c.h.b16 %v29
  %v200 = vunpack.c.l.b16 %v30
  %v201 = vunpack.c.h.b16 %v30
  %v202 = vunpack.c.l.b16 %v31
  %v203 = vunpack.c.h.b16 %v31
  %v204 = vunpack.c.l.b16 %v32
  %v205 = vunpack.c.h.b16 %v32
  %v206 = vunpack.c.l.b16 %v33
  %v207 = vunpack.c.h.b16 %v33
  %v208 = vunpack.c.l.b16 %v34
  %v209 = vunpack.c.h.b16 %v34
  %v210 = vunpack.c.l.b16 %v35
  %v211 = vunpack.c.h.b16 %v35
  %v212 = vunpack.c.l.b16 %v36
  %v213 = vunpack.c.h.b16 %v36
  %v214 = vunpack.c.l.b16 %v37
  %v215 = vunpack.c.h.b16 %v37
  %v216 = vunpack.c.l.b16 %v38
  %v217 = vunpack.c.h.b16 %v38
  %v218 = vunpack.c.l.b16 %v39
  %v219 = vunpack.c.h.b16 %v39
  %v220 = vunpack.c.l.b16 %v40
  %v221 = vunpack.c.h.b16 %v40
  %v222 = vunpack.c.l.b16 %v41
  %v223 = vunpack.c.h.b16 %v41
  %v224 = vunpack.c.l.b16 %v42
  %v225 = vunpack.c.h.b16 %v42
  %v226 = vunpack.c.l.b16 %v43
  %v227 = vunpack.c.h.b16 %v43
  %v228 = vunpack.c.l.b16 %v44
  %v229 = vunpack.c.h.b16 %v44
  %v230 = vunpack.c.l.b16 %v45
  %v231 = vunpack.c.h.b16 %v45
  %v232 = vunpack.c.l.b16 %v46
  %v233 = vunpack.c.h.b16 %v46
  %v234 = vunpack.c.l.b16 %v47
  %v235 = vunpack.c.h.b16 %v47
  %v236 = vunpack.c.l.b16 %v48
  %v237 = vunpack.c.h.b16 %v48
  %v238 = vunpack.c.l.b16 %v49
  %v239 = vunpack.c.h.b16 %v49
  %v240 = vunpack.c.l.b16 %v50
  %v241 = vunpack.c.h.b16 %v50
  %v242 = vunpack.c.l.b16 %v51
  %v243 = vunpack.c.h.b16 %v51
  %v244 = vunpack.c.l.b16 %v52
  %v245 = vunpack.c.h.b16 %v52
  %v246 = vunpack.c.l.b16 %v53
  %v247 = vunpack.c.h.b16 %v53
  %v248 = vunpack.c.l.b16 %v54
  %v249 = vunpack.c.h.b16 %v54
  %v250 = vunpack.c.l.b16 %v55
  %v251 = vunpack.c.h.b16 %v55
  %v252 = vunpack.c.l.b16 %v56
  %v253 = vunpack.c.h.b16 %v56
  %v254 = vunpack.c.l.b16 %v57
  %v255 = vunpack.c.h.b16 %v57
  %v256 = vunpack.c.l.b16 %v58
  %v257 = vunpack.c.h.b16 %v58
  %v258 = vunpack.c.l.b16 %v59
  %v259 = vunpack.c.h.b16 %v59
  %v260 = vunpack.c.l.b16 %v60
  %v261 = vunpack.c.h.b16 %v60
  %v262 = vunpack.c.l.b16 %v61
  %v263 = vunpack.c.h.b16 %v61
  %v264 = vunpack.c.l.b16 %v62
  %v265 = vunpack.c.h.b16 %v62
  %v266 = vunpack.c.l.b16 %v63
  %v267 = vunpack.c.h.b16 %v63
  %v268 = vunpack.c.l.b16 %v64
  %v269 = vunpack.c.h.b16 %v64
  %v270 = vunpack.c.l.b16 %v65
  %v271 = vunpack.c.h.b16 %v65
  %v272 = vunpack.c.l.b16 %v66
  %v273 = vunpack.c.h.b16 %v66
  %v274 = vunpack.c.l.b16 %v67
  %v275 = vunpack.c.h.b16 %v67
  %v276 = vunpack.c.l.b16 %v68
  %v277 = vunpack.c.h.b16 %v68
  %v278 = vunpack.c.l.b16 %v69
  %v279 = vunpack.c.h.b16 %v69
  %v280 = vunpack.c.l.b16 %v70
  %v281 = vunpack.c.h.b16 %v70
  %v282 = vunpack.c.l.b16 %v71
  %v283 = vunpack.c.h.b16 %v71
  %v284 = vunpack.c.l.b16 %v72
  %v285 = vunpack.c.h.b16 %v72
  %v286 = vunpack.c.l.b16 %v73
  %v287 = vunpack.c.h.b16 %v73
  %v288 = vunpack.c.l.b16 %v74
  %v289 = vunpack.c.h.b16 %v74
  %v290 = vunpack.c.l.b16 %v75
  %v291 = vunpack.c.h.b16 %v75
  %v292 = vunpack.c.l.b16 %v76
  %v293 = vunpack.c.h.b16 %v76
  %v294 = vunpack.c.l.b16 %v77
  %v295 = vunpack.c.h.b16 %v77
  %v296 = vunpack.c.l.b16 %v78
  %v297 = vunpack.c.h.b16 %v78
  %v298 = vpack.c.b16 %v172, %v170
  %v299 = vpack.c.b16 %v173, %v171
  %v300 = vpack.c.b16 %v176, %v174
  %v301 = vpack.c.b16 %v177, %v175
  %v302 = vpack.c.b16 %v180, %v178
  %v303 = vpack.c.b16 %v181, %v179
  %v304 = vpack.c.b16 %v184, %v182
  %v305 = vpack.c.b16 %v185, %v183
  %v306 = vpack.c.b16 %v188, %v186
  %v307 = vpack.c.b16 %v189, %v187
  %v308 = vpack.c.b16 %v192, %v190
  %v309 = vpack.c.b16 %v193, %v191
  %v310 = vpack.c.b16 %v196, %v194
  %v311 = vpack.c.b16 %v197, %v195
  %v312 = vpack.c.b16 %v200, %v198
  %v313 = vpack.c.b16 %v201, %v199
  %v314 = vpack.c.b16 %v204, %v202
  %v315 = vpack.c.b16 %v205, %v203
  %v316 = vpack.c.b16 %v208, %v206
  %v317 = vpack.c.b16 %v209, %v207
  %v318 = vpack.c.b16 %v212, %v210
  %v319 = vpack.c.b16 %v213, %v211
  %v320 = vpack.c.b16 %v216, %v214
  %v321 = vpack.c.b16 %v217, %v215
  %v322 = vpack.c.b16 %v220, %v218
  %v323 = vpack.c.b16 %v221, %v219
  %v324 = vpack.c.b16 %v224, %v222
  %v325 = vpack.c.b16 %v225, %v223
  %v326 = vpack.c.b16 %v228, %v226
  %v327 = vpack.c.b16 %v229, %v227
  %v328 = vpack.c.b16 %v232, %v230
  %v329 = vpack.c.b16 %v233, %v231
  %v330 = vpack.c.b16 %v236, %v234
  %v331 = vpack.c.b16 %v237, %v235
  %v332 = vpack.c.b16 %v240, %v238
  %v333 = vpack.c.b16 %v241, %v239
  %v334 = vpack.c.b16 %v244, %v242
  %v335 = vpack.c.b16 %v245, %v243
  %v336 = vpack.c.b16 %v248, %v246
  %v337 = vpack.c.b16 %v249, %v247
  %v338 = vpack.c.b16 %v252, %v250
  %v339 = vpack.c.b16 %v253, %v251
  %v340 = vpack.c.b16 %v256, %v254
  %v341 = vpack.c.b16 %v257, %v255
  %v342 = vpack.c.b16 %v260, %v258
  %v343 = vpack.c.b16 %v261, %v259
  %v344 = vpack.c.b16 %v264, %v262
  %v345 = vpack.c.b16 %v265, %v263
  %v346 = vpack.c.b16 %v268, %v266
  %v347 = vpack.c.b16 %v269, %v267
  %v348 = vpack.c.b16 %v272, %v270
  %v349 = vpack.c.b16 %v273, %v271
  %v350 = vpack.c.b16 %v276, %v274
  %v351 = vpack.c.b16 %v277, %v275
  %v352 = vpack.c.b16 %v280, %v278
  %v353 = vpack.c.b16 %v281, %v279
  %v354 = vpack.c.b16 %v284, %v282
  %v355 = vpack.c.b16 %v285, %v283
  %v356 = vpack.c.b16 %v288, %v286
  %v357 = vpack.c.b16 %v289, %v287
  %v358 = vpack.c.b16 %v292, %v290
  %v359 = vpack.c.b16 %v293, %v291
  %v360 = vpack.c.b16 %v296, %v294
  %v361 = vpack.c.b16 %v297, %v295
  %v414 = vunpack.c.l.b16 %v79
  %v415 = vunpack.c.l.b16 %v80
  %v416 = vunpack.c.l.b16 %v81
  %v417 = vunpack.c.l.b16 %v82
  %v418 = vunpack.c.l.b16 %v83
  %v419 = vunpack.c.l.b16 %v84
  %v420 = vunpack.c.l.b16 %v85
  %v421 = vunpack.c.l.b16 %v86
  %v422 = vunpack.c.l.b16 %v87
  %v423 = vunpack.c.l.b16 %v88
  %v424 = vunpack.c.l.b16 %v89
  %v425 = vunpack.c.l.b16 %v90
  %v426 = vunpack.c.l.b16 %v91
  %v427 = vunpack.c.l.b16 %v92
  %v428 = vunpack.c.l.b16 %v93
  %v429 = vunpack.c.l.b16 %v94
  %v430 = vunpack.c.l.b16 %v95
  %v431 = vunpack.c.l.b16 %v96
  %v432 = vunpack.c.l.b16 %v97
  %v433 = vunpack.c.l.b16 %v98
  %v434 = vpack.c.b16 %v415, %v414
  %v435 = vpack.c.b16 %v417, %v416
  %v436 = vpack.c.b16 %v419, %v418
  %v437 = vpack.c.b16 %v421, %v420
  %v438 = vpack.c.b16 %v423, %v422
  %v439 = vpack.c.b16 %v425, %v424
  %v440 = vpack.c.b16 %v427, %v426
  %v441 = vpack.c.b16 %v429, %v428
  %v442 = vpack.c.b16 %v431, %v430
  %v443 = vpack.c.b16 %v433, %v432
  %vm454 = vcmask 261120
  %v456 = vsel %vm454, %v299, 0
  %v459 = vsel %vm454, %v301, 0
  %v462 = vsel %vm454, %v303, 0
  %v465 = vsel %vm454, %v305, 0
  %v468 = vsel %vm454, %v307, 0
  %v471 = vsel %vm454, %v309, 0
  %v474 = vsel %vm454, %v311, 0
  %v477 = vsel %vm454, %v313, 0
  %v480 = vsel %vm454, %v315, 0
  %v483 = vsel %vm454, %v317, 0
  %v486 = vsel %vm454, %v319, 0
  %v489 = vsel %vm454, %v321, 0
  %v492 = vsel %vm454, %v323, 0
  %v495 = vsel %vm454, %v325, 0
  %v498 = vsel %vm454, %v327, 0
  %v501 = vsel %vm454, %v329, 0
  %v504 = vsel %vm454, %v331, 0
  %v507 = vsel %vm454, %v333, 0
  %v510 = vsel %vm454, %v335, 0
  %v513 = vsel %vm454, %v337, 0
  %v516 = vsel %vm454, %v339, 0
  %v519 = vsel %vm454, %v341, 0
  %v522 = vsel %vm454, %v343, 0
  %v525 = vsel %vm454, %v345, 0
  %v528 = vsel %vm454, %v347, 0
  %v531 = vsel %vm454, %v349, 0
  %v534 = vsel %vm454, %v351, 0
  %v537 = vsel %vm454, %v353, 0
  %v540 = vsel %vm454, %v355, 0
  %v543 = vsel %vm454, %v357, 0
  %v546 = vsel %vm454, %v359, 0
  %v549 = vsel %vm454, %v361, 0
  %551 = vmatprep.subr.bf16.mxu0 0
  %552 = vmatpush1.bf16.msra.mxu0 %v434
  %553 = vmatprep.subr.bf16.mxu0 0
  %554 = vmatpush1.bf16.msra.mxu0 %v435
  %555 = vmatprep.subr.bf16.mxu0 0
  %556 = vmatpush1.bf16.msra.mxu0 %v436
  %557 = vmatprep.subr.bf16.mxu0 0
  %558 = vmatpush1.bf16.msra.mxu0 %v437
  %559 = vmatprep.subr.bf16.mxu0 0
  %560 = vmatpush1.bf16.msra.mxu0 %v438
  %561 = vmatprep.subr.bf16.mxu0 0
  %562 = vmatpush1.bf16.msra.mxu0 %v439
  %563 = vmatprep.subr.bf16.mxu0 0
  %564 = vmatpush1.bf16.msra.mxu0 %v440
  %565 = vmatprep.subr.bf16.mxu0 0
  %566 = vmatpush1.bf16.msra.mxu0 %v441
  %567 = vmatprep.subr.bf16.mxu0 0
  %568 = vmatpush1.bf16.msra.mxu0 %v442
  %569 = vmatprep.subr.bf16.mxu0 0
  %570 = vmatpush1.bf16.msra.mxu0 %v443
  %571 = vmatprep.subr.bf16.mxu0 0
  %572 = vmatpush1.bf16.msra.mxu0 0
  %573 = vmatprep.subr.bf16.mxu0 0
  %574 = vmatpush1.bf16.msra.mxu0 0
  %575 = vmatprep.subr.bf16.mxu0 0
  %576 = vmatpush1.bf16.msra.mxu0 0
  %577 = vmatprep.subr.bf16.mxu0 0
  %578 = vmatpush1.bf16.msra.mxu0 0
  %579 = vmatprep.subr.bf16.mxu0 0
  %580 = vmatpush1.bf16.msra.mxu0 0
  %581 = vmatprep.subr.bf16.mxu0 0
  %582 = vmatpush1.bf16.msra.mxu0 0
  %583 = vmatprep.mubr.bf16.mxu0 %v456
  %584 = vmatmul.mubr.bf16.gmra.mrb[0].mxu0 %v298
  %v585 = vpop.f32.mrb[0].mxu0
  %v586 = vadd.f32 %v104, %v585
  %v587 = vpop.f32.mrb[0].mxu0
  %v588 = vpop.f32.mrb[0].mxu0
  %v589 = vadd.f32 %v104, %v588
  %v590 = vpop.f32.mrb[0].mxu0
  %591 = vmatprep.mubr.bf16.mxu0 %v459
  %592 = vmatmul.mubr.bf16.gmra.mrb[0].mxu0 %v300
  %v593 = vpop.f32.mrb[0].mxu0
  %v594 = vadd.f32 %v104, %v593
  %v595 = vpop.f32.mrb[0].mxu0
  %v596 = vpop.f32.mrb[0].mxu0
  %v597 = vadd.f32 %v104, %v596
  %v598 = vpop.f32.mrb[0].mxu0
  %599 = vmatprep.mubr.bf16.mxu0 %v462
  %600 = vmatmul.mubr.bf16.gmra.mrb[0].mxu0 %v302
  %v601 = vpop.f32.mrb[0].mxu0
  %v602 = vadd.f32 %v104, %v601
  %v603 = vpop.f32.mrb[0].mxu0
  %v604 = vpop.f32.mrb[0].mxu0
  %v605 = vadd.f32 %v104, %v604
  %v606 = vpop.f32.mrb[0].mxu0
  %607 = vmatprep.mubr.bf16.mxu0 %v465
  %608 = vmatmul.mubr.bf16.gmra.mrb[0].mxu0 %v304
  %v609 = vpop.f32.mrb[0].mxu0
  %v610 = vadd.f32 %v104, %v609
  %v611 = vpop.f32.mrb[0].mxu0
  %v612 = vpop.f32.mrb[0].mxu0
  %v613 = vadd.f32 %v104, %v612
  %v614 = vpop.f32.mrb[0].mxu0
  %615 = vmatprep.mubr.bf16.mxu0 %v468
  %616 = vmatmul.mubr.bf16.gmra.mrb[0].mxu0 %v306
  %v617 = vpop.f32.mrb[0].mxu0
  %v618 = vadd.f32 %v104, %v617
  %v619 = vpop.f32.mrb[0].mxu0
  %v620 = vpop.f32.mrb[0].mxu0
  %v621 = vadd.f32 %v104, %v620
  %v622 = vpop.f32.mrb[0].mxu0
  %623 = vmatprep.mubr.bf16.mxu0 %v471
  %624 = vmatmul.mubr.bf16.gmra.mrb[0].mxu0 %v308
  %v625 = vpop.f32.mrb[0].mxu0
  %v626 = vadd.f32 %v104, %v625
  %v627 = vpop.f32.mrb[0].mxu0
  %v628 = vpop.f32.mrb[0].mxu0
  %v629 = vadd.f32 %v104, %v628
  %v630 = vpop.f32.mrb[0].mxu0
  %631 = vmatprep.mubr.bf16.mxu0 %v474
  %632 = vmatmul.mubr.bf16.gmra.mrb[0].mxu0 %v310
  %v633 = vpop.f32.mrb[0].mxu0
  %v634 = vadd.f32 %v104, %v633
  %v635 = vpop.f32.mrb[0].mxu0
  %v636 = vpop.f32.mrb[0].mxu0
  %v637 = vadd.f32 %v104, %v636
  %v638 = vpop.f32.mrb[0].mxu0
  %639 = vmatprep.mubr.bf16.mxu0 %v477
  %640 = vmatmul.mubr.bf16.gmra.mrb[0].mxu0 %v312
  %v641 = vpop.f32.mrb[0].mxu0
  %v642 = vadd.f32 %v104, %v641
  %v643 = vpop.f32.mrb[0].mxu0
  %v644 = vpop.f32.mrb[0].mxu0
  %v645 = vadd.f32 %v104, %v644
  %v646 = vpop.f32.mrb[0].mxu0
  %647 = vmatprep.mubr.bf16.mxu0 %v480
  %648 = vmatmul.mubr.bf16.gmra.mrb[0].mxu0 %v314
  %v649 = vpop.f32.mrb[0].mxu0
  %v650 = vadd.f32 %v104, %v649
  %v651 = vpop.f32.mrb[0].mxu0
  %v652 = vpop.f32.mrb[0].mxu0
  %v653 = vadd.f32 %v104, %v652
  %v654 = vpop.f32.mrb[0].mxu0
  %655 = vmatprep.mubr.bf16.mxu0 %v483
  %656 = vmatmul.mubr.bf16.gmra.mrb[0].mxu0 %v316
  %v657 = vpop.f32.mrb[0].mxu0
  %v658 = vadd.f32 %v104, %v657
  %v659 = vpop.f32.mrb[0].mxu0
  %v660 = vpop.f32.mrb[0].mxu0
  %v661 = vadd.f32 %v104, %v660
  %v662 = vpop.f32.mrb[0].mxu0
  %663 = vmatprep.mubr.bf16.mxu0 %v486
  %664 = vmatmul.mubr.bf16.gmra.mrb[0].mxu0 %v318
  %v665 = vpop.f32.mrb[0].mxu0
  %v666 = vadd.f32 %v104, %v665
  %v667 = vpop.f32.mrb[0].mxu0
  %v668 = vpop.f32.mrb[0].mxu0
  %v669 = vadd.f32 %v104, %v668
  %v670 = vpop.f32.mrb[0].mxu0
  %671 = vmatprep.mubr.bf16.mxu0 %v489
  %672 = vmatmul.mubr.bf16.gmra.mrb[0].mxu0 %v320
  %v673 = vpop.f32.mrb[0].mxu0
  %v674 = vadd.f32 %v104, %v673
  %v675 = vpop.f32.mrb[0].mxu0
  %v676 = vpop.f32.mrb[0].mxu0
  %v677 = vadd.f32 %v104, %v676
  %v678 = vpop.f32.mrb[0].mxu0
  %679 = vmatprep.mubr.bf16.mxu0 %v492
  %680 = vmatmul.mubr.bf16.gmra.mrb[0].mxu0 %v322
  %v681 = vpop.f32.mrb[0].mxu0
  %v682 = vadd.f32 %v104, %v681
  %v683 = vpop.f32.mrb[0].mxu0
  %v684 = vpop.f32.mrb[0].mxu0
  %v685 = vadd.f32 %v104, %v684
  %v686 = vpop.f32.mrb[0].mxu0
  %687 = vmatprep.mubr.bf16.mxu0 %v495
  %688 = vmatmul.mubr.bf16.gmra.mrb[0].mxu0 %v324
  %v689 = vpop.f32.mrb[0].mxu0
  %v690 = vadd.f32 %v104, %v689
  %v691 = vpop.f32.mrb[0].mxu0
  %v692 = vpop.f32.mrb[0].mxu0
  %v693 = vadd.f32 %v104, %v692
  %v694 = vpop.f32.mrb[0].mxu0
  %695 = vmatprep.mubr.bf16.mxu0 %v498
  %696 = vmatmul.mubr.bf16.gmra.mrb[0].mxu0 %v326
  %v697 = vpop.f32.mrb[0].mxu0
  %v698 = vadd.f32 %v104, %v697
  %v699 = vpop.f32.mrb[0].mxu0
  %v700 = vpop.f32.mrb[0].mxu0
  %v701 = vadd.f32 %v104, %v700
  %v702 = vpop.f32.mrb[0].mxu0
  %703 = vmatprep.mubr.bf16.mxu0 %v501
  %704 = vmatmul.mubr.bf16.gmra.mrb[0].mxu0 %v328
  %v705 = vpop.f32.mrb[0].mxu0
  %v706 = vadd.f32 %v104, %v705
  %v707 = vpop.f32.mrb[0].mxu0
  %v708 = vpop.f32.mrb[0].mxu0
  %v709 = vadd.f32 %v104, %v708
  %v710 = vpop.f32.mrb[0].mxu0
  %711 = vmatprep.mubr.bf16.mxu0 %v504
  %712 = vmatmul.mubr.bf16.gmra.mrb[0].mxu0 %v330
  %v713 = vpop.f32.mrb[0].mxu0
  %v714 = vadd.f32 %v104, %v713
  %v715 = vpop.f32.mrb[0].mxu0
  %v716 = vpop.f32.mrb[0].mxu0
  %v717 = vadd.f32 %v104, %v716
  %v718 = vpop.f32.mrb[0].mxu0
  %719 = vmatprep.mubr.bf16.mxu0 %v507
  %720 = vmatmul.mubr.bf16.gmra.mrb[0].mxu0 %v332
  %v721 = vpop.f32.mrb[0].mxu0
  %v722 = vadd.f32 %v104, %v721
  %v723 = vpop.f32.mrb[0].mxu0
  %v724 = vpop.f32.mrb[0].mxu0
  %v725 = vadd.f32 %v104, %v724
  %v726 = vpop.f32.mrb[0].mxu0
  %727 = vmatprep.mubr.bf16.mxu0 %v510
  %728 = vmatmul.mubr.bf16.gmra.mrb[0].mxu0 %v334
  %v729 = vpop.f32.mrb[0].mxu0
  %v730 = vadd.f32 %v104, %v729
  %v731 = vpop.f32.mrb[0].mxu0
  %v732 = vpop.f32.mrb[0].mxu0
  %v733 = vadd.f32 %v104, %v732
  %v734 = vpop.f32.mrb[0].mxu0
  %735 = vmatprep.mubr.bf16.mxu0 %v513
  %736 = vmatmul.mubr.bf16.gmra.mrb[0].mxu0 %v336
  %v737 = vpop.f32.mrb[0].mxu0
  %v738 = vadd.f32 %v104, %v737
  %v739 = vpop.f32.mrb[0].mxu0
  %v740 = vpop.f32.mrb[0].mxu0
  %v741 = vadd.f32 %v104, %v740
  %v742 = vpop.f32.mrb[0].mxu0
  %743 = vmatprep.mubr.bf16.mxu0 %v516
  %744 = vmatmul.mubr.bf16.gmra.mrb[0].mxu0 %v338
  %v745 = vpop.f32.mrb[0].mxu0
  %v746 = vadd.f32 %v104, %v745
  %v747 = vpop.f32.mrb[0].mxu0
  %v748 = vpop.f32.mrb[0].mxu0
  %v749 = vadd.f32 %v104, %v748
  %v750 = vpop.f32.mrb[0].mxu0
  %751 = vmatprep.mubr.bf16.mxu0 %v519
  %752 = vmatmul.mubr.bf16.gmra.mrb[0].mxu0 %v340
  %v753 = vpop.f32.mrb[0].mxu0
  %v754 = vadd.f32 %v104, %v753
  %v755 = vpop.f32.mrb[0].mxu0
  %v756 = vpop.f32.mrb[0].mxu0
  %v757 = vadd.f32 %v104, %v756
  %v758 = vpop.f32.mrb[0].mxu0
  %759 = vmatprep.mubr.bf16.mxu0 %v522
  %760 = vmatmul.mubr.bf16.gmra.mrb[0].mxu0 %v342
  %v761 = vpop.f32.mrb[0].mxu0
  %v762 = vadd.f32 %v104, %v761
  %v763 = vpop.f32.mrb[0].mxu0
  %v764 = vpop.f32.mrb[0].mxu0
  %v765 = vadd.f32 %v104, %v764
  %v766 = vpop.f32.mrb[0].mxu0
  %767 = vmatprep.mubr.bf16.mxu0 %v525
  %768 = vmatmul.mubr.bf16.gmra.mrb[0].mxu0 %v344
  %v769 = vpop.f32.mrb[0].mxu0
  %v770 = vadd.f32 %v104, %v769
  %v771 = vpop.f32.mrb[0].mxu0
  %v772 = vpop.f32.mrb[0].mxu0
  %v773 = vadd.f32 %v104, %v772
  %v774 = vpop.f32.mrb[0].mxu0
  %775 = vmatprep.mubr.bf16.mxu0 %v528
  %776 = vmatmul.mubr.bf16.gmra.mrb[0].mxu0 %v346
  %v777 = vpop.f32.mrb[0].mxu0
  %v778 = vadd.f32 %v104, %v777
  %v779 = vpop.f32.mrb[0].mxu0
  %v780 = vpop.f32.mrb[0].mxu0
  %v781 = vadd.f32 %v104, %v780
  %v782 = vpop.f32.mrb[0].mxu0
  %783 = vmatprep.mubr.bf16.mxu0 %v531
  %784 = vmatmul.mubr.bf16.gmra.mrb[0].mxu0 %v348
  %v785 = vpop.f32.mrb[0].mxu0
  %v786 = vadd.f32 %v104, %v785
  %v787 = vpop.f32.mrb[0].mxu0
  %v788 = vpop.f32.mrb[0].mxu0
  %v789 = vadd.f32 %v104, %v788
  %v790 = vpop.f32.mrb[0].mxu0
  %791 = vmatprep.mubr.bf16.mxu0 %v534
  %792 = vmatmul.mubr.bf16.gmra.mrb[0].mxu0 %v350
  %v793 = vpop.f32.mrb[0].mxu0
  %v794 = vadd.f32 %v104, %v793
  %v795 = vpop.f32.mrb[0].mxu0
  %v796 = vpop.f32.mrb[0].mxu0
  %v797 = vadd.f32 %v104, %v796
  %v798 = vpop.f32.mrb[0].mxu0
  %799 = vmatprep.mubr.bf16.mxu0 %v537
  %800 = vmatmul.mubr.bf16.gmra.mrb[0].mxu0 %v352
  %v801 = vpop.f32.mrb[0].mxu0
  %v802 = vadd.f32 %v104, %v801
  %v803 = vpop.f32.mrb[0].mxu0
  %v804 = vpop.f32.mrb[0].mxu0
  %v805 = vadd.f32 %v104, %v804
  %v806 = vpop.f32.mrb[0].mxu0
  %807 = vmatprep.mubr.bf16.mxu0 %v540
  %808 = vmatmul.mubr.bf16.gmra.mrb[0].mxu0 %v354
  %v809 = vpop.f32.mrb[0].mxu0
  %v810 = vadd.f32 %v104, %v809
  %v811 = vpop.f32.mrb[0].mxu0
  %v812 = vpop.f32.mrb[0].mxu0
  %v813 = vadd.f32 %v104, %v812
  %v814 = vpop.f32.mrb[0].mxu0
  %815 = vmatprep.mubr.bf16.mxu0 %v543
  %816 = vmatmul.mubr.bf16.gmra.mrb[0].mxu0 %v356
  %v817 = vpop.f32.mrb[0].mxu0
  %v818 = vadd.f32 %v104, %v817
  %v819 = vpop.f32.mrb[0].mxu0
  %v820 = vpop.f32.mrb[0].mxu0
  %v821 = vadd.f32 %v104, %v820
  %v822 = vpop.f32.mrb[0].mxu0
  %823 = vmatprep.mubr.bf16.mxu0 %v546
  %824 = vmatmul.mubr.bf16.gmra.mrb[0].mxu0 %v358
  %v825 = vpop.f32.mrb[0].mxu0
  %v826 = vadd.f32 %v104, %v825
  %v827 = vpop.f32.mrb[0].mxu0
  %v828 = vpop.f32.mrb[0].mxu0
  %v829 = vadd.f32 %v104, %v828
  %v830 = vpop.f32.mrb[0].mxu0
  %831 = vmatprep.mubr.bf16.mxu0 %v549
  %832 = vmatmul.mubr.bf16.gmra.mrb[0].mxu0 %v360
  %v833 = vpop.f32.mrb[0].mxu0
  %v834 = vadd.f32 %v104, %v833
  %v835 = vpop.f32.mrb[0].mxu0
  %v836 = vpop.f32.mrb[0].mxu0
  %v837 = vadd.f32 %v104, %v836
  %v838 = vpop.f32.mrb[0].mxu0
  %839 = vdwg.mxu0
  %v840 = vmax.f32 %v586, 0.0
  %v841 = vmax.f32 %v589, 0.0
  %v842 = vmax.f32 %v594, 0.0
  %v843 = vmax.f32 %v597, 0.0
  %v844 = vmax.f32 %v602, 0.0
  %v845 = vmax.f32 %v605, 0.0
  %v846 = vmax.f32 %v610, 0.0
  %v847 = vmax.f32 %v613, 0.0
  %v848 = vmax.f32 %v618, 0.0
  %v849 = vmax.f32 %v621, 0.0
  %v850 = vmax.f32 %v626, 0.0
  %v851 = vmax.f32 %v629, 0.0
  %v852 = vmax.f32 %v634, 0.0
  %v853 = vmax.f32 %v637, 0.0
  %v854 = vmax.f32 %v642, 0.0
  %v855 = vmax.f32 %v645, 0.0
  %v856 = vmax.f32 %v650, 0.0
  %v857 = vmax.f32 %v653, 0.0
  %v858 = vmax.f32 %v658, 0.0
  %v859 = vmax.f32 %v661, 0.0
  %v860 = vmax.f32 %v666, 0.0
  %v861 = vmax.f32 %v669, 0.0
  %v862 = vmax.f32 %v674, 0.0
  %v863 = vmax.f32 %v677, 0.0
  %v864 = vmax.f32 %v682, 0.0
  %v865 = vmax.f32 %v685, 0.0
  %v866 = vmax.f32 %v690, 0.0
  %v867 = vmax.f32 %v693, 0.0
  %v868 = vmax.f32 %v698, 0.0
  %v869 = vmax.f32 %v701, 0.0
  %v870 = vmax.f32 %v706, 0.0
  %v871 = vmax.f32 %v709, 0.0
  %v872 = vmax.f32 %v714, 0.0
  %v873 = vmax.f32 %v717, 0.0
  %v874 = vmax.f32 %v722, 0.0
  %v875 = vmax.f32 %v725, 0.0
  %v876 = vmax.f32 %v730, 0.0
  %v877 = vmax.f32 %v733, 0.0
  %v878 = vmax.f32 %v738, 0.0
  %v879 = vmax.f32 %v741, 0.0
  %v880 = vmax.f32 %v746, 0.0
  %v881 = vmax.f32 %v749, 0.0
  %v882 = vmax.f32 %v754, 0.0
  %v883 = vmax.f32 %v757, 0.0
  %v884 = vmax.f32 %v762, 0.0
  %v885 = vmax.f32 %v765, 0.0
  %v886 = vmax.f32 %v770, 0.0
  %v887 = vmax.f32 %v773, 0.0
  %v888 = vmax.f32 %v778, 0.0
  %v889 = vmax.f32 %v781, 0.0
  %v890 = vmax.f32 %v786, 0.0
  %v891 = vmax.f32 %v789, 0.0
  %v892 = vmax.f32 %v794, 0.0
  %v893 = vmax.f32 %v797, 0.0
  %v894 = vmax.f32 %v802, 0.0
  %v895 = vmax.f32 %v805, 0.0
  %v896 = vmax.f32 %v810, 0.0
  %v897 = vmax.f32 %v813, 0.0
  %v898 = vmax.f32 %v818, 0.0
  %v899 = vmax.f32 %v821, 0.0
  %v900 = vmax.f32 %v826, 0.0
  %v901 = vmax.f32 %v829, 0.0
  %v902 = vmax.f32 %v834, 0.0
  %v903 = vmax.f32 %v837, 0.0
  %v904 = vpack.c.bf16 %v841, %v840
  %v905 = vpack.c.bf16 %v843, %v842
  %v906 = vpack.c.bf16 %v845, %v844
  %v907 = vpack.c.bf16 %v847, %v846
  %v908 = vpack.c.bf16 %v849, %v848
  %v909 = vpack.c.bf16 %v851, %v850
  %v910 = vpack.c.bf16 %v853, %v852
  %v911 = vpack.c.bf16 %v855, %v854
  %v912 = vpack.c.bf16 %v857, %v856
  %v913 = vpack.c.bf16 %v859, %v858
  %v914 = vpack.c.bf16 %v861, %v860
  %v915 = vpack.c.bf16 %v863, %v862
  %v916 = vpack.c.bf16 %v865, %v864
  %v917 = vpack.c.bf16 %v867, %v866
  %v918 = vpack.c.bf16 %v869, %v868
  %v919 = vpack.c.bf16 %v871, %v870
  %v920 = vpack.c.bf16 %v873, %v872
  %v921 = vpack.c.bf16 %v875, %v874
  %v922 = vpack.c.bf16 %v877, %v876
  %v923 = vpack.c.bf16 %v879, %v878
  %v924 = vpack.c.bf16 %v881, %v880
  %v925 = vpack.c.bf16 %v883, %v882
  %v926 = vpack.c.bf16 %v885, %v884
  %v927 = vpack.c.bf16 %v887, %v886
  %v928 = vpack.c.bf16 %v889, %v888
  %v929 = vpack.c.bf16 %v891, %v890
  %v930 = vpack.c.bf16 %v893, %v892
  %v931 = vpack.c.bf16 %v895, %v894
  %v932 = vpack.c.bf16 %v897, %v896
  %v933 = vpack.c.bf16 %v899, %v898
  %v934 = vpack.c.bf16 %v901, %v900
  %v935 = vpack.c.bf16 %v903, %v902
  %v968 = vunpack.c.l.b16 %v904
  %v969 = vunpack.c.h.b16 %v904
  %v970 = vunpack.c.l.b16 %v905
  %v971 = vunpack.c.h.b16 %v905
  %v972 = vunpack.c.l.b16 %v906
  %v973 = vunpack.c.h.b16 %v906
  %v974 = vunpack.c.l.b16 %v907
  %v975 = vunpack.c.h.b16 %v907
  %v976 = vunpack.c.l.b16 %v908
  %v977 = vunpack.c.h.b16 %v908
  %v978 = vunpack.c.l.b16 %v909
  %v979 = vunpack.c.h.b16 %v909
  %v980 = vunpack.c.l.b16 %v910
  %v981 = vunpack.c.h.b16 %v910
  %v982 = vunpack.c.l.b16 %v911
  %v983 = vunpack.c.h.b16 %v911
  %v984 = vunpack.c.l.b16 %v912
  %v985 = vunpack.c.h.b16 %v912
  %v986 = vunpack.c.l.b16 %v913
  %v987 = vunpack.c.h.b16 %v913
  %v988 = vunpack.c.l.b16 %v914
  %v989 = vunpack.c.h.b16 %v914
  %v990 = vunpack.c.l.b16 %v915
  %v991 = vunpack.c.h.b16 %v915
  %v992 = vunpack.c.l.b16 %v916
  %v993 = vunpack.c.h.b16 %v916
  %v994 = vunpack.c.l.b16 %v917
  %v995 = vunpack.c.h.b16 %v917
  %v996 = vunpack.c.l.b16 %v918
  %v997 = vunpack.c.h.b16 %v918
  %v998 = vunpack.c.l.b16 %v919
  %v999 = vunpack.c.h.b16 %v919
  %v1000 = vunpack.c.l.b16 %v920
  %v1001 = vunpack.c.h.b16 %v920
  %v1002 = vunpack.c.l.b16 %v921
  %v1003 = vunpack.c.h.b16 %v921
  %v1004 = vunpack.c.l.b16 %v922
  %v1005 = vunpack.c.h.b16 %v922
  %v1006 = vunpack.c.l.b16 %v923
  %v1007 = vunpack.c.h.b16 %v923
  %v1008 = vunpack.c.l.b16 %v924
  %v1009 = vunpack.c.h.b16 %v924
  %v1010 = vunpack.c.l.b16 %v925
  %v1011 = vunpack.c.h.b16 %v925
  %v1012 = vunpack.c.l.b16 %v926
  %v1013 = vunpack.c.h.b16 %v926
  %v1014 = vunpack.c.l.b16 %v927
  %v1015 = vunpack.c.h.b16 %v927
  %v1016 = vunpack.c.l.b16 %v928
  %v1017 = vunpack.c.h.b16 %v928
  %v1018 = vunpack.c.l.b16 %v929
  %v1019 = vunpack.c.h.b16 %v929
  %v1020 = vunpack.c.l.b16 %v930
  %v1021 = vunpack.c.h.b16 %v930
  %v1022 = vunpack.c.l.b16 %v931
  %v1023 = vunpack.c.h.b16 %v931
  %v1024 = vunpack.c.l.b16 %v932
  %v1025 = vunpack.c.h.b16 %v932
  %v1026 = vunpack.c.l.b16 %v933
  %v1027 = vunpack.c.h.b16 %v933
  %v1028 = vunpack.c.l.b16 %v934
  %v1029 = vunpack.c.h.b16 %v934
  %v1030 = vunpack.c.l.b16 %v935
  %v1031 = vunpack.c.h.b16 %v935
  %v1032 = vpack.c.b16 %v968, %v968
  %v1033 = vpack.c.b16 %v969, %v969
  %v1034 = vpack.c.b16 %v970, %v970
  %v1035 = vpack.c.b16 %v971, %v971
  %v1036 = vpack.c.b16 %v972, %v972
  %v1037 = vpack.c.b16 %v973, %v973
  %v1038 = vpack.c.b16 %v974, %v974
  %v1039 = vpack.c.b16 %v975, %v975
  %v1040 = vpack.c.b16 %v976, %v976
  %v1041 = vpack.c.b16 %v977, %v977
  %v1042 = vpack.c.b16 %v978, %v978
  %v1043 = vpack.c.b16 %v979, %v979
  %v1044 = vpack.c.b16 %v980, %v980
  %v1045 = vpack.c.b16 %v981, %v981
  %v1046 = vpack.c.b16 %v982, %v982
  %v1047 = vpack.c.b16 %v983, %v983
  %v1048 = vpack.c.b16 %v984, %v984
  %v1049 = vpack.c.b16 %v985, %v985
  %v1050 = vpack.c.b16 %v986, %v986
  %v1051 = vpack.c.b16 %v987, %v987
  %v1052 = vpack.c.b16 %v988, %v988
  %v1053 = vpack.c.b16 %v989, %v989
  %v1054 = vpack.c.b16 %v990, %v990
  %v1055 = vpack.c.b16 %v991, %v991
  %v1056 = vpack.c.b16 %v992, %v992
  %v1057 = vpack.c.b16 %v993, %v993
  %v1058 = vpack.c.b16 %v994, %v994
  %v1059 = vpack.c.b16 %v995, %v995
  %v1060 = vpack.c.b16 %v996, %v996
  %v1061 = vpack.c.b16 %v997, %v997
  %v1062 = vpack.c.b16 %v998, %v998
  %v1063 = vpack.c.b16 %v999, %v999
  %v1064 = vpack.c.b16 %v1000, %v1000
  %v1065 = vpack.c.b16 %v1001, %v1001
  %v1066 = vpack.c.b16 %v1002, %v1002
  %v1067 = vpack.c.b16 %v1003, %v1003
  %v1068 = vpack.c.b16 %v1004, %v1004
  %v1069 = vpack.c.b16 %v1005, %v1005
  %v1070 = vpack.c.b16 %v1006, %v1006
  %v1071 = vpack.c.b16 %v1007, %v1007
  %v1072 = vpack.c.b16 %v1008, %v1008
  %v1073 = vpack.c.b16 %v1009, %v1009
  %v1074 = vpack.c.b16 %v1010, %v1010
  %v1075 = vpack.c.b16 %v1011, %v1011
  %v1076 = vpack.c.b16 %v1012, %v1012
  %v1077 = vpack.c.b16 %v1013, %v1013
  %v1078 = vpack.c.b16 %v1014, %v1014
  %v1079 = vpack.c.b16 %v1015, %v1015
  %v1080 = vpack.c.b16 %v1016, %v1016
  %v1081 = vpack.c.b16 %v1017, %v1017
  %v1082 = vpack.c.b16 %v1018, %v1018
  %v1083 = vpack.c.b16 %v1019, %v1019
  %v1084 = vpack.c.b16 %v1020, %v1020
  %v1085 = vpack.c.b16 %v1021, %v1021
  %v1086 = vpack.c.b16 %v1022, %v1022
  %v1087 = vpack.c.b16 %v1023, %v1023
  %v1088 = vpack.c.b16 %v1024, %v1024
  %v1089 = vpack.c.b16 %v1025, %v1025
  %v1090 = vpack.c.b16 %v1026, %v1026
  %v1091 = vpack.c.b16 %v1027, %v1027
  %v1092 = vpack.c.b16 %v1028, %v1028
  %v1093 = vpack.c.b16 %v1029, %v1029
  %v1094 = vpack.c.b16 %v1030, %v1030
  %v1095 = vpack.c.b16 %v1031, %v1031
  %1160 = vst [vmem:[%s3] sm:$0xf] %v1032
  %1161 = vst [vmem:[%s3 + $0x4] sm:$0xf] %v1033
  %1162 = vst [vmem:[%s3 + $0x8] sm:$0xf] %v1034
  %1163 = vst [vmem:[%s3 + $0xc] sm:$0xf] %v1035
  %1164 = vst [vmem:[%s3 + $0x10] sm:$0xf] %v1036
  %1165 = vst [vmem:[%s3 + $0x14] sm:$0xf] %v1037
  %1166 = vst [vmem:[%s3 + $0x18] sm:$0xf] %v1038
  %1167 = vst [vmem:[%s3 + $0x1c] sm:$0xf] %v1039
  %1168 = vst [vmem:[%s3 + $0x20] sm:$0xf] %v1040
  %1169 = vst [vmem:[%s3 + $0x24] sm:$0xf] %v1041
  %1170 = vst [vmem:[%s3 + $0x28] sm:$0xf] %v1042
  %1171 = vst [vmem:[%s3 + $0x2c] sm:$0xf] %v1043
  %1172 = vst [vmem:[%s3 + $0x30] sm:$0xf] %v1044
  %1173 = vst [vmem:[%s3 + $0x34] sm:$0xf] %v1045
  %1174 = vst [vmem:[%s3 + $0x38] sm:$0xf] %v1046
  %1175 = vst [vmem:[%s3 + $0x3c] sm:$0xf] %v1047
  %1176 = vst [vmem:[%s3 + $0x40] sm:$0xf] %v1048
  %1177 = vst [vmem:[%s3 + $0x44] sm:$0xf] %v1049
  %1178 = vst [vmem:[%s3 + $0x48] sm:$0xf] %v1050
  %1179 = vst [vmem:[%s3 + $0x4c] sm:$0xf] %v1051
  %1180 = vst [vmem:[%s3 + $0x50] sm:$0xf] %v1052
  %1181 = vst [vmem:[%s3 + $0x54] sm:$0xf] %v1053
  %1182 = vst [vmem:[%s3 + $0x58] sm:$0xf] %v1054
  %1183 = vst [vmem:[%s3 + $0x5c] sm:$0xf] %v1055
  %1184 = vst [vmem:[%s3 + $0x60] sm:$0xf] %v1056
  %1185 = vst [vmem:[%s3 + $0x64] sm:$0xf] %v1057
  %1186 = vst [vmem:[%s3 + $0x68] sm:$0xf] %v1058
  %1187 = vst [vmem:[%s3 + $0x6c] sm:$0xf] %v1059
  %1188 = vst [vmem:[%s3 + $0x70] sm:$0xf] %v1060
  %1189 = vst [vmem:[%s3 + $0x74] sm:$0xf] %v1061
  %1190 = vst [vmem:[%s3 + $0x78] sm:$0xf] %v1062
  %1191 = vst [vmem:[%s3 + $0x7c] sm:$0xf] %v1063
  %1192 = vst [vmem:[%s3 + $0x80] sm:$0xf] %v1064
  %1193 = vst [vmem:[%s3 + $0x84] sm:$0xf] %v1065
  %1194 = vst [vmem:[%s3 + $0x88] sm:$0xf] %v1066
  %1195 = vst [vmem:[%s3 + $0x8c] sm:$0xf] %v1067
  %1196 = vst [vmem:[%s3 + $0x90] sm:$0xf] %v1068
  %1197 = vst [vmem:[%s3 + $0x94] sm:$0xf] %v1069
  %1198 = vst [vmem:[%s3 + $0x98] sm:$0xf] %v1070
  %1199 = vst [vmem:[%s3 + $0x9c] sm:$0xf] %v1071
  %1200 = vst [vmem:[%s3 + $0xa0] sm:$0xf] %v1072
  %1201 = vst [vmem:[%s3 + $0xa4] sm:$0xf] %v1073
  %1202 = vst [vmem:[%s3 + $0xa8] sm:$0xf] %v1074
  %1203 = vst [vmem:[%s3 + $0xac] sm:$0xf] %v1075
  %1204 = vst [vmem:[%s3 + $0xb0] sm:$0xf] %v1076
  %1205 = vst [vmem:[%s3 + $0xb4] sm:$0xf] %v1077
  %1206 = vst [vmem:[%s3 + $0xb8] sm:$0xf] %v1078
  %1207 = vst [vmem:[%s3 + $0xbc] sm:$0xf] %v1079
  %1208 = vst [vmem:[%s3 + $0xc0] sm:$0xf] %v1080
  %1209 = vst [vmem:[%s3 + $0xc4] sm:$0xf] %v1081
  %1210 = vst [vmem:[%s3 + $0xc8] sm:$0xf] %v1082
  %1211 = vst [vmem:[%s3 + $0xcc] sm:$0xf] %v1083
  %1212 = vst [vmem:[%s3 + $0xd0] sm:$0xf] %v1084
  %1213 = vst [vmem:[%s3 + $0xd4] sm:$0xf] %v1085
  %1214 = vst [vmem:[%s3 + $0xd8] sm:$0xf] %v1086
  %1215 = vst [vmem:[%s3 + $0xdc] sm:$0xf] %v1087
  %1216 = vst [vmem:[%s3 + $0xe0] sm:$0xf] %v1088
  %1217 = vst [vmem:[%s3 + $0xe4] sm:$0xf] %v1089
  %1218 = vst [vmem:[%s3 + $0xe8] sm:$0xf] %v1090
  %1219 = vst [vmem:[%s3 + $0xec] sm:$0xf] %v1091
  %1220 = vst [vmem:[%s3 + $0xf0] sm:$0xf] %v1092
  %1221 = vst [vmem:[%s3 + $0xf4] sm:$0xf] %v1093
  %1222 = vst [vmem:[%s3 + $0xf8] sm:$0xf] %v1094
  %1223 = vst [vmem:[%s3 + $0xfc] sm:$0xf] %v1095
  // Predicated region
  $region14: #{resnet_forward.10} parent=0 // pred_check
    _
  $region15: #{resnet_forward.10} parent=0 // pred_check_branch
    %1225 = sbr.rel (0) target = $region17
  $region16: #{resnet_forward.10} parent=0 // pred_region
    _
  $region17: #{resnet_forward.10} parent=0 // pred_fallthru
    _
  // Predicated region
  $region18: #{resnet_forward.10} parent=0 // pred_check
    _
  $region19: #{resnet_forward.10} parent=0 // pred_check_branch
    %1227 = sbr.rel (0) target = $region21
  $region20: #{resnet_forward.10} parent=0 // pred_region
    _
  $region21: #{resnet_forward.10} parent=0 // pred_fallthru
    _

// kernel: resnet_forward.11
$region0: #{resnet_forward.11}
  #allocation0 [shape = 'u32[]', space=smem, size = 0x4, offset = 0x4, fixed_abs, tag = 'smem constant byte address 0x4 - core index']
  #allocation1 [shape = 'u32[144,128]{1,0:T(1,128)}', space=vmem, size = 0x12000, scoped, tag = 'internal scratch']
  %s0 = inlined_call_operand.vmem [shape: bf16[9,128,128], index: 0, kind: input, shape index: {}]
  %s1 = inlined_call_operand.vmem [shape: bf16[128,128], index: 1, kind: output, shape index: {}]
  %s2 = sld [smem:[#allocation0]]
  $region14: #{resnet_forward.11} parent=0
    _
  %s4 = ssub.s32 1, %s2
  %s5 = scalar_select 0, %s4, %s2
  // Predicated region
  $region2: #{resnet_forward.11} parent=0 // pred_check
    _
  $region3: #{resnet_forward.11} parent=0 // pred_check_branch
    %7 = sbr.rel (0) target = $region5
  $region4: #{resnet_forward.11} parent=0 // pred_region
    _
  $region5: #{resnet_forward.11} parent=0 // pred_fallthru
    _
  %v8 = vld [vmem:[%s0] sm:$0xf]
  %v9 = vld [vmem:[%s0 + $0x4] sm:$0xf]
  %v10 = vld [vmem:[%s0 + $0x8] sm:$0xf]
  %v11 = vld [vmem:[%s0 + $0xc] sm:$0xf]
  %v12 = vld [vmem:[%s0 + $0x10] sm:$0xf]
  %v13 = vld [vmem:[%s0 + $0x14] sm:$0xf]
  %v14 = vld [vmem:[%s0 + $0x18] sm:$0xf]
  %v15 = vld [vmem:[%s0 + $0x1c] sm:$0xf]
  %v16 = vld [vmem:[%s0 + $0x20] sm:$0xf]
  %v17 = vld [vmem:[%s0 + $0x24] sm:$0xf]
  %v18 = vld [vmem:[%s0 + $0x28] sm:$0xf]
  %v19 = vld [vmem:[%s0 + $0x2c] sm:$0xf]
  %v20 = vld [vmem:[%s0 + $0x30] sm:$0xf]
  %v21 = vld [vmem:[%s0 + $0x34] sm:$0xf]
  %v22 = vld [vmem:[%s0 + $0x38] sm:$0xf]
  %v23 = vld [vmem:[%s0 + $0x3c] sm:$0xf]
  %s24 = scalar_lea.vmem %s0, 64
  %v25 = vld [vmem:[%s24] sm:$0xf]
  %v26 = vld [vmem:[%s24 + $0x4] sm:$0xf]
  %v27 = vld [vmem:[%s24 + $0x8] sm:$0xf]
  %v28 = vld [vmem:[%s24 + $0xc] sm:$0xf]
  %v29 = vld [vmem:[%s24 + $0x10] sm:$0xf]
  %v30 = vld [vmem:[%s24 + $0x14] sm:$0xf]
  %v31 = vld [vmem:[%s24 + $0x18] sm:$0xf]
  %v32 = vld [vmem:[%s24 + $0x1c] sm:$0xf]
  %v33 = vld [vmem:[%s24 + $0x20] sm:$0xf]
  %v34 = vld [vmem:[%s24 + $0x24] sm:$0xf]
  %v35 = vld [vmem:[%s24 + $0x28] sm:$0xf]
  %v36 = vld [vmem:[%s24 + $0x2c] sm:$0xf]
  %v37 = vld [vmem:[%s24 + $0x30] sm:$0xf]
  %v38 = vld [vmem:[%s24 + $0x34] sm:$0xf]
  %v39 = vld [vmem:[%s24 + $0x38] sm:$0xf]
  %v40 = vld [vmem:[%s24 + $0x3c] sm:$0xf]
  %v41 = vmax.bf16 %v8, %v25
  %v42 = vmax.bf16 %v9, %v26
  %v43 = vmax.bf16 %v10, %v27
  %v44 = vmax.bf16 %v11, %v28
  %v45 = vmax.bf16 %v12, %v29
  %v46 = vmax.bf16 %v13, %v30
  %v47 = vmax.bf16 %v14, %v31
  %v48 = vmax.bf16 %v15, %v32
  %v49 = vmax.bf16 %v16, %v33
  %v50 = vmax.bf16 %v17, %v34
  %v51 = vmax.bf16 %v18, %v35
  %v52 = vmax.bf16 %v19, %v36
  %v53 = vmax.bf16 %v20, %v37
  %v54 = vmax.bf16 %v21, %v38
  %v55 = vmax.bf16 %v22, %v39
  %v56 = vmax.bf16 %v23, %v40
  %s57 = scalar_lea.vmem %s0, 128
  %v58 = vld [vmem:[%s57] sm:$0xf]
  %v59 = vld [vmem:[%s57 + $0x4] sm:$0xf]
  %v60 = vld [vmem:[%s57 + $0x8] sm:$0xf]
  %v61 = vld [vmem:[%s57 + $0xc] sm:$0xf]
  %v62 = vld [vmem:[%s57 + $0x10] sm:$0xf]
  %v63 = vld [vmem:[%s57 + $0x14] sm:$0xf]
  %v64 = vld [vmem:[%s57 + $0x18] sm:$0xf]
  %v65 = vld [vmem:[%s57 + $0x1c] sm:$0xf]
  %v66 = vld [vmem:[%s57 + $0x20] sm:$0xf]
  %v67 = vld [vmem:[%s57 + $0x24] sm:$0xf]
  %v68 = vld [vmem:[%s57 + $0x28] sm:$0xf]
  %v69 = vld [vmem:[%s57 + $0x2c] sm:$0xf]
  %v70 = vld [vmem:[%s57 + $0x30] sm:$0xf]
  %v71 = vld [vmem:[%s57 + $0x34] sm:$0xf]
  %v72 = vld [vmem:[%s57 + $0x38] sm:$0xf]
  %v73 = vld [vmem:[%s57 + $0x3c] sm:$0xf]
  %v74 = vmax.bf16 %v41, %v58
  %v75 = vmax.bf16 %v42, %v59
  %v76 = vmax.bf16 %v43, %v60
  %v77 = vmax.bf16 %v44, %v61
  %v78 = vmax.bf16 %v45, %v62
  %v79 = vmax.bf16 %v46, %v63
  %v80 = vmax.bf16 %v47, %v64
  %v81 = vmax.bf16 %v48, %v65
  %v82 = vmax.bf16 %v49, %v66
  %v83 = vmax.bf16 %v50, %v67
  %v84 = vmax.bf16 %v51, %v68
  %v85 = vmax.bf16 %v52, %v69
  %v86 = vmax.bf16 %v53, %v70
  %v87 = vmax.bf16 %v54, %v71
  %v88 = vmax.bf16 %v55, %v72
  %v89 = vmax.bf16 %v56, %v73
  %s90 = scalar_lea.vmem %s0, 192
  %v91 = vld [vmem:[%s90] sm:$0xf]
  %v92 = vld [vmem:[%s90 + $0x4] sm:$0xf]
  %v93 = vld [vmem:[%s90 + $0x8] sm:$0xf]
  %v94 = vld [vmem:[%s90 + $0xc] sm:$0xf]
  %v95 = vld [vmem:[%s90 + $0x10] sm:$0xf]
  %v96 = vld [vmem:[%s90 + $0x14] sm:$0xf]
  %v97 = vld [vmem:[%s90 + $0x18] sm:$0xf]
  %v98 = vld [vmem:[%s90 + $0x1c] sm:$0xf]
  %v99 = vld [vmem:[%s90 + $0x20] sm:$0xf]
  %v100 = vld [vmem:[%s90 + $0x24] sm:$0xf]
  %v101 = vld [vmem:[%s90 + $0x28] sm:$0xf]
  %v102 = vld [vmem:[%s90 + $0x2c] sm:$0xf]
  %v103 = vld [vmem:[%s90 + $0x30] sm:$0xf]
  %v104 = vld [vmem:[%s90 + $0x34] sm:$0xf]
  %v105 = vld [vmem:[%s90 + $0x38] sm:$0xf]
  %v106 = vld [vmem:[%s90 + $0x3c] sm:$0xf]
  %v107 = vmax.bf16 %v74, %v91
  %v108 = vmax.bf16 %v75, %v92
  %v109 = vmax.bf16 %v76, %v93
  %v110 = vmax.bf16 %v77, %v94
  %v111 = vmax.bf16 %v78, %v95
  %v112 = vmax.bf16 %v79, %v96
  %v113 = vmax.bf16 %v80, %v97
  %v114 = vmax.bf16 %v81, %v98
  %v115 = vmax.bf16 %v82, %v99
  %v116 = vmax.bf16 %v83, %v100
  %v117 = vmax.bf16 %v84, %v101
  %v118 = vmax.bf16 %v85, %v102
  %v119 = vmax.bf16 %v86, %v103
  %v120 = vmax.bf16 %v87, %v104
  %v121 = vmax.bf16 %v88, %v105
  %v122 = vmax.bf16 %v89, %v106
  %s123 = scalar_lea.vmem %s0, 256
  %v124 = vld [vmem:[%s123] sm:$0xf]
  %v125 = vld [vmem:[%s123 + $0x4] sm:$0xf]
  %v126 = vld [vmem:[%s123 + $0x8] sm:$0xf]
  %v127 = vld [vmem:[%s123 + $0xc] sm:$0xf]
  %v128 = vld [vmem:[%s123 + $0x10] sm:$0xf]
  %v129 = vld [vmem:[%s123 + $0x14] sm:$0xf]
  %v130 = vld [vmem:[%s123 + $0x18] sm:$0xf]
  %v131 = vld [vmem:[%s123 + $0x1c] sm:$0xf]
  %v132 = vld [vmem:[%s123 + $0x20] sm:$0xf]
  %v133 = vld [vmem:[%s123 + $0x24] sm:$0xf]
  %v134 = vld [vmem:[%s123 + $0x28] sm:$0xf]
  %v135 = vld [vmem:[%s123 + $0x2c] sm:$0xf]
  %v136 = vld [vmem:[%s123 + $0x30] sm:$0xf]
  %v137 = vld [vmem:[%s123 + $0x34] sm:$0xf]
  %v138 = vld [vmem:[%s123 + $0x38] sm:$0xf]
  %v139 = vld [vmem:[%s123 + $0x3c] sm:$0xf]
  %v140 = vmax.bf16 %v107, %v124
  %v141 = vmax.bf16 %v108, %v125
  %v142 = vmax.bf16 %v109, %v126
  %v143 = vmax.bf16 %v110, %v127
  %v144 = vmax.bf16 %v111, %v128
  %v145 = vmax.bf16 %v112, %v129
  %v146 = vmax.bf16 %v113, %v130
  %v147 = vmax.bf16 %v114, %v131
  %v148 = vmax.bf16 %v115, %v132
  %v149 = vmax.bf16 %v116, %v133
  %v150 = vmax.bf16 %v117, %v134
  %v151 = vmax.bf16 %v118, %v135
  %v152 = vmax.bf16 %v119, %v136
  %v153 = vmax.bf16 %v120, %v137
  %v154 = vmax.bf16 %v121, %v138
  %v155 = vmax.bf16 %v122, %v139
  %s156 = scalar_lea.vmem %s0, 320
  %v157 = vld [vmem:[%s156] sm:$0xf]
  %v158 = vld [vmem:[%s156 + $0x4] sm:$0xf]
  %v159 = vld [vmem:[%s156 + $0x8] sm:$0xf]
  %v160 = vld [vmem:[%s156 + $0xc] sm:$0xf]
  %v161 = vld [vmem:[%s156 + $0x10] sm:$0xf]
  %v162 = vld [vmem:[%s156 + $0x14] sm:$0xf]
  %v163 = vld [vmem:[%s156 + $0x18] sm:$0xf]
  %v164 = vld [vmem:[%s156 + $0x1c] sm:$0xf]
  %v165 = vld [vmem:[%s156 + $0x20] sm:$0xf]
  %v166 = vld [vmem:[%s156 + $0x24] sm:$0xf]
  %v167 = vld [vmem:[%s156 + $0x28] sm:$0xf]
  %v168 = vld [vmem:[%s156 + $0x2c] sm:$0xf]
  %v169 = vld [vmem:[%s156 + $0x30] sm:$0xf]
  %v170 = vld [vmem:[%s156 + $0x34] sm:$0xf]
  %v171 = vld [vmem:[%s156 + $0x38] sm:$0xf]
  %v172 = vld [vmem:[%s156 + $0x3c] sm:$0xf]
  %v173 = vmax.bf16 %v140, %v157
  %v174 = vmax.bf16 %v141, %v158
  %v175 = vmax.bf16 %v142, %v159
  %v176 = vmax.bf16 %v143, %v160
  %v177 = vmax.bf16 %v144, %v161
  %v178 = vmax.bf16 %v145, %v162
  %v179 = vmax.bf16 %v146, %v163
  %v180 = vmax.bf16 %v147, %v164
  %v181 = vmax.bf16 %v148, %v165
  %v182 = vmax.bf16 %v149, %v166
  %v183 = vmax.bf16 %v150, %v167
  %v184 = vmax.bf16 %v151, %v168
  %v185 = vmax.bf16 %v152, %v169
  %v186 = vmax.bf16 %v153, %v170
  %v187 = vmax.bf16 %v154, %v171
  %v188 = vmax.bf16 %v155, %v172
  %s189 = scalar_lea.vmem %s0, 384
  %v190 = vld [vmem:[%s189] sm:$0xf]
  %v191 = vld [vmem:[%s189 + $0x4] sm:$0xf]
  %v192 = vld [vmem:[%s189 + $0x8] sm:$0xf]
  %v193 = vld [vmem:[%s189 + $0xc] sm:$0xf]
  %v194 = vld [vmem:[%s189 + $0x10] sm:$0xf]
  %v195 = vld [vmem:[%s189 + $0x14] sm:$0xf]
  %v196 = vld [vmem:[%s189 + $0x18] sm:$0xf]
  %v197 = vld [vmem:[%s189 + $0x1c] sm:$0xf]
  %v198 = vld [vmem:[%s189 + $0x20] sm:$0xf]
  %v199 = vld [vmem:[%s189 + $0x24] sm:$0xf]
  %v200 = vld [vmem:[%s189 + $0x28] sm:$0xf]
  %v201 = vld [vmem:[%s189 + $0x2c] sm:$0xf]
  %v202 = vld [vmem:[%s189 + $0x30] sm:$0xf]
  %v203 = vld [vmem:[%s189 + $0x34] sm:$0xf]
  %v204 = vld [vmem:[%s189 + $0x38] sm:$0xf]
  %v205 = vld [vmem:[%s189 + $0x3c] sm:$0xf]
  %v206 = vmax.bf16 %v173, %v190
  %v207 = vmax.bf16 %v174, %v191
  %v208 = vmax.bf16 %v175, %v192
  %v209 = vmax.bf16 %v176, %v193
  %v210 = vmax.bf16 %v177, %v194
  %v211 = vmax.bf16 %v178, %v195
  %v212 = vmax.bf16 %v179, %v196
  %v213 = vmax.bf16 %v180, %v197
  %v214 = vmax.bf16 %v181, %v198
  %v215 = vmax.bf16 %v182, %v199
  %v216 = vmax.bf16 %v183, %v200
  %v217 = vmax.bf16 %v184, %v201
  %v218 = vmax.bf16 %v185, %v202
  %v219 = vmax.bf16 %v186, %v203
  %v220 = vmax.bf16 %v187, %v204
  %v221 = vmax.bf16 %v188, %v205
  %s222 = scalar_lea.vmem %s0, 448
  %v223 = vld [vmem:[%s222] sm:$0xf]
  %v224 = vld [vmem:[%s222 + $0x4] sm:$0xf]
  %v225 = vld [vmem:[%s222 + $0x8] sm:$0xf]
  %v226 = vld [vmem:[%s222 + $0xc] sm:$0xf]
  %v227 = vld [vmem:[%s222 + $0x10] sm:$0xf]
  %v228 = vld [vmem:[%s222 + $0x14] sm:$0xf]
  %v229 = vld [vmem:[%s222 + $0x18] sm:$0xf]
  %v230 = vld [vmem:[%s222 + $0x1c] sm:$0xf]
  %v231 = vld [vmem:[%s222 + $0x20] sm:$0xf]
  %v232 = vld [vmem:[%s222 + $0x24] sm:$0xf]
  %v233 = vld [vmem:[%s222 + $0x28] sm:$0xf]
  %v234 = vld [vmem:[%s222 + $0x2c] sm:$0xf]
  %v235 = vld [vmem:[%s222 + $0x30] sm:$0xf]
  %v236 = vld [vmem:[%s222 + $0x34] sm:$0xf]
  %v237 = vld [vmem:[%s222 + $0x38] sm:$0xf]
  %v238 = vld [vmem:[%s222 + $0x3c] sm:$0xf]
  %v239 = vmax.bf16 %v206, %v223
  %v240 = vmax.bf16 %v207, %v224
  %v241 = vmax.bf16 %v208, %v225
  %v242 = vmax.bf16 %v209, %v226
  %v243 = vmax.bf16 %v210, %v227
  %v244 = vmax.bf16 %v211, %v228
  %v245 = vmax.bf16 %v212, %v229
  %v246 = vmax.bf16 %v213, %v230
  %v247 = vmax.bf16 %v214, %v231
  %v248 = vmax.bf16 %v215, %v232
  %v249 = vmax.bf16 %v216, %v233
  %v250 = vmax.bf16 %v217, %v234
  %v251 = vmax.bf16 %v218, %v235
  %v252 = vmax.bf16 %v219, %v236
  %v253 = vmax.bf16 %v220, %v237
  %v254 = vmax.bf16 %v221, %v238
  %s255 = scalar_lea.vmem %s0, 512
  %v256 = vld [vmem:[%s255] sm:$0xf]
  %v257 = vld [vmem:[%s255 + $0x4] sm:$0xf]
  %v258 = vld [vmem:[%s255 + $0x8] sm:$0xf]
  %v259 = vld [vmem:[%s255 + $0xc] sm:$0xf]
  %v260 = vld [vmem:[%s255 + $0x10] sm:$0xf]
  %v261 = vld [vmem:[%s255 + $0x14] sm:$0xf]
  %v262 = vld [vmem:[%s255 + $0x18] sm:$0xf]
  %v263 = vld [vmem:[%s255 + $0x1c] sm:$0xf]
  %v264 = vld [vmem:[%s255 + $0x20] sm:$0xf]
  %v265 = vld [vmem:[%s255 + $0x24] sm:$0xf]
  %v266 = vld [vmem:[%s255 + $0x28] sm:$0xf]
  %v267 = vld [vmem:[%s255 + $0x2c] sm:$0xf]
  %v268 = vld [vmem:[%s255 + $0x30] sm:$0xf]
  %v269 = vld [vmem:[%s255 + $0x34] sm:$0xf]
  %v270 = vld [vmem:[%s255 + $0x38] sm:$0xf]
  %v271 = vld [vmem:[%s255 + $0x3c] sm:$0xf]
  %v272 = vmax.bf16 %v239, %v256
  %v273 = vmax.bf16 %v240, %v257
  %v274 = vmax.bf16 %v241, %v258
  %v275 = vmax.bf16 %v242, %v259
  %v276 = vmax.bf16 %v243, %v260
  %v277 = vmax.bf16 %v244, %v261
  %v278 = vmax.bf16 %v245, %v262
  %v279 = vmax.bf16 %v246, %v263
  %v280 = vmax.bf16 %v247, %v264
  %v281 = vmax.bf16 %v248, %v265
  %v282 = vmax.bf16 %v249, %v266
  %v283 = vmax.bf16 %v250, %v267
  %v284 = vmax.bf16 %v251, %v268
  %v285 = vmax.bf16 %v252, %v269
  %v286 = vmax.bf16 %v253, %v270
  %v287 = vmax.bf16 %v254, %v271
  %288 = vst [vmem:[%s1] sm:$0xf] %v272
  %289 = vst [vmem:[%s1 + $0x4] sm:$0xf] %v273
  %290 = vst [vmem:[%s1 + $0x8] sm:$0xf] %v274
  %291 = vst [vmem:[%s1 + $0xc] sm:$0xf] %v275
  %292 = vst [vmem:[%s1 + $0x10] sm:$0xf] %v276
  %293 = vst [vmem:[%s1 + $0x14] sm:$0xf] %v277
  %294 = vst [vmem:[%s1 + $0x18] sm:$0xf] %v278
  %295 = vst [vmem:[%s1 + $0x1c] sm:$0xf] %v279
  %296 = vst [vmem:[%s1 + $0x20] sm:$0xf] %v280
  %297 = vst [vmem:[%s1 + $0x24] sm:$0xf] %v281
  %298 = vst [vmem:[%s1 + $0x28] sm:$0xf] %v282
  %299 = vst [vmem:[%s1 + $0x2c] sm:$0xf] %v283
  %300 = vst [vmem:[%s1 + $0x30] sm:$0xf] %v284
  %301 = vst [vmem:[%s1 + $0x34] sm:$0xf] %v285
  %302 = vst [vmem:[%s1 + $0x38] sm:$0xf] %v286
  %303 = vst [vmem:[%s1 + $0x3c] sm:$0xf] %v287
  // Predicated region
  $region6: #{resnet_forward.11} parent=0 // pred_check
    _
  $region7: #{resnet_forward.11} parent=0 // pred_check_branch
    %305 = sbr.rel (0) target = $region9
  $region8: #{resnet_forward.11} parent=0 // pred_region
    _
  $region9: #{resnet_forward.11} parent=0 // pred_fallthru
    _
  // Predicated region
  $region10: #{resnet_forward.11} parent=0 // pred_check
    _
  $region11: #{resnet_forward.11} parent=0 // pred_check_branch
    %307 = sbr.rel (0) target = $region13
  $region12: #{resnet_forward.11} parent=0 // pred_region
    _
  $region13: #{resnet_forward.11} parent=0 // pred_fallthru
    _

// kernel: resnet_forward.12
$region0: #{resnet_forward.12}
  #allocation0 [shape = 'u32[]', space=smem, size = 0x4, offset = 0x4, fixed_abs, tag = 'smem constant byte address 0x4 - core index']
  #allocation1 [shape = 'u32[144,128]{1,0:T(1,128)}', space=vmem, size = 0x12000, scoped, tag = 'internal scratch']
  %s0 = inlined_call_operand.vmem [shape: bf16[128,144], index: 0, kind: input, shape index: {}]
  %s1 = inlined_call_operand.vmem [shape: bf16[144,128], index: 1, kind: input, shape index: {}]
  %s2 = inlined_call_operand.vmem [shape: f32[1,128], index: 2, kind: input, shape index: {}]
  %s3 = inlined_call_operand.vmem [shape: bf16[128,128], index: 3, kind: output, shape index: {}]
  %s4 = sld [smem:[#allocation0]]
  $region22: #{resnet_forward.12} parent=0
    _
  %s6 = ssub.s32 1, %s4
  %s7 = scalar_select 0, %s6, %s4
  // Predicated region
  $region2: #{resnet_forward.12} parent=0 // pred_check
    _
  $region3: #{resnet_forward.12} parent=0 // pred_check_branch
    %9 = sbr.rel (0) target = $region5
  $region4: #{resnet_forward.12} parent=0 // pred_region
    _
  $region5: #{resnet_forward.12} parent=0 // pred_fallthru
    _
  // Predicated region
  $region6: #{resnet_forward.12} parent=0 // pred_check
    _
  $region7: #{resnet_forward.12} parent=0 // pred_check_branch
    %11 = sbr.rel (0) target = $region9
  $region8: #{resnet_forward.12} parent=0 // pred_region
    _
  $region9: #{resnet_forward.12} parent=0 // pred_fallthru
    _
  // Predicated region
  $region10: #{resnet_forward.12} parent=0 // pred_check
    _
  $region11: #{resnet_forward.12} parent=0 // pred_check_branch
    %13 = sbr.rel (0) target = $region13
  $region12: #{resnet_forward.12} parent=0 // pred_region
    _
  $region13: #{resnet_forward.12} parent=0 // pred_fallthru
    _
  %v15 = vld [vmem:[%s0] sm:$0xff]
  %v16 = vld [vmem:[%s0 + $0x8] sm:$0xff]
  %v17 = vld [vmem:[%s0 + $0x10] sm:$0xff]
  %v18 = vld [vmem:[%s0 + $0x18] sm:$0xff]
  %v19 = vld [vmem:[%s0 + $0x20] sm:$0xff]
  %v20 = vld [vmem:[%s0 + $0x28] sm:$0xff]
  %v21 = vld [vmem:[%s0 + $0x30] sm:$0xff]
  %v22 = vld [vmem:[%s0 + $0x38] sm:$0xff]
  %v23 = vld [vmem:[%s0 + $0x40] sm:$0xff]
  %v24 = vld [vmem:[%s0 + $0x48] sm:$0xff]
  %v25 = vld [vmem:[%s0 + $0x50] sm:$0xff]
  %v26 = vld [vmem:[%s0 + $0x58] sm:$0xff]
  %v27 = vld [vmem:[%s0 + $0x60] sm:$0xff]
  %v28 = vld [vmem:[%s0 + $0x68] sm:$0xff]
  %v29 = vld [vmem:[%s0 + $0x70] sm:$0xff]
  %v30 = vld [vmem:[%s0 + $0x78] sm:$0xff]
  %v31 = vld [vmem:[%s1] sm:$0xf]
  %v32 = vld [vmem:[%s1 + $0x4] sm:$0xf]
  %v33 = vld [vmem:[%s1 + $0x8] sm:$0xf]
  %v34 = vld [vmem:[%s1 + $0xc] sm:$0xf]
  %v35 = vld [vmem:[%s1 + $0x10] sm:$0xf]
  %v36 = vld [vmem:[%s1 + $0x14] sm:$0xf]
  %v37 = vld [vmem:[%s1 + $0x18] sm:$0xf]
  %v38 = vld [vmem:[%s1 + $0x1c] sm:$0xf]
  %v39 = vld [vmem:[%s1 + $0x20] sm:$0xf]
  %v40 = vld [vmem:[%s1 + $0x24] sm:$0xf]
  %v41 = vld [vmem:[%s1 + $0x28] sm:$0xf]
  %v42 = vld [vmem:[%s1 + $0x2c] sm:$0xf]
  %v43 = vld [vmem:[%s1 + $0x30] sm:$0xf]
  %v44 = vld [vmem:[%s1 + $0x34] sm:$0xf]
  %v45 = vld [vmem:[%s1 + $0x38] sm:$0xf]
  %v46 = vld [vmem:[%s1 + $0x3c] sm:$0xf]
  %v47 = vld [vmem:[%s1 + $0x40] sm:$0xf]
  %v48 = vld [vmem:[%s1 + $0x44] sm:$0xf]
  %v49 = vld [vmem:[%s2] sm:$0x1]
  %v51 = vlaneseq
  %v52 = vshrl.u32 %v51, 7
  %v53 = vsub.s32 0, %v52
  %v54 = vrot.slane %v49, %v53
  %v72 = vunpack.c.l.b16 %v15
  %v73 = vunpack.c.h.b16 %v15
  %v74 = vunpack.c.l.b16 %v16
  %v75 = vunpack.c.h.b16 %v16
  %v76 = vunpack.c.l.b16 %v17
  %v77 = vunpack.c.h.b16 %v17
  %v78 = vunpack.c.l.b16 %v18
  %v79 = vunpack.c.h.b16 %v18
  %v80 = vunpack.c.l.b16 %v19
  %v81 = vunpack.c.h.b16 %v19
  %v82 = vunpack.c.l.b16 %v20
  %v83 = vunpack.c.h.b16 %v20
  %v84 = vunpack.c.l.b16 %v21
  %v85 = vunpack.c.h.b16 %v21
  %v86 = vunpack.c.l.b16 %v22
  %v87 = vunpack.c.h.b16 %v22
  %v88 = vunpack.c.l.b16 %v23
  %v89 = vunpack.c.h.b16 %v23
  %v90 = vunpack.c.l.b16 %v24
  %v91 = vunpack.c.h.b16 %v24
  %v92 = vunpack.c.l.b16 %v25
  %v93 = vunpack.c.h.b16 %v25
  %v94 = vunpack.c.l.b16 %v26
  %v95 = vunpack.c.h.b16 %v26
  %v96 = vunpack.c.l.b16 %v27
  %v97 = vunpack.c.h.b16 %v27
  %v98 = vunpack.c.l.b16 %v28
  %v99 = vunpack.c.h.b16 %v28
  %v100 = vunpack.c.l.b16 %v29
  %v101 = vunpack.c.h.b16 %v29
  %v102 = vunpack.c.l.b16 %v30
  %v103 = vunpack.c.h.b16 %v30
  %v104 = vpack.c.b16 %v74, %v72
  %v105 = vpack.c.b16 %v75, %v73
  %v106 = vpack.c.b16 %v78, %v76
  %v107 = vpack.c.b16 %v79, %v77
  %v108 = vpack.c.b16 %v82, %v80
  %v109 = vpack.c.b16 %v83, %v81
  %v110 = vpack.c.b16 %v86, %v84
  %v111 = vpack.c.b16 %v87, %v85
  %v112 = vpack.c.b16 %v90, %v88
  %v113 = vpack.c.b16 %v91, %v89
  %v114 = vpack.c.b16 %v94, %v92
  %v115 = vpack.c.b16 %v95, %v93
  %v116 = vpack.c.b16 %v98, %v96
  %v117 = vpack.c.b16 %v99, %v97
  %v118 = vpack.c.b16 %v102, %v100
  %v119 = vpack.c.b16 %v103, %v101
  %v146 = vunpack.c.l.b16 %v31
  %v147 = vunpack.c.l.b16 %v32
  %v148 = vunpack.c.l.b16 %v33
  %v149 = vunpack.c.l.b16 %v34
  %v150 = vunpack.c.l.b16 %v35
  %v151 = vunpack.c.l.b16 %v36
  %v152 = vunpack.c.l.b16 %v37
  %v153 = vunpack.c.l.b16 %v38
  %v154 = vunpack.c.l.b16 %v39
  %v155 = vunpack.c.l.b16 %v40
  %v156 = vunpack.c.l.b16 %v41
  %v157 = vunpack.c.l.b16 %v42
  %v158 = vunpack.c.l.b16 %v43
  %v159 = vunpack.c.l.b16 %v44
  %v160 = vunpack.c.l.b16 %v45
  %v161 = vunpack.c.l.b16 %v46
  %v162 = vunpack.c.l.b16 %v47
  %v163 = vunpack.c.l.b16 %v48
  %v164 = vpack.c.b16 %v147, %v146
  %v165 = vpack.c.b16 %v149, %v148
  %v166 = vpack.c.b16 %v151, %v150
  %v167 = vpack.c.b16 %v153, %v152
  %v168 = vpack.c.b16 %v155, %v154
  %v169 = vpack.c.b16 %v157, %v156
  %v170 = vpack.c.b16 %v159, %v158
  %v171 = vpack.c.b16 %v161, %v160
  %v172 = vpack.c.b16 %v163, %v162
  %vm182 = vcmask 130048
  %v184 = vsel %vm182, %v105, 0
  %v187 = vsel %vm182, %v107, 0
  %v190 = vsel %vm182, %v109, 0
  %v193 = vsel %vm182, %v111, 0
  %v196 = vsel %vm182, %v113, 0
  %v199 = vsel %vm182, %v115, 0
  %v202 = vsel %vm182, %v117, 0
  %v205 = vsel %vm182, %v119, 0
  %207 = vmatprep.subr.bf16.mxu0 0
  %208 = vmatpush1.bf16.msra.mxu0 %v164
  %209 = vmatprep.subr.bf16.mxu0 0
  %210 = vmatpush1.bf16.msra.mxu0 %v165
  %211 = vmatprep.subr.bf16.mxu0 0
  %212 = vmatpush1.bf16.msra.mxu0 %v166
  %213 = vmatprep.subr.bf16.mxu0 0
  %214 = vmatpush1.bf16.msra.mxu0 %v167
  %215 = vmatprep.subr.bf16.mxu0 0
  %216 = vmatpush1.bf16.msra.mxu0 %v168
  %217 = vmatprep.subr.bf16.mxu0 0
  %218 = vmatpush1.bf16.msra.mxu0 %v169
  %219 = vmatprep.subr.bf16.mxu0 0
  %220 = vmatpush1.bf16.msra.mxu0 %v170
  %221 = vmatprep.subr.bf16.mxu0 0
  %222 = vmatpush1.bf16.msra.mxu0 %v171
  %223 = vmatprep.subr.bf16.mxu0 0
  %224 = vmatpush1.bf16.msra.mxu0 %v172
  %225 = vmatprep.subr.bf16.mxu0 0
  %226 = vmatpush1.bf16.msra.mxu0 0
  %227 = vmatprep.subr.bf16.mxu0 0
  %228 = vmatpush1.bf16.msra.mxu0 0
  %229 = vmatprep.subr.bf16.mxu0 0
  %230 = vmatpush1.bf16.msra.mxu0 0
  %231 = vmatprep.subr.bf16.mxu0 0
  %232 = vmatpush1.bf16.msra.mxu0 0
  %233 = vmatprep.subr.bf16.mxu0 0
  %234 = vmatpush1.bf16.msra.mxu0 0
  %235 = vmatprep.subr.bf16.mxu0 0
  %236 = vmatpush1.bf16.msra.mxu0 0
  %237 = vmatprep.subr.bf16.mxu0 0
  %238 = vmatpush1.bf16.msra.mxu0 0
  %239 = vmatprep.mubr.bf16.mxu0 %v184
  %240 = vmatmul.mubr.bf16.gmra.mrb[0].mxu0 %v104
  %v241 = vpop.f32.mrb[0].mxu0
  %v242 = vadd.f32 %v54, %v241
  %v243 = vpop.f32.mrb[0].mxu0
  %v244 = vpop.f32.mrb[0].mxu0
  %v245 = vadd.f32 %v54, %v244
  %v246 = vpop.f32.mrb[0].mxu0
  %247 = vmatprep.mubr.bf16.mxu0 %v187
  %248 = vmatmul.mubr.bf16.gmra.mrb[0].mxu0 %v106
  %v249 = vpop.f32.mrb[0].mxu0
  %v250 = vadd.f32 %v54, %v249
  %v251 = vpop.f32.mrb[0].mxu0
  %v252 = vpop.f32.mrb[0].mxu0
  %v253 = vadd.f32 %v54, %v252
  %v254 = vpop.f32.mrb[0].mxu0
  %255 = vmatprep.mubr.bf16.mxu0 %v190
  %256 = vmatmul.mubr.bf16.gmra.mrb[0].mxu0 %v108
  %v257 = vpop.f32.mrb[0].mxu0
  %v258 = vadd.f32 %v54, %v257
  %v259 = vpop.f32.mrb[0].mxu0
  %v260 = vpop.f32.mrb[0].mxu0
  %v261 = vadd.f32 %v54, %v260
  %v262 = vpop.f32.mrb[0].mxu0
  %263 = vmatprep.mubr.bf16.mxu0 %v193
  %264 = vmatmul.mubr.bf16.gmra.mrb[0].mxu0 %v110
  %v265 = vpop.f32.mrb[0].mxu0
  %v266 = vadd.f32 %v54, %v265
  %v267 = vpop.f32.mrb[0].mxu0
  %v268 = vpop.f32.mrb[0].mxu0
  %v269 = vadd.f32 %v54, %v268
  %v270 = vpop.f32.mrb[0].mxu0
  %271 = vmatprep.mubr.bf16.mxu0 %v196
  %272 = vmatmul.mubr.bf16.gmra.mrb[0].mxu0 %v112
  %v273 = vpop.f32.mrb[0].mxu0
  %v274 = vadd.f32 %v54, %v273
  %v275 = vpop.f32.mrb[0].mxu0
  %v276 = vpop.f32.mrb[0].mxu0
  %v277 = vadd.f32 %v54, %v276
  %v278 = vpop.f32.mrb[0].mxu0
  %279 = vmatprep.mubr.bf16.mxu0 %v199
  %280 = vmatmul.mubr.bf16.gmra.mrb[0].mxu0 %v114
  %v281 = vpop.f32.mrb[0].mxu0
  %v282 = vadd.f32 %v54, %v281
  %v283 = vpop.f32.mrb[0].mxu0
  %v284 = vpop.f32.mrb[0].mxu0
  %v285 = vadd.f32 %v54, %v284
  %v286 = vpop.f32.mrb[0].mxu0
  %287 = vmatprep.mubr.bf16.mxu0 %v202
  %288 = vmatmul.mubr.bf16.gmra.mrb[0].mxu0 %v116
  %v289 = vpop.f32.mrb[0].mxu0
  %v290 = vadd.f32 %v54, %v289
  %v291 = vpop.f32.mrb[0].mxu0
  %v292 = vpop.f32.mrb[0].mxu0
  %v293 = vadd.f32 %v54, %v292
  %v294 = vpop.f32.mrb[0].mxu0
  %295 = vmatprep.mubr.bf16.mxu0 %v205
  %296 = vmatmul.mubr.bf16.gmra.mrb[0].mxu0 %v118
  %v297 = vpop.f32.mrb[0].mxu0
  %v298 = vadd.f32 %v54, %v297
  %v299 = vpop.f32.mrb[0].mxu0
  %v300 = vpop.f32.mrb[0].mxu0
  %v301 = vadd.f32 %v54, %v300
  %v302 = vpop.f32.mrb[0].mxu0
  %303 = vdwg.mxu0
  %v304 = vmax.f32 %v242, 0.0
  %v305 = vmax.f32 %v245, 0.0
  %v306 = vmax.f32 %v250, 0.0
  %v307 = vmax.f32 %v253, 0.0
  %v308 = vmax.f32 %v258, 0.0
  %v309 = vmax.f32 %v261, 0.0
  %v310 = vmax.f32 %v266, 0.0
  %v311 = vmax.f32 %v269, 0.0
  %v312 = vmax.f32 %v274, 0.0
  %v313 = vmax.f32 %v277, 0.0
  %v314 = vmax.f32 %v282, 0.0
  %v315 = vmax.f32 %v285, 0.0
  %v316 = vmax.f32 %v290, 0.0
  %v317 = vmax.f32 %v293, 0.0
  %v318 = vmax.f32 %v298, 0.0
  %v319 = vmax.f32 %v301, 0.0
  %v320 = vpack.c.bf16 %v305, %v304
  %v321 = vpack.c.bf16 %v307, %v306
  %v322 = vpack.c.bf16 %v309, %v308
  %v323 = vpack.c.bf16 %v311, %v310
  %v324 = vpack.c.bf16 %v313, %v312
  %v325 = vpack.c.bf16 %v315, %v314
  %v326 = vpack.c.bf16 %v317, %v316
  %v327 = vpack.c.bf16 %v319, %v318
  %v336 = vunpack.c.l.b16 %v320
  %v337 = vunpack.c.h.b16 %v320
  %v338 = vunpack.c.l.b16 %v321
  %v339 = vunpack.c.h.b16 %v321
  %v340 = vunpack.c.l.b16 %v322
  %v341 = vunpack.c.h.b16 %v322
  %v342 = vunpack.c.l.b16 %v323
  %v343 = vunpack.c.h.b16 %v323
  %v344 = vunpack.c.l.b16 %v324
  %v345 = vunpack.c.h.b16 %v324
  %v346 = vunpack.c.l.b16 %v325
  %v347 = vunpack.c.h.b16 %v325
  %v348 = vunpack.c.l.b16 %v326
  %v349 = vunpack.c.h.b16 %v326
  %v350 = vunpack.c.l.b16 %v327
  %v351 = vunpack.c.h.b16 %v327
  %v352 = vpack.c.b16 %v336, %v336
  %v353 = vpack.c.b16 %v337, %v337
  %v354 = vpack.c.b16 %v338, %v338
  %v355 = vpack.c.b16 %v339, %v339
  %v356 = vpack.c.b16 %v340, %v340
  %v357 = vpack.c.b16 %v341, %v341
  %v358 = vpack.c.b16 %v342, %v342
  %v359 = vpack.c.b16 %v343, %v343
  %v360 = vpack.c.b16 %v344, %v344
  %v361 = vpack.c.b16 %v345, %v345
  %v362 = vpack.c.b16 %v346, %v346
  %v363 = vpack.c.b16 %v347, %v347
  %v364 = vpack.c.b16 %v348, %v348
  %v365 = vpack.c.b16 %v349, %v349
  %v366 = vpack.c.b16 %v350, %v350
  %v367 = vpack.c.b16 %v351, %v351
  %384 = vst [vmem:[%s3] sm:$0xf] %v352
  %385 = vst [vmem:[%s3 + $0x4] sm:$0xf] %v353
  %386 = vst [vmem:[%s3 + $0x8] sm:$0xf] %v354
  %387 = vst [vmem:[%s3 + $0xc] sm:$0xf] %v355
  %388 = vst [vmem:[%s3 + $0x10] sm:$0xf] %v356
  %389 = vst [vmem:[%s3 + $0x14] sm:$0xf] %v357
  %390 = vst [vmem:[%s3 + $0x18] sm:$0xf] %v358
  %391 = vst [vmem:[%s3 + $0x1c] sm:$0xf] %v359
  %392 = vst [vmem:[%s3 + $0x20] sm:$0xf] %v360
  %393 = vst [vmem:[%s3 + $0x24] sm:$0xf] %v361
  %394 = vst [vmem:[%s3 + $0x28] sm:$0xf] %v362
  %395 = vst [vmem:[%s3 + $0x2c] sm:$0xf] %v363
  %396 = vst [vmem:[%s3 + $0x30] sm:$0xf] %v364
  %397 = vst [vmem:[%s3 + $0x34] sm:$0xf] %v365
  %398 = vst [vmem:[%s3 + $0x38] sm:$0xf] %v366
  %399 = vst [vmem:[%s3 + $0x3c] sm:$0xf] %v367
  // Predicated region
  $region14: #{resnet_forward.12} parent=0 // pred_check
    _
  $region15: #{resnet_forward.12} parent=0 // pred_check_branch
    %401 = sbr.rel (0) target = $region17
  $region16: #{resnet_forward.12} parent=0 // pred_region
    _
  $region17: #{resnet_forward.12} parent=0 // pred_fallthru
    _
  // Predicated region
  $region18: #{resnet_forward.12} parent=0 // pred_check
    _
  $region19: #{resnet_forward.12} parent=0 // pred_check_branch
    %403 = sbr.rel (0) target = $region21
  $region20: #{resnet_forward.12} parent=0 // pred_region
    _
  $region21: #{resnet_forward.12} parent=0 // pred_fallthru
    _

// kernel: resnet_forward.13
$region0: #{resnet_forward.13}
  #allocation0 [shape = 'u32[]', space=smem, size = 0x4, offset = 0x4, fixed_abs, tag = 'smem constant byte address 0x4 - core index']
  #allocation1 [shape = 'u32[144,128]{1,0:T(1,128)}', space=vmem, size = 0x12000, scoped, tag = 'internal scratch']
  %s0 = inlined_call_operand.vmem [shape: bf16[128,144], index: 0, kind: input, shape index: {}]
  %s1 = inlined_call_operand.vmem [shape: bf16[144,128], index: 1, kind: input, shape index: {}]
  %s2 = inlined_call_operand.vmem [shape: f32[1,128], index: 2, kind: input, shape index: {}]
  %s3 = inlined_call_operand.vmem [shape: bf16[128,128], index: 3, kind: input, shape index: {}]
  %s4 = inlined_call_operand.vmem [shape: bf16[128,128], index: 4, kind: output, shape index: {}]
  %s5 = sld [smem:[#allocation0]]
  $region26: #{resnet_forward.13} parent=0
    _
  %s7 = ssub.s32 1, %s5
  %s8 = scalar_select 0, %s7, %s5
  // Predicated region
  $region2: #{resnet_forward.13} parent=0 // pred_check
    _
  $region3: #{resnet_forward.13} parent=0 // pred_check_branch
    %10 = sbr.rel (0) target = $region5
  $region4: #{resnet_forward.13} parent=0 // pred_region
    _
  $region5: #{resnet_forward.13} parent=0 // pred_fallthru
    _
  // Predicated region
  $region6: #{resnet_forward.13} parent=0 // pred_check
    _
  $region7: #{resnet_forward.13} parent=0 // pred_check_branch
    %12 = sbr.rel (0) target = $region9
  $region8: #{resnet_forward.13} parent=0 // pred_region
    _
  $region9: #{resnet_forward.13} parent=0 // pred_fallthru
    _
  // Predicated region
  $region10: #{resnet_forward.13} parent=0 // pred_check
    _
  $region11: #{resnet_forward.13} parent=0 // pred_check_branch
    %14 = sbr.rel (0) target = $region13
  $region12: #{resnet_forward.13} parent=0 // pred_region
    _
  $region13: #{resnet_forward.13} parent=0 // pred_fallthru
    _
  // Predicated region
  $region14: #{resnet_forward.13} parent=0 // pred_check
    _
  $region15: #{resnet_forward.13} parent=0 // pred_check_branch
    %16 = sbr.rel (0) target = $region17
  $region16: #{resnet_forward.13} parent=0 // pred_region
    _
  $region17: #{resnet_forward.13} parent=0 // pred_fallthru
    _
  %v18 = vld [vmem:[%s0] sm:$0xff]
  %v19 = vld [vmem:[%s0 + $0x8] sm:$0xff]
  %v20 = vld [vmem:[%s0 + $0x10] sm:$0xff]
  %v21 = vld [vmem:[%s0 + $0x18] sm:$0xff]
  %v22 = vld [vmem:[%s0 + $0x20] sm:$0xff]
  %v23 = vld [vmem:[%s0 + $0x28] sm:$0xff]
  %v24 = vld [vmem:[%s0 + $0x30] sm:$0xff]
  %v25 = vld [vmem:[%s0 + $0x38] sm:$0xff]
  %v26 = vld [vmem:[%s0 + $0x40] sm:$0xff]
  %v27 = vld [vmem:[%s0 + $0x48] sm:$0xff]
  %v28 = vld [vmem:[%s0 + $0x50] sm:$0xff]
  %v29 = vld [vmem:[%s0 + $0x58] sm:$0xff]
  %v30 = vld [vmem:[%s0 + $0x60] sm:$0xff]
  %v31 = vld [vmem:[%s0 + $0x68] sm:$0xff]
  %v32 = vld [vmem:[%s0 + $0x70] sm:$0xff]
  %v33 = vld [vmem:[%s0 + $0x78] sm:$0xff]
  %v34 = vld [vmem:[%s1] sm:$0xf]
  %v35 = vld [vmem:[%s1 + $0x4] sm:$0xf]
  %v36 = vld [vmem:[%s1 + $0x8] sm:$0xf]
  %v37 = vld [vmem:[%s1 + $0xc] sm:$0xf]
  %v38 = vld [vmem:[%s1 + $0x10] sm:$0xf]
  %v39 = vld [vmem:[%s1 + $0x14] sm:$0xf]
  %v40 = vld [vmem:[%s1 + $0x18] sm:$0xf]
  %v41 = vld [vmem:[%s1 + $0x1c] sm:$0xf]
  %v42 = vld [vmem:[%s1 + $0x20] sm:$0xf]
  %v43 = vld [vmem:[%s1 + $0x24] sm:$0xf]
  %v44 = vld [vmem:[%s1 + $0x28] sm:$0xf]
  %v45 = vld [vmem:[%s1 + $0x2c] sm:$0xf]
  %v46 = vld [vmem:[%s1 + $0x30] sm:$0xf]
  %v47 = vld [vmem:[%s1 + $0x34] sm:$0xf]
  %v48 = vld [vmem:[%s1 + $0x38] sm:$0xf]
  %v49 = vld [vmem:[%s1 + $0x3c] sm:$0xf]
  %v50 = vld [vmem:[%s1 + $0x40] sm:$0xf]
  %v51 = vld [vmem:[%s1 + $0x44] sm:$0xf]
  %v52 = vld [vmem:[%s2] sm:$0x1]
  %v54 = vlaneseq
  %v55 = vshrl.u32 %v54, 7
  %v56 = vsub.s32 0, %v55
  %v57 = vrot.slane %v52, %v56
  %v75 = vunpack.c.l.b16 %v18
  %v76 = vunpack.c.h.b16 %v18
  %v77 = vunpack.c.l.b16 %v19
  %v78 = vunpack.c.h.b16 %v19
  %v79 = vunpack.c.l.b16 %v20
  %v80 = vunpack.c.h.b16 %v20
  %v81 = vunpack.c.l.b16 %v21
  %v82 = vunpack.c.h.b16 %v21
  %v83 = vunpack.c.l.b16 %v22
  %v84 = vunpack.c.h.b16 %v22
  %v85 = vunpack.c.l.b16 %v23
  %v86 = vunpack.c.h.b16 %v23
  %v87 = vunpack.c.l.b16 %v24
  %v88 = vunpack.c.h.b16 %v24
  %v89 = vunpack.c.l.b16 %v25
  %v90 = vunpack.c.h.b16 %v25
  %v91 = vunpack.c.l.b16 %v26
  %v92 = vunpack.c.h.b16 %v26
  %v93 = vunpack.c.l.b16 %v27
  %v94 = vunpack.c.h.b16 %v27
  %v95 = vunpack.c.l.b16 %v28
  %v96 = vunpack.c.h.b16 %v28
  %v97 = vunpack.c.l.b16 %v29
  %v98 = vunpack.c.h.b16 %v29
  %v99 = vunpack.c.l.b16 %v30
  %v100 = vunpack.c.h.b16 %v30
  %v101 = vunpack.c.l.b16 %v31
  %v102 = vunpack.c.h.b16 %v31
  %v103 = vunpack.c.l.b16 %v32
  %v104 = vunpack.c.h.b16 %v32
  %v105 = vunpack.c.l.b16 %v33
  %v106 = vunpack.c.h.b16 %v33
  %v107 = vpack.c.b16 %v77, %v75
  %v108 = vpack.c.b16 %v78, %v76
  %v109 = vpack.c.b16 %v81, %v79
  %v110 = vpack.c.b16 %v82, %v80
  %v111 = vpack.c.b16 %v85, %v83
  %v112 = vpack.c.b16 %v86, %v84
  %v113 = vpack.c.b16 %v89, %v87
  %v114 = vpack.c.b16 %v90, %v88
  %v115 = vpack.c.b16 %v93, %v91
  %v116 = vpack.c.b16 %v94, %v92
  %v117 = vpack.c.b16 %v97, %v95
  %v118 = vpack.c.b16 %v98, %v96
  %v119 = vpack.c.b16 %v101, %v99
  %v120 = vpack.c.b16 %v102, %v100
  %v121 = vpack.c.b16 %v105, %v103
  %v122 = vpack.c.b16 %v106, %v104
  %v149 = vunpack.c.l.b16 %v34
  %v150 = vunpack.c.l.b16 %v35
  %v151 = vunpack.c.l.b16 %v36
  %v152 = vunpack.c.l.b16 %v37
  %v153 = vunpack.c.l.b16 %v38
  %v154 = vunpack.c.l.b16 %v39
  %v155 = vunpack.c.l.b16 %v40
  %v156 = vunpack.c.l.b16 %v41
  %v157 = vunpack.c.l.b16 %v42
  %v158 = vunpack.c.l.b16 %v43
  %v159 = vunpack.c.l.b16 %v44
  %v160 = vunpack.c.l.b16 %v45
  %v161 = vunpack.c.l.b16 %v46
  %v162 = vunpack.c.l.b16 %v47
  %v163 = vunpack.c.l.b16 %v48
  %v164 = vunpack.c.l.b16 %v49
  %v165 = vunpack.c.l.b16 %v50
  %v166 = vunpack.c.l.b16 %v51
  %v167 = vpack.c.b16 %v150, %v149
  %v168 = vpack.c.b16 %v152, %v151
  %v169 = vpack.c.b16 %v154, %v153
  %v170 = vpack.c.b16 %v156, %v155
  %v171 = vpack.c.b16 %v158, %v157
  %v172 = vpack.c.b16 %v160, %v159
  %v173 = vpack.c.b16 %v162, %v161
  %v174 = vpack.c.b16 %v164, %v163
  %v175 = vpack.c.b16 %v166, %v165
  %vm185 = vcmask 130048
  %v187 = vsel %vm185, %v108, 0
  %v190 = vsel %vm185, %v110, 0
  %v193 = vsel %vm185, %v112, 0
  %v196 = vsel %vm185, %v114, 0
  %v199 = vsel %vm185, %v116, 0
  %v202 = vsel %vm185, %v118, 0
  %v205 = vsel %vm185, %v120, 0
  %v208 = vsel %vm185, %v122, 0
  %210 = vmatprep.subr.bf16.mxu0 0
  %211 = vmatpush1.bf16.msra.mxu0 %v167
  %212 = vmatprep.subr.bf16.mxu0 0
  %213 = vmatpush1.bf16.msra.mxu0 %v168
  %214 = vmatprep.subr.bf16.mxu0 0
  %215 = vmatpush1.bf16.msra.mxu0 %v169
  %216 = vmatprep.subr.bf16.mxu0 0
  %217 = vmatpush1.bf16.msra.mxu0 %v170
  %218 = vmatprep.subr.bf16.mxu0 0
  %219 = vmatpush1.bf16.msra.mxu0 %v171
  %220 = vmatprep.subr.bf16.mxu0 0
  %221 = vmatpush1.bf16.msra.mxu0 %v172
  %222 = vmatprep.subr.bf16.mxu0 0
  %223 = vmatpush1.bf16.msra.mxu0 %v173
  %224 = vmatprep.subr.bf16.mxu0 0
  %225 = vmatpush1.bf16.msra.mxu0 %v174
  %226 = vmatprep.subr.bf16.mxu0 0
  %227 = vmatpush1.bf16.msra.mxu0 %v175
  %228 = vmatprep.subr.bf16.mxu0 0
  %229 = vmatpush1.bf16.msra.mxu0 0
  %230 = vmatprep.subr.bf16.mxu0 0
  %231 = vmatpush1.bf16.msra.mxu0 0
  %232 = vmatprep.subr.bf16.mxu0 0
  %233 = vmatpush1.bf16.msra.mxu0 0
  %234 = vmatprep.subr.bf16.mxu0 0
  %235 = vmatpush1.bf16.msra.mxu0 0
  %236 = vmatprep.subr.bf16.mxu0 0
  %237 = vmatpush1.bf16.msra.mxu0 0
  %238 = vmatprep.subr.bf16.mxu0 0
  %239 = vmatpush1.bf16.msra.mxu0 0
  %240 = vmatprep.subr.bf16.mxu0 0
  %241 = vmatpush1.bf16.msra.mxu0 0
  %242 = vmatprep.mubr.bf16.mxu0 %v187
  %243 = vmatmul.mubr.bf16.gmra.mrb[0].mxu0 %v107
  %v244 = vpop.f32.mrb[0].mxu0
  %v245 = vadd.f32 %v57, %v244
  %v246 = vpop.f32.mrb[0].mxu0
  %v247 = vpop.f32.mrb[0].mxu0
  %v248 = vadd.f32 %v57, %v247
  %v249 = vpop.f32.mrb[0].mxu0
  %250 = vmatprep.mubr.bf16.mxu0 %v190
  %251 = vmatmul.mubr.bf16.gmra.mrb[0].mxu0 %v109
  %v252 = vpop.f32.mrb[0].mxu0
  %v253 = vadd.f32 %v57, %v252
  %v254 = vpop.f32.mrb[0].mxu0
  %v255 = vpop.f32.mrb[0].mxu0
  %v256 = vadd.f32 %v57, %v255
  %v257 = vpop.f32.mrb[0].mxu0
  %258 = vmatprep.mubr.bf16.mxu0 %v193
  %259 = vmatmul.mubr.bf16.gmra.mrb[0].mxu0 %v111
  %v260 = vpop.f32.mrb[0].mxu0
  %v261 = vadd.f32 %v57, %v260
  %v262 = vpop.f32.mrb[0].mxu0
  %v263 = vpop.f32.mrb[0].mxu0
  %v264 = vadd.f32 %v57, %v263
  %v265 = vpop.f32.mrb[0].mxu0
  %266 = vmatprep.mubr.bf16.mxu0 %v196
  %267 = vmatmul.mubr.bf16.gmra.mrb[0].mxu0 %v113
  %v268 = vpop.f32.mrb[0].mxu0
  %v269 = vadd.f32 %v57, %v268
  %v270 = vpop.f32.mrb[0].mxu0
  %v271 = vpop.f32.mrb[0].mxu0
  %v272 = vadd.f32 %v57, %v271
  %v273 = vpop.f32.mrb[0].mxu0
  %274 = vmatprep.mubr.bf16.mxu0 %v199
  %275 = vmatmul.mubr.bf16.gmra.mrb[0].mxu0 %v115
  %v276 = vpop.f32.mrb[0].mxu0
  %v277 = vadd.f32 %v57, %v276
  %v278 = vpop.f32.mrb[0].mxu0
  %v279 = vpop.f32.mrb[0].mxu0
  %v280 = vadd.f32 %v57, %v279
  %v281 = vpop.f32.mrb[0].mxu0
  %282 = vmatprep.mubr.bf16.mxu0 %v202
  %283 = vmatmul.mubr.bf16.gmra.mrb[0].mxu0 %v117
  %v284 = vpop.f32.mrb[0].mxu0
  %v285 = vadd.f32 %v57, %v284
  %v286 = vpop.f32.mrb[0].mxu0
  %v287 = vpop.f32.mrb[0].mxu0
  %v288 = vadd.f32 %v57, %v287
  %v289 = vpop.f32.mrb[0].mxu0
  %290 = vmatprep.mubr.bf16.mxu0 %v205
  %291 = vmatmul.mubr.bf16.gmra.mrb[0].mxu0 %v119
  %v292 = vpop.f32.mrb[0].mxu0
  %v293 = vadd.f32 %v57, %v292
  %v294 = vpop.f32.mrb[0].mxu0
  %v295 = vpop.f32.mrb[0].mxu0
  %v296 = vadd.f32 %v57, %v295
  %v297 = vpop.f32.mrb[0].mxu0
  %298 = vmatprep.mubr.bf16.mxu0 %v208
  %299 = vmatmul.mubr.bf16.gmra.mrb[0].mxu0 %v121
  %v300 = vpop.f32.mrb[0].mxu0
  %v301 = vadd.f32 %v57, %v300
  %v302 = vpop.f32.mrb[0].mxu0
  %v303 = vpop.f32.mrb[0].mxu0
  %v304 = vadd.f32 %v57, %v303
  %v305 = vpop.f32.mrb[0].mxu0
  %306 = vdwg.mxu0
  %v307 = vld [vmem:[%s3] sm:$0xf]
  %v308 = vld [vmem:[%s3 + $0x4] sm:$0xf]
  %v309 = vld [vmem:[%s3 + $0x8] sm:$0xf]
  %v310 = vld [vmem:[%s3 + $0xc] sm:$0xf]
  %v311 = vld [vmem:[%s3 + $0x10] sm:$0xf]
  %v312 = vld [vmem:[%s3 + $0x14] sm:$0xf]
  %v313 = vld [vmem:[%s3 + $0x18] sm:$0xf]
  %v314 = vld [vmem:[%s3 + $0x1c] sm:$0xf]
  %v315 = vld [vmem:[%s3 + $0x20] sm:$0xf]
  %v316 = vld [vmem:[%s3 + $0x24] sm:$0xf]
  %v317 = vld [vmem:[%s3 + $0x28] sm:$0xf]
  %v318 = vld [vmem:[%s3 + $0x2c] sm:$0xf]
  %v319 = vld [vmem:[%s3 + $0x30] sm:$0xf]
  %v320 = vld [vmem:[%s3 + $0x34] sm:$0xf]
  %v321 = vld [vmem:[%s3 + $0x38] sm:$0xf]
  %v322 = vld [vmem:[%s3 + $0x3c] sm:$0xf]
  %v323 = vunpack.c.l.bf16 %v307
  %v324 = vunpack.c.l.bf16 %v308
  %v325 = vunpack.c.l.bf16 %v309
  %v326 = vunpack.c.l.bf16 %v310
  %v327 = vunpack.c.l.bf16 %v311
  %v328 = vunpack.c.l.bf16 %v312
  %v329 = vunpack.c.l.bf16 %v313
  %v330 = vunpack.c.l.bf16 %v314
  %v331 = vunpack.c.l.bf16 %v315
  %v332 = vunpack.c.l.bf16 %v316
  %v333 = vunpack.c.l.bf16 %v317
  %v334 = vunpack.c.l.bf16 %v318
  %v335 = vunpack.c.l.bf16 %v319
  %v336 = vunpack.c.l.bf16 %v320
  %v337 = vunpack.c.l.bf16 %v321
  %v338 = vunpack.c.l.bf16 %v322
  %v339 = vadd.f32 %v245, %v323
  %v340 = vadd.f32 %v248, %v324
  %v341 = vadd.f32 %v253, %v325
  %v342 = vadd.f32 %v256, %v326
  %v343 = vadd.f32 %v261, %v327
  %v344 = vadd.f32 %v264, %v328
  %v345 = vadd.f32 %v269, %v329
  %v346 = vadd.f32 %v272, %v330
  %v347 = vadd.f32 %v277, %v331
  %v348 = vadd.f32 %v280, %v332
  %v349 = vadd.f32 %v285, %v333
  %v350 = vadd.f32 %v288, %v334
  %v351 = vadd.f32 %v293, %v335
  %v352 = vadd.f32 %v296, %v336
  %v353 = vadd.f32 %v301, %v337
  %v354 = vadd.f32 %v304, %v338
  %v355 = vmax.f32 %v339, 0.0
  %v356 = vmax.f32 %v340, 0.0
  %v357 = vmax.f32 %v341, 0.0
  %v358 = vmax.f32 %v342, 0.0
  %v359 = vmax.f32 %v343, 0.0
  %v360 = vmax.f32 %v344, 0.0
  %v361 = vmax.f32 %v345, 0.0
  %v362 = vmax.f32 %v346, 0.0
  %v363 = vmax.f32 %v347, 0.0
  %v364 = vmax.f32 %v348, 0.0
  %v365 = vmax.f32 %v349, 0.0
  %v366 = vmax.f32 %v350, 0.0
  %v367 = vmax.f32 %v351, 0.0
  %v368 = vmax.f32 %v352, 0.0
  %v369 = vmax.f32 %v353, 0.0
  %v370 = vmax.f32 %v354, 0.0
  %v371 = vpack.c.bf16 %v356, %v355
  %v372 = vpack.c.bf16 %v358, %v357
  %v373 = vpack.c.bf16 %v360, %v359
  %v374 = vpack.c.bf16 %v362, %v361
  %v375 = vpack.c.bf16 %v364, %v363
  %v376 = vpack.c.bf16 %v366, %v365
  %v377 = vpack.c.bf16 %v368, %v367
  %v378 = vpack.c.bf16 %v370, %v369
  %v387 = vunpack.c.l.b16 %v371
  %v388 = vunpack.c.h.b16 %v371
  %v389 = vunpack.c.l.b16 %v372
  %v390 = vunpack.c.h.b16 %v372
  %v391 = vunpack.c.l.b16 %v373
  %v392 = vunpack.c.h.b16 %v373
  %v393 = vunpack.c.l.b16 %v374
  %v394 = vunpack.c.h.b16 %v374
  %v395 = vunpack.c.l.b16 %v375
  %v396 = vunpack.c.h.b16 %v375
  %v397 = vunpack.c.l.b16 %v376
  %v398 = vunpack.c.h.b16 %v376
  %v399 = vunpack.c.l.b16 %v377
  %v400 = vunpack.c.h.b16 %v377
  %v401 = vunpack.c.l.b16 %v378
  %v402 = vunpack.c.h.b16 %v378
  %v403 = vpack.c.b16 %v387, %v387
  %v404 = vpack.c.b16 %v388, %v388
  %v405 = vpack.c.b16 %v389, %v389
  %v406 = vpack.c.b16 %v390, %v390
  %v407 = vpack.c.b16 %v391, %v391
  %v408 = vpack.c.b16 %v392, %v392
  %v409 = vpack.c.b16 %v393, %v393
  %v410 = vpack.c.b16 %v394, %v394
  %v411 = vpack.c.b16 %v395, %v395
  %v412 = vpack.c.b16 %v396, %v396
  %v413 = vpack.c.b16 %v397, %v397
  %v414 = vpack.c.b16 %v398, %v398
  %v415 = vpack.c.b16 %v399, %v399
  %v416 = vpack.c.b16 %v400, %v400
  %v417 = vpack.c.b16 %v401, %v401
  %v418 = vpack.c.b16 %v402, %v402
  %435 = vst [vmem:[%s4] sm:$0xf] %v403
  %436 = vst [vmem:[%s4 + $0x4] sm:$0xf] %v404
  %437 = vst [vmem:[%s4 + $0x8] sm:$0xf] %v405
  %438 = vst [vmem:[%s4 + $0xc] sm:$0xf] %v406
  %439 = vst [vmem:[%s4 + $0x10] sm:$0xf] %v407
  %440 = vst [vmem:[%s4 + $0x14] sm:$0xf] %v408
  %441 = vst [vmem:[%s4 + $0x18] sm:$0xf] %v409
  %442 = vst [vmem:[%s4 + $0x1c] sm:$0xf] %v410
  %443 = vst [vmem:[%s4 + $0x20] sm:$0xf] %v411
  %444 = vst [vmem:[%s4 + $0x24] sm:$0xf] %v412
  %445 = vst [vmem:[%s4 + $0x28] sm:$0xf] %v413
  %446 = vst [vmem:[%s4 + $0x2c] sm:$0xf] %v414
  %447 = vst [vmem:[%s4 + $0x30] sm:$0xf] %v415
  %448 = vst [vmem:[%s4 + $0x34] sm:$0xf] %v416
  %449 = vst [vmem:[%s4 + $0x38] sm:$0xf] %v417
  %450 = vst [vmem:[%s4 + $0x3c] sm:$0xf] %v418
  // Predicated region
  $region18: #{resnet_forward.13} parent=0 // pred_check
    _
  $region19: #{resnet_forward.13} parent=0 // pred_check_branch
    %452 = sbr.rel (0) target = $region21
  $region20: #{resnet_forward.13} parent=0 // pred_region
    _
  $region21: #{resnet_forward.13} parent=0 // pred_fallthru
    _
  // Predicated region
  $region22: #{resnet_forward.13} parent=0 // pred_check
    _
  $region23: #{resnet_forward.13} parent=0 // pred_check_branch
    %454 = sbr.rel (0) target = $region25
  $region24: #{resnet_forward.13} parent=0 // pred_region
    _
  $region25: #{resnet_forward.13} parent=0 // pred_fallthru
    _

// kernel: resnet_forward.14
$region0: #{resnet_forward.14}
  #allocation0 [shape = 'u32[]', space=smem, size = 0x4, offset = 0x4, fixed_abs, tag = 'smem constant byte address 0x4 - core index']
  #allocation1 [shape = 'u32[144,128]{1,0:T(1,128)}', space=vmem, size = 0x12000, scoped, tag = 'internal scratch']
  %s0 = inlined_call_operand.vmem [shape: bf16[32,144], index: 0, kind: input, shape index: {}]
  %s1 = inlined_call_operand.vmem [shape: bf16[144,128], index: 1, kind: input, shape index: {}]
  %s2 = inlined_call_operand.vmem [shape: f32[1,128], index: 2, kind: input, shape index: {}]
  %s3 = inlined_call_operand.vmem [shape: bf16[32,128], index: 3, kind: output, shape index: {}]
  %s4 = sld [smem:[#allocation0]]
  $region22: #{resnet_forward.14} parent=0
    _
  %s6 = ssub.s32 1, %s4
  %s7 = scalar_select 0, %s6, %s4
  // Predicated region
  $region2: #{resnet_forward.14} parent=0 // pred_check
    _
  $region3: #{resnet_forward.14} parent=0 // pred_check_branch
    %9 = sbr.rel (0) target = $region5
  $region4: #{resnet_forward.14} parent=0 // pred_region
    _
  $region5: #{resnet_forward.14} parent=0 // pred_fallthru
    _
  // Predicated region
  $region6: #{resnet_forward.14} parent=0 // pred_check
    _
  $region7: #{resnet_forward.14} parent=0 // pred_check_branch
    %11 = sbr.rel (0) target = $region9
  $region8: #{resnet_forward.14} parent=0 // pred_region
    _
  $region9: #{resnet_forward.14} parent=0 // pred_fallthru
    _
  // Predicated region
  $region10: #{resnet_forward.14} parent=0 // pred_check
    _
  $region11: #{resnet_forward.14} parent=0 // pred_check_branch
    %13 = sbr.rel (0) target = $region13
  $region12: #{resnet_forward.14} parent=0 // pred_region
    _
  $region13: #{resnet_forward.14} parent=0 // pred_fallthru
    _
  %v15 = vld [vmem:[%s0] sm:$0xff]
  %v16 = vld [vmem:[%s0 + $0x8] sm:$0xff]
  %v17 = vld [vmem:[%s0 + $0x10] sm:$0xff]
  %v18 = vld [vmem:[%s0 + $0x18] sm:$0xff]
  %v19 = vld [vmem:[%s1] sm:$0xf]
  %v20 = vld [vmem:[%s1 + $0x4] sm:$0xf]
  %v21 = vld [vmem:[%s1 + $0x8] sm:$0xf]
  %v22 = vld [vmem:[%s1 + $0xc] sm:$0xf]
  %v23 = vld [vmem:[%s1 + $0x10] sm:$0xf]
  %v24 = vld [vmem:[%s1 + $0x14] sm:$0xf]
  %v25 = vld [vmem:[%s1 + $0x18] sm:$0xf]
  %v26 = vld [vmem:[%s1 + $0x1c] sm:$0xf]
  %v27 = vld [vmem:[%s1 + $0x20] sm:$0xf]
  %v28 = vld [vmem:[%s1 + $0x24] sm:$0xf]
  %v29 = vld [vmem:[%s1 + $0x28] sm:$0xf]
  %v30 = vld [vmem:[%s1 + $0x2c] sm:$0xf]
  %v31 = vld [vmem:[%s1 + $0x30] sm:$0xf]
  %v32 = vld [vmem:[%s1 + $0x34] sm:$0xf]
  %v33 = vld [vmem:[%s1 + $0x38] sm:$0xf]
  %v34 = vld [vmem:[%s1 + $0x3c] sm:$0xf]
  %v35 = vld [vmem:[%s1 + $0x40] sm:$0xf]
  %v36 = vld [vmem:[%s1 + $0x44] sm:$0xf]
  %v37 = vld [vmem:[%s2] sm:$0x1]
  %v39 = vlaneseq
  %v40 = vshrl.u32 %v39, 7
  %v41 = vsub.s32 0, %v40
  %v42 = vrot.slane %v37, %v41
  %v48 = vunpack.c.l.b16 %v15
  %v49 = vunpack.c.h.b16 %v15
  %v50 = vunpack.c.l.b16 %v16
  %v51 = vunpack.c.h.b16 %v16
  %v52 = vunpack.c.l.b16 %v17
  %v53 = vunpack.c.h.b16 %v17
  %v54 = vunpack.c.l.b16 %v18
  %v55 = vunpack.c.h.b16 %v18
  %v56 = vpack.c.b16 %v50, %v48
  %v57 = vpack.c.b16 %v51, %v49
  %v58 = vpack.c.b16 %v54, %v52
  %v59 = vpack.c.b16 %v55, %v53
  %v80 = vunpack.c.l.b16 %v19
  %v81 = vunpack.c.l.b16 %v20
  %v82 = vunpack.c.l.b16 %v21
  %v83 = vunpack.c.l.b16 %v22
  %v84 = vunpack.c.l.b16 %v23
  %v85 = vunpack.c.l.b16 %v24
  %v86 = vunpack.c.l.b16 %v25
  %v87 = vunpack.c.l.b16 %v26
  %v88 = vunpack.c.l.b16 %v27
  %v89 = vunpack.c.l.b16 %v28
  %v90 = vunpack.c.l.b16 %v29
  %v91 = vunpack.c.l.b16 %v30
  %v92 = vunpack.c.l.b16 %v31
  %v93 = vunpack.c.l.b16 %v32
  %v94 = vunpack.c.l.b16 %v33
  %v95 = vunpack.c.l.b16 %v34
  %v96 = vunpack.c.l.b16 %v35
  %v97 = vunpack.c.l.b16 %v36
  %v98 = vpack.c.b16 %v81, %v80
  %v99 = vpack.c.b16 %v83, %v82
  %v100 = vpack.c.b16 %v85, %v84
  %v101 = vpack.c.b16 %v87, %v86
  %v102 = vpack.c.b16 %v89, %v88
  %v103 = vpack.c.b16 %v91, %v90
  %v104 = vpack.c.b16 %v93, %v92
  %v105 = vpack.c.b16 %v95, %v94
  %v106 = vpack.c.b16 %v97, %v96
  %vm116 = vcmask 130048
  %v118 = vsel %vm116, %v57, 0
  %v121 = vsel %vm116, %v59, 0
  %123 = vmatprep.subr.bf16.mxu0 0
  %124 = vmatpush1.bf16.msra.mxu0 %v98
  %125 = vmatprep.subr.bf16.mxu0 0
  %126 = vmatpush1.bf16.msra.mxu0 %v99
  %127 = vmatprep.subr.bf16.mxu0 0
  %128 = vmatpush1.bf16.msra.mxu0 %v100
  %129 = vmatprep.subr.bf16.mxu0 0
  %130 = vmatpush1.bf16.msra.mxu0 %v101
  %131 = vmatprep.subr.bf16.mxu0 0
  %132 = vmatpush1.bf16.msra.mxu0 %v102
  %133 = vmatprep.subr.bf16.mxu0 0
  %134 = vmatpush1.bf16.msra.mxu0 %v103
  %135 = vmatprep.subr.bf16.mxu0 0
  %136 = vmatpush1.bf16.msra.mxu0 %v104
  %137 = vmatprep.subr.bf16.mxu0 0
  %138 = vmatpush1.bf16.msra.mxu0 %v105
  %139 = vmatprep.subr.bf16.mxu0 0
  %140 = vmatpush1.bf16.msra.mxu0 %v106
  %141 = vmatprep.subr.bf16.mxu0 0
  %142 = vmatpush1.bf16.msra.mxu0 0
  %143 = vmatprep.subr.bf16.mxu0 0
  %144 = vmatpush1.bf16.msra.mxu0 0
  %145 = vmatprep.subr.bf16.mxu0 0
  %146 = vmatpush1.bf16.msra.mxu0 0
  %147 = vmatprep.subr.bf16.mxu0 0
  %148 = vmatpush1.bf16.msra.mxu0 0
  %149 = vmatprep.subr.bf16.mxu0 0
  %150 = vmatpush1.bf16.msra.mxu0 0
  %151 = vmatprep.subr.bf16.mxu0 0
  %152 = vmatpush1.bf16.msra.mxu0 0
  %153 = vmatprep.subr.bf16.mxu0 0
  %154 = vmatpush1.bf16.msra.mxu0 0
  %155 = vmatprep.mubr.bf16.mxu0 %v118
  %156 = vmatmul.mubr.bf16.gmra.mrb[0].mxu0 %v56
  %v157 = vpop.f32.mrb[0].mxu0
  %v158 = vadd.f32 %v42, %v157
  %v159 = vpop.f32.mrb[0].mxu0
  %v160 = vpop.f32.mrb[0].mxu0
  %v161 = vadd.f32 %v42, %v160
  %v162 = vpop.f32.mrb[0].mxu0
  %163 = vmatprep.mubr.bf16.mxu0 %v121
  %164 = vmatmul.mubr.bf16.gmra.mrb[0].mxu0 %v58
  %v165 = vpop.f32.mrb[0].mxu0
  %v166 = vadd.f32 %v42, %v165
  %v167 = vpop.f32.mrb[0].mxu0
  %v168 = vpop.f32.mrb[0].mxu0
  %v169 = vadd.f32 %v42, %v168
  %v170 = vpop.f32.mrb[0].mxu0
  %171 = vdwg.mxu0
  %v172 = vmax.f32 %v158, 0.0
  %v173 = vmax.f32 %v161, 0.0
  %v174 = vmax.f32 %v166, 0.0
  %v175 = vmax.f32 %v169, 0.0
  %v176 = vpack.c.bf16 %v173, %v172
  %v177 = vpack.c.bf16 %v175, %v174
  %v180 = vunpack.c.l.b16 %v176
  %v181 = vunpack.c.h.b16 %v176
  %v182 = vunpack.c.l.b16 %v177
  %v183 = vunpack.c.h.b16 %v177
  %v184 = vpack.c.b16 %v180, %v180
  %v185 = vpack.c.b16 %v181, %v181
  %v186 = vpack.c.b16 %v182, %v182
  %v187 = vpack.c.b16 %v183, %v183
  %192 = vst [vmem:[%s3] sm:$0xf] %v184
  %193 = vst [vmem:[%s3 + $0x4] sm:$0xf] %v185
  %194 = vst [vmem:[%s3 + $0x8] sm:$0xf] %v186
  %195 = vst [vmem:[%s3 + $0xc] sm:$0xf] %v187
  // Predicated region
  $region14: #{resnet_forward.14} parent=0 // pred_check
    _
  $region15: #{resnet_forward.14} parent=0 // pred_check_branch
    %197 = sbr.rel (0) target = $region17
  $region16: #{resnet_forward.14} parent=0 // pred_region
    _
  $region17: #{resnet_forward.14} parent=0 // pred_fallthru
    _
  // Predicated region
  $region18: #{resnet_forward.14} parent=0 // pred_check
    _
  $region19: #{resnet_forward.14} parent=0 // pred_check_branch
    %199 = sbr.rel (0) target = $region21
  $region20: #{resnet_forward.14} parent=0 // pred_region
    _
  $region21: #{resnet_forward.14} parent=0 // pred_fallthru
    _

// kernel: resnet_forward.15
$region0: #{resnet_forward.15}
  #allocation0 [shape = 'u32[]', space=smem, size = 0x4, offset = 0x4, fixed_abs, tag = 'smem constant byte address 0x4 - core index']
  #allocation1 [shape = 'u32[144,128]{1,0:T(1,128)}', space=vmem, size = 0x12000, scoped, tag = 'internal scratch']
  %s0 = inlined_call_operand.vmem [shape: bf16[32,304], index: 0, kind: input, shape index: {}]
  %s1 = inlined_call_operand.vmem [shape: bf16[304,128], index: 1, kind: input, shape index: {}]
  %s2 = inlined_call_operand.vmem [shape: f32[1,128], index: 2, kind: input, shape index: {}]
  %s3 = inlined_call_operand.vmem [shape: bf16[32,128], index: 3, kind: output, shape index: {}]
  %s4 = sld [smem:[#allocation0]]
  $region22: #{resnet_forward.15} parent=0
    _
  %s6 = ssub.s32 1, %s4
  %s7 = scalar_select 0, %s6, %s4
  // Predicated region
  $region2: #{resnet_forward.15} parent=0 // pred_check
    _
  $region3: #{resnet_forward.15} parent=0 // pred_check_branch
    %9 = sbr.rel (0) target = $region5
  $region4: #{resnet_forward.15} parent=0 // pred_region
    _
  $region5: #{resnet_forward.15} parent=0 // pred_fallthru
    _
  // Predicated region
  $region6: #{resnet_forward.15} parent=0 // pred_check
    _
  $region7: #{resnet_forward.15} parent=0 // pred_check_branch
    %11 = sbr.rel (0) target = $region9
  $region8: #{resnet_forward.15} parent=0 // pred_region
    _
  $region9: #{resnet_forward.15} parent=0 // pred_fallthru
    _
  // Predicated region
  $region10: #{resnet_forward.15} parent=0 // pred_check
    _
  $region11: #{resnet_forward.15} parent=0 // pred_check_branch
    %13 = sbr.rel (0) target = $region13
  $region12: #{resnet_forward.15} parent=0 // pred_region
    _
  $region13: #{resnet_forward.15} parent=0 // pred_fallthru
    _
  %v15 = vld [vmem:[%s0] sm:$0xff]
  %v16 = vld [vmem:[%s0 + $0x8] sm:$0xf]
  %v17 = vld [vmem:[%s0 + $0xc] sm:$0xff]
  %v18 = vld [vmem:[%s0 + $0x14] sm:$0xf]
  %v19 = vld [vmem:[%s0 + $0x18] sm:$0xff]
  %v20 = vld [vmem:[%s0 + $0x20] sm:$0xf]
  %v21 = vld [vmem:[%s0 + $0x24] sm:$0xff]
  %v22 = vld [vmem:[%s0 + $0x2c] sm:$0xf]
  %v23 = vld [vmem:[%s1] sm:$0xf]
  %v24 = vld [vmem:[%s1 + $0x4] sm:$0xf]
  %v25 = vld [vmem:[%s1 + $0x8] sm:$0xf]
  %v26 = vld [vmem:[%s1 + $0xc] sm:$0xf]
  %v27 = vld [vmem:[%s1 + $0x10] sm:$0xf]
  %v28 = vld [vmem:[%s1 + $0x14] sm:$0xf]
  %v29 = vld [vmem:[%s1 + $0x18] sm:$0xf]
  %v30 = vld [vmem:[%s1 + $0x1c] sm:$0xf]
  %v31 = vld [vmem:[%s1 + $0x20] sm:$0xf]
  %v32 = vld [vmem:[%s1 + $0x24] sm:$0xf]
  %v33 = vld [vmem:[%s1 + $0x28] sm:$0xf]
  %v34 = vld [vmem:[%s1 + $0x2c] sm:$0xf]
  %v35 = vld [vmem:[%s1 + $0x30] sm:$0xf]
  %v36 = vld [vmem:[%s1 + $0x34] sm:$0xf]
  %v37 = vld [vmem:[%s1 + $0x38] sm:$0xf]
  %v38 = vld [vmem:[%s1 + $0x3c] sm:$0xf]
  %v39 = vld [vmem:[%s1 + $0x40] sm:$0xf]
  %v40 = vld [vmem:[%s1 + $0x44] sm:$0xf]
  %v41 = vld [vmem:[%s1 + $0x48] sm:$0xf]
  %v42 = vld [vmem:[%s1 + $0x4c] sm:$0xf]
  %v43 = vld [vmem:[%s1 + $0x50] sm:$0xf]
  %v44 = vld [vmem:[%s1 + $0x54] sm:$0xf]
  %v45 = vld [vmem:[%s1 + $0x58] sm:$0xf]
  %v46 = vld [vmem:[%s1 + $0x5c] sm:$0xf]
  %v47 = vld [vmem:[%s1 + $0x60] sm:$0xf]
  %v48 = vld [vmem:[%s1 + $0x64] sm:$0xf]
  %v49 = vld [vmem:[%s1 + $0x68] sm:$0xf]
  %v50 = vld [vmem:[%s1 + $0x6c] sm:$0xf]
  %v51 = vld [vmem:[%s1 + $0x70] sm:$0xf]
  %v52 = vld [vmem:[%s1 + $0x74] sm:$0xf]
  %v53 = vld [vmem:[%s1 + $0x78] sm:$0xf]
  %v54 = vld [vmem:[%s1 + $0x7c] sm:$0xf]
  %v55 = vld [vmem:[%s1 + $0x80] sm:$0xf]
  %v56 = vld [vmem:[%s1 + $0x84] sm:$0xf]
  %v57 = vld [vmem:[%s1 + $0x88] sm:$0xf]
  %v58 = vld [vmem:[%s1 + $0x8c] sm:$0xf]
  %v59 = vld [vmem:[%s1 + $0x90] sm:$0xf]
  %v60 = vld [vmem:[%s1 + $0x94] sm:$0xf]
  %v61 = vld [vmem:[%s2] sm:$0x1]
  %v63 = vlaneseq
  %v64 = vshrl.u32 %v63, 7
  %v65 = vsub.s32 0, %v64
  %v66 = vrot.slane %v61, %v65
  %v76 = vunpack.c.l.b16 %v15
  %v77 = vunpack.c.h.b16 %v15
  %v78 = vunpack.c.l.b16 %v16
  %v79 = vunpack.c.l.b16 %v17
  %v80 = vunpack.c.h.b16 %v17
  %v81 = vunpack.c.l.b16 %v18
  %v82 = vunpack.c.l.b16 %v19
  %v83 = vunpack.c.h.b16 %v19
  %v84 = vunpack.c.l.b16 %v20
  %v85 = vunpack.c.l.b16 %v21
  %v86 = vunpack.c.h.b16 %v21
  %v87 = vunpack.c.l.b16 %v22
  %v88 = vpack.c.b16 %v79, %v76
  %v89 = vpack.c.b16 %v80, %v77
  %v90 = vpack.c.b16 %v81, %v78
  %v91 = vpack.c.b16 %v85, %v82
  %v92 = vpack.c.b16 %v86, %v83
  %v93 = vpack.c.b16 %v87, %v84
  %v136 = vunpack.c.l.b16 %v23
  %v137 = vunpack.c.l.b16 %v24
  %v138 = vunpack.c.l.b16 %v25
  %v139 = vunpack.c.l.b16 %v26
  %v140 = vunpack.c.l.b16 %v27
  %v141 = vunpack.c.l.b16 %v28
  %v142 = vunpack.c.l.b16 %v29
  %v143 = vunpack.c.l.b16 %v30
  %v144 = vunpack.c.l.b16 %v31
  %v145 = vunpack.c.l.b16 %v32
  %v146 = vunpack.c.l.b16 %v33
  %v147 = vunpack.c.l.b16 %v34
  %v148 = vunpack.c.l.b16 %v35
  %v149 = vunpack.c.l.b16 %v36
  %v150 = vunpack.c.l.b16 %v37
  %v151 = vunpack.c.l.b16 %v38
  %v152 = vunpack.c.l.b16 %v39
  %v153 = vunpack.c.l.b16 %v40
  %v154 = vunpack.c.l.b16 %v41
  %v155 = vunpack.c.l.b16 %v42
  %v156 = vunpack.c.l.b16 %v43
  %v157 = vunpack.c.l.b16 %v44
  %v158 = vunpack.c.l.b16 %v45
  %v159 = vunpack.c.l.b16 %v46
  %v160 = vunpack.c.l.b16 %v47
  %v161 = vunpack.c.l.b16 %v48
  %v162 = vunpack.c.l.b16 %v49
  %v163 = vunpack.c.l.b16 %v50
  %v164 = vunpack.c.l.b16 %v51
  %v165 = vunpack.c.l.b16 %v52
  %v166 = vunpack.c.l.b16 %v53
  %v167 = vunpack.c.l.b16 %v54
  %v168 = vunpack.c.l.b16 %v55
  %v169 = vunpack.c.l.b16 %v56
  %v170 = vunpack.c.l.b16 %v57
  %v171 = vunpack.c.l.b16 %v58
  %v172 = vunpack.c.l.b16 %v59
  %v173 = vunpack.c.l.b16 %v60
  %v174 = vpack.c.b16 %v137, %v136
  %v175 = vpack.c.b16 %v139, %v138
  %v176 = vpack.c.b16 %v141, %v140
  %v177 = vpack.c.b16 %v143, %v142
  %v178 = vpack.c.b16 %v145, %v144
  %v179 = vpack.c.b16 %v147, %v146
  %v180 = vpack.c.b16 %v149, %v148
  %v181 = vpack.c.b16 %v151, %v150
  %v182 = vpack.c.b16 %v153, %v152
  %v183 = vpack.c.b16 %v155, %v154
  %v184 = vpack.c.b16 %v157, %v156
  %v185 = vpack.c.b16 %v159, %v158
  %v186 = vpack.c.b16 %v161, %v160
  %v187 = vpack.c.b16 %v163, %v162
  %v188 = vpack.c.b16 %v165, %v164
  %v189 = vpack.c.b16 %v167, %v166
  %v190 = vpack.c.b16 %v169, %v168
  %v191 = vpack.c.b16 %v171, %v170
  %v192 = vpack.c.b16 %v173, %v172
  %vm212 = vcmask 392192
  %v214 = vsel %vm212, %v90, 0
  %v217 = vsel %vm212, %v93, 0
  %219 = vmatprep.subr.bf16.mxu0 0
  %220 = vmatpush1.bf16.msra.mxu0 %v174
  %221 = vmatprep.subr.bf16.mxu0 0
  %222 = vmatpush1.bf16.msra.mxu0 %v175
  %223 = vmatprep.subr.bf16.mxu0 0
  %224 = vmatpush1.bf16.msra.mxu0 %v176
  %225 = vmatprep.subr.bf16.mxu0 0
  %226 = vmatpush1.bf16.msra.mxu0 %v177
  %227 = vmatprep.subr.bf16.mxu0 0
  %228 = vmatpush1.bf16.msra.mxu0 %v178
  %229 = vmatprep.subr.bf16.mxu0 0
  %230 = vmatpush1.bf16.msra.mxu0 %v179
  %231 = vmatprep.subr.bf16.mxu0 0
  %232 = vmatpush1.bf16.msra.mxu0 %v180
  %233 = vmatprep.subr.bf16.mxu0 0
  %234 = vmatpush1.bf16.msra.mxu0 %v181
  %235 = vmatprep.subr.bf16.mxu0 0
  %236 = vmatpush1.bf16.msra.mxu0 %v182
  %237 = vmatprep.subr.bf16.mxu0 0
  %238 = vmatpush1.bf16.msra.mxu0 %v183
  %239 = vmatprep.subr.bf16.mxu0 0
  %240 = vmatpush1.bf16.msra.mxu0 %v184
  %241 = vmatprep.subr.bf16.mxu0 0
  %242 = vmatpush1.bf16.msra.mxu0 %v185
  %243 = vmatprep.subr.bf16.mxu0 0
  %244 = vmatpush1.bf16.msra.mxu0 %v186
  %245 = vmatprep.subr.bf16.mxu0 0
  %246 = vmatpush1.bf16.msra.mxu0 %v187
  %247 = vmatprep.subr.bf16.mxu0 0
  %248 = vmatpush1.bf16.msra.mxu0 %v188
  %249 = vmatprep.subr.bf16.mxu0 0
  %250 = vmatpush1.bf16.msra.mxu0 %v189
  %251 = vmatprep.mubr.bf16.mxu0 %v89
  %252 = vmatmul.mubr.bf16.gmra.mrb[0].mxu0 %v88
  %v253 = vpop.f32.mrb[0].mxu0
  %v254 = vadd.f32 %v66, %v253
  %v255 = vpop.f32.mrb[0].mxu0
  %v256 = vpop.f32.mrb[0].mxu0
  %v257 = vadd.f32 %v66, %v256
  %v258 = vpop.f32.mrb[0].mxu0
  %259 = vmatprep.mubr.bf16.mxu0 %v92
  %260 = vmatmul.mubr.bf16.gmra.mrb[0].mxu0 %v91
  %v261 = vpop.f32.mrb[0].mxu0
  %v262 = vadd.f32 %v66, %v261
  %v263 = vpop.f32.mrb[0].mxu0
  %v264 = vpop.f32.mrb[0].mxu0
  %v265 = vadd.f32 %v66, %v264
  %v266 = vpop.f32.mrb[0].mxu0
  %267 = vdwg.mxu0
  %268 = vmatprep.subr.bf16.mxu0 0
  %269 = vmatpush1.bf16.msra.mxu0 %v190
  %270 = vmatprep.subr.bf16.mxu0 0
  %271 = vmatpush1.bf16.msra.mxu0 %v191
  %272 = vmatprep.subr.bf16.mxu0 0
  %273 = vmatpush1.bf16.msra.mxu0 %v192
  %274 = vmatprep.subr.bf16.mxu0 0
  %275 = vmatpush1.bf16.msra.mxu0 0
  %276 = vmatprep.subr.bf16.mxu0 0
  %277 = vmatpush1.bf16.msra.mxu0 0
  %278 = vmatprep.subr.bf16.mxu0 0
  %279 = vmatpush1.bf16.msra.mxu0 0
  %280 = vmatprep.subr.bf16.mxu0 0
  %281 = vmatpush1.bf16.msra.mxu0 0
  %282 = vmatprep.subr.bf16.mxu0 0
  %283 = vmatpush1.bf16.msra.mxu0 0
  %284 = vmatprep.subr.bf16.mxu0 0
  %285 = vmatpush1.bf16.msra.mxu0 0
  %286 = vmatprep.subr.bf16.mxu0 0
  %287 = vmatpush1.bf16.msra.mxu0 0
  %288 = vmatprep.subr.bf16.mxu0 0
  %289 = vmatpush1.bf16.msra.mxu0 0
  %290 = vmatprep.subr.bf16.mxu0 0
  %291 = vmatpush1.bf16.msra.mxu0 0
  %292 = vmatprep.subr.bf16.mxu0 0
  %293 = vmatpush1.bf16.msra.mxu0 0
  %294 = vmatprep.subr.bf16.mxu0 0
  %295 = vmatpush1.bf16.msra.mxu0 0
  %296 = vmatprep.subr.bf16.mxu0 0
  %297 = vmatpush1.bf16.msra.mxu0 0
  %298 = vmatprep.subr.bf16.mxu0 0
  %299 = vmatpush1.bf16.msra.mxu0 0
  %300 = vmatprep.mubr.bf16.mxu0 0
  %301 = vmatmul.mubr.bf16.gmra.mrb[0].mxu0 %v214
  %v302 = vpop.f32.mrb[0].mxu0
  %v303 = vadd.f32 %v254, %v302
  %v304 = vpop.f32.mrb[0].mxu0
  %v305 = vpop.f32.mrb[0].mxu0
  %v306 = vadd.f32 %v257, %v305
  %v307 = vpop.f32.mrb[0].mxu0
  %308 = vmatprep.mubr.bf16.mxu0 0
  %309 = vmatmul.mubr.bf16.gmra.mrb[0].mxu0 %v217
  %v310 = vpop.f32.mrb[0].mxu0
  %v311 = vadd.f32 %v262, %v310
  %v312 = vpop.f32.mrb[0].mxu0
  %v313 = vpop.f32.mrb[0].mxu0
  %v314 = vadd.f32 %v265, %v313
  %v315 = vpop.f32.mrb[0].mxu0
  %316 = vdwg.mxu0
  %v317 = vmax.f32 %v303, 0.0
  %v318 = vmax.f32 %v306, 0.0
  %v319 = vmax.f32 %v311, 0.0
  %v320 = vmax.f32 %v314, 0.0
  %v321 = vpack.c.bf16 %v318, %v317
  %v322 = vpack.c.bf16 %v320, %v319
  %v325 = vunpack.c.l.b16 %v321
  %v326 = vunpack.c.h.b16 %v321
  %v327 = vunpack.c.l.b16 %v322
  %v328 = vunpack.c.h.b16 %v322
  %v329 = vpack.c.b16 %v325, %v325
  %v330 = vpack.c.b16 %v326, %v326
  %v331 = vpack.c.b16 %v327, %v327
  %v332 = vpack.c.b16 %v328, %v328
  %337 = vst [vmem:[%s3] sm:$0xf] %v329
  %338 = vst [vmem:[%s3 + $0x4] sm:$0xf] %v330
  %339 = vst [vmem:[%s3 + $0x8] sm:$0xf] %v331
  %340 = vst [vmem:[%s3 + $0xc] sm:$0xf] %v332
  // Predicated region
  $region14: #{resnet_forward.15} parent=0 // pred_check
    _
  $region15: #{resnet_forward.15} parent=0 // pred_check_branch
    %342 = sbr.rel (0) target = $region17
  $region16: #{resnet_forward.15} parent=0 // pred_region
    _
  $region17: #{resnet_forward.15} parent=0 // pred_fallthru
    _
  // Predicated region
  $region18: #{resnet_forward.15} parent=0 // pred_check
    _
  $region19: #{resnet_forward.15} parent=0 // pred_check_branch
    %344 = sbr.rel (0) target = $region21
  $region20: #{resnet_forward.15} parent=0 // pred_region
    _
  $region21: #{resnet_forward.15} parent=0 // pred_fallthru
    _

// kernel: resnet_forward.16
$region0: #{resnet_forward.16}
  #allocation0 [shape = 'u32[]', space=smem, size = 0x4, offset = 0x4, fixed_abs, tag = 'smem constant byte address 0x4 - core index']
  #allocation1 [shape = 'u32[144,128]{1,0:T(1,128)}', space=vmem, size = 0x12000, scoped, tag = 'internal scratch']
  %s0 = inlined_call_operand.vmem [shape: bf16[8,288], index: 0, kind: input, shape index: {}]
  %s1 = inlined_call_operand.vmem [shape: bf16[288,128], index: 1, kind: input, shape index: {}]
  %s2 = inlined_call_operand.vmem [shape: f32[1,128], index: 2, kind: input, shape index: {}]
  %s3 = inlined_call_operand.vmem [shape: bf16[8,128], index: 3, kind: output, shape index: {}]
  %s4 = sld [smem:[#allocation0]]
  $region52: #{resnet_forward.16} parent=0
    _
  %s6 = ssub.s32 1, %s4
  %s7 = scalar_select 0, %s6, %s4
  $region1: #{resnet_forward.16} parent=0
    #allocation2 [shape = 'u8[4096]{0}', space=vmem, size = 0x1000, scoped, tag = 'output window, operand 0, single buffered']
    // Predicated region
    $region2: #{resnet_forward.16} parent=1 // pred_check
      _
    $region3: #{resnet_forward.16} parent=1 // pred_check_branch
      %9 = sbr.rel (0) target = $region5
    $region4: #{resnet_forward.16} parent=1 // pred_region
      _
    $region5: #{resnet_forward.16} parent=1 // pred_fallthru
      _
    // Predicated region
    $region6: #{resnet_forward.16} parent=1 // pred_check
      _
    $region7: #{resnet_forward.16} parent=1 // pred_check_branch
      %11 = sbr.rel (0) target = $region9
    $region8: #{resnet_forward.16} parent=1 // pred_region
      _
    $region9: #{resnet_forward.16} parent=1 // pred_fallthru
      _
    // Predicated region
    $region10: #{resnet_forward.16} parent=1 // pred_check
      _
    $region11: #{resnet_forward.16} parent=1 // pred_check_branch
      %13 = sbr.rel (0) target = $region13
    $region12: #{resnet_forward.16} parent=1 // pred_region
      _
    $region13: #{resnet_forward.16} parent=1 // pred_fallthru
      _
    %v15 = vld [vmem:[%s0] sm:$0xff]
    %v16 = vld [vmem:[%s0 + $0x8] sm:$0xf]
    %v17 = vld [vmem:[%s0 + $0xc] sm:$0xff]
    %v18 = vld [vmem:[%s0 + $0x14] sm:$0xf]
    %v19 = vld [vmem:[%s1] sm:$0xf]
    %v20 = vld [vmem:[%s1 + $0x4] sm:$0xf]
    %v21 = vld [vmem:[%s1 + $0x8] sm:$0xf]
    %v22 = vld [vmem:[%s1 + $0xc] sm:$0xf]
    %v23 = vld [vmem:[%s1 + $0x10] sm:$0xf]
    %v24 = vld [vmem:[%s1 + $0x14] sm:$0xf]
    %v25 = vld [vmem:[%s1 + $0x18] sm:$0xf]
    %v26 = vld [vmem:[%s1 + $0x1c] sm:$0xf]
    %v27 = vld [vmem:[%s1 + $0x20] sm:$0xf]
    %v28 = vld [vmem:[%s1 + $0x24] sm:$0xf]
    %v29 = vld [vmem:[%s1 + $0x28] sm:$0xf]
    %v30 = vld [vmem:[%s1 + $0x2c] sm:$0xf]
    %v31 = vld [vmem:[%s1 + $0x30] sm:$0xf]
    %v32 = vld [vmem:[%s1 + $0x34] sm:$0xf]
    %v33 = vld [vmem:[%s1 + $0x38] sm:$0xf]
    %v34 = vld [vmem:[%s1 + $0x3c] sm:$0xf]
    %v35 = vld [vmem:[%s1 + $0x40] sm:$0xf]
    %v36 = vld [vmem:[%s1 + $0x44] sm:$0xf]
    %v37 = vld [vmem:[%s1 + $0x48] sm:$0xf]
    %v38 = vld [vmem:[%s1 + $0x4c] sm:$0xf]
    %v39 = vld [vmem:[%s1 + $0x50] sm:$0xf]
    %v40 = vld [vmem:[%s1 + $0x54] sm:$0xf]
    %v41 = vld [vmem:[%s1 + $0x58] sm:$0xf]
    %v42 = vld [vmem:[%s1 + $0x5c] sm:$0xf]
    %v43 = vld [vmem:[%s1 + $0x60] sm:$0xf]
    %v44 = vld [vmem:[%s1 + $0x64] sm:$0xf]
    %v45 = vld [vmem:[%s1 + $0x68] sm:$0xf]
    %v46 = vld [vmem:[%s1 + $0x6c] sm:$0xf]
    %v47 = vld [vmem:[%s1 + $0x70] sm:$0xf]
    %v48 = vld [vmem:[%s1 + $0x74] sm:$0xf]
    %v49 = vld [vmem:[%s1 + $0x78] sm:$0xf]
    %v50 = vld [vmem:[%s1 + $0x7c] sm:$0xf]
    %v51 = vld [vmem:[%s1 + $0x80] sm:$0xf]
    %v52 = vld [vmem:[%s1 + $0x84] sm:$0xf]
    %v53 = vld [vmem:[%s1 + $0x88] sm:$0xf]
    %v54 = vld [vmem:[%s1 + $0x8c] sm:$0xf]
    %v55 = vld [vmem:[%s2] sm:$0x1]
    %v57 = vlaneseq
    %v58 = vshrl.u32 %v57, 7
    %v59 = vsub.s32 0, %v58
    %v60 = vrot.slane %v55, %v59
    %v66 = vunpack.c.l.b16 %v15
    %v67 = vunpack.c.h.b16 %v15
    %v68 = vunpack.c.l.b16 %v16
    %v69 = vunpack.c.l.b16 %v17
    %v70 = vunpack.c.h.b16 %v17
    %v71 = vunpack.c.l.b16 %v18
    %v72 = vpack.c.b16 %v69, %v66
    %v73 = vpack.c.b16 %v70, %v67
    %v74 = vpack.c.b16 %v71, %v68
    %v113 = vunpack.c.l.b16 %v19
    %v114 = vunpack.c.l.b16 %v20
    %v115 = vunpack.c.l.b16 %v21
    %v116 = vunpack.c.l.b16 %v22
    %v117 = vunpack.c.l.b16 %v23
    %v118 = vunpack.c.l.b16 %v24
    %v119 = vunpack.c.l.b16 %v25
    %v120 = vunpack.c.l.b16 %v26
    %v121 = vunpack.c.l.b16 %v27
    %v122 = vunpack.c.l.b16 %v28
    %v123 = vunpack.c.l.b16 %v29
    %v124 = vunpack.c.l.b16 %v30
    %v125 = vunpack.c.l.b16 %v31
    %v126 = vunpack.c.l.b16 %v32
    %v127 = vunpack.c.l.b16 %v33
    %v128 = vunpack.c.l.b16 %v34
    %v129 = vunpack.c.l.b16 %v35
    %v130 = vunpack.c.l.b16 %v36
    %v131 = vunpack.c.l.b16 %v37
    %v132 = vunpack.c.l.b16 %v38
    %v133 = vunpack.c.l.b16 %v39
    %v134 = vunpack.c.l.b16 %v40
    %v135 = vunpack.c.l.b16 %v41
    %v136 = vunpack.c.l.b16 %v42
    %v137 = vunpack.c.l.b16 %v43
    %v138 = vunpack.c.l.b16 %v44
    %v139 = vunpack.c.l.b16 %v45
    %v140 = vunpack.c.l.b16 %v46
    %v141 = vunpack.c.l.b16 %v47
    %v142 = vunpack.c.l.b16 %v48
    %v143 = vunpack.c.l.b16 %v49
    %v144 = vunpack.c.l.b16 %v50
    %v145 = vunpack.c.l.b16 %v51
    %v146 = vunpack.c.l.b16 %v52
    %v147 = vunpack.c.l.b16 %v53
    %v148 = vunpack.c.l.b16 %v54
    %v149 = vpack.c.b16 %v114, %v113
    %v150 = vpack.c.b16 %v116, %v115
    %v151 = vpack.c.b16 %v118, %v117
    %v152 = vpack.c.b16 %v120, %v119
    %v153 = vpack.c.b16 %v122, %v121
    %v154 = vpack.c.b16 %v124, %v123
    %v155 = vpack.c.b16 %v126, %v125
    %v156 = vpack.c.b16 %v128, %v127
    %v157 = vpack.c.b16 %v130, %v129
    %v158 = vpack.c.b16 %v132, %v131
    %v159 = vpack.c.b16 %v134, %v133
    %v160 = vpack.c.b16 %v136, %v135
    %v161 = vpack.c.b16 %v138, %v137
    %v162 = vpack.c.b16 %v140, %v139
    %v163 = vpack.c.b16 %v142, %v141
    %v164 = vpack.c.b16 %v144, %v143
    %v165 = vpack.c.b16 %v146, %v145
    %v166 = vpack.c.b16 %v148, %v147
    %vm185 = vcmask 261120
    %v187 = vsel %vm185, %v74, 0
    %189 = vmatprep.subr.bf16.mxu0 0
    %190 = vmatpush1.bf16.msra.mxu0 %v149
    %191 = vmatprep.subr.bf16.mxu0 0
    %192 = vmatpush1.bf16.msra.mxu0 %v150
    %193 = vmatprep.subr.bf16.mxu0 0
    %194 = vmatpush1.bf16.msra.mxu0 %v151
    %195 = vmatprep.subr.bf16.mxu0 0
    %196 = vmatpush1.bf16.msra.mxu0 %v152
    %197 = vmatprep.subr.bf16.mxu0 0
    %198 = vmatpush1.bf16.msra.mxu0 %v153
    %199 = vmatprep.subr.bf16.mxu0 0
    %200 = vmatpush1.bf16.msra.mxu0 %v154
    %201 = vmatprep.subr.bf16.mxu0 0
    %202 = vmatpush1.bf16.msra.mxu0 %v155
    %203 = vmatprep.subr.bf16.mxu0 0
    %204 = vmatpush1.bf16.msra.mxu0 %v156
    %205 = vmatprep.subr.bf16.mxu0 0
    %206 = vmatpush1.bf16.msra.mxu0 %v157
    %207 = vmatprep.subr.bf16.mxu0 0
    %208 = vmatpush1.bf16.msra.mxu0 %v158
    %209 = vmatprep.subr.bf16.mxu0 0
    %210 = vmatpush1.bf16.msra.mxu0 %v159
    %211 = vmatprep.subr.bf16.mxu0 0
    %212 = vmatpush1.bf16.msra.mxu0 %v160
    %213 = vmatprep.subr.bf16.mxu0 0
    %214 = vmatpush1.bf16.msra.mxu0 %v161
    %215 = vmatprep.subr.bf16.mxu0 0
    %216 = vmatpush1.bf16.msra.mxu0 %v162
    %217 = vmatprep.subr.bf16.mxu0 0
    %218 = vmatpush1.bf16.msra.mxu0 %v163
    %219 = vmatprep.subr.bf16.mxu0 0
    %220 = vmatpush1.bf16.msra.mxu0 %v164
    %221 = vmatprep.mubr.bf16.mxu0 %v73
    %222 = vmatmul.mubr.bf16.gmra.mrb[0].mxu0 %v72
    %v223 = vpop.f32.mrb[0].mxu0
    %v224 = vadd.f32 %v60, %v223
    %v225 = vpop.f32.mrb[0].mxu0
    %v226 = vpop.f32.mrb[0].mxu0
    %v227 = vadd.f32 %v60, %v226
    %v228 = vpop.f32.mrb[0].mxu0
    %229 = vdwg.mxu0
    %230 = vmatprep.subr.bf16.mxu0 0
    %231 = vmatpush1.bf16.msra.mxu0 %v165
    %232 = vmatprep.subr.bf16.mxu0 0
    %233 = vmatpush1.bf16.msra.mxu0 %v166
    %234 = vmatprep.subr.bf16.mxu0 0
    %235 = vmatpush1.bf16.msra.mxu0 0
    %236 = vmatprep.subr.bf16.mxu0 0
    %237 = vmatpush1.bf16.msra.mxu0 0
    %238 = vmatprep.subr.bf16.mxu0 0
    %239 = vmatpush1.bf16.msra.mxu0 0
    %240 = vmatprep.subr.bf16.mxu0 0
    %241 = vmatpush1.bf16.msra.mxu0 0
    %242 = vmatprep.subr.bf16.mxu0 0
    %243 = vmatpush1.bf16.msra.mxu0 0
    %244 = vmatprep.subr.bf16.mxu0 0
    %245 = vmatpush1.bf16.msra.mxu0 0
    %246 = vmatprep.subr.bf16.mxu0 0
    %247 = vmatpush1.bf16.msra.mxu0 0
    %248 = vmatprep.subr.bf16.mxu0 0
    %249 = vmatpush1.bf16.msra.mxu0 0
    %250 = vmatprep.subr.bf16.mxu0 0
    %251 = vmatpush1.bf16.msra.mxu0 0
    %252 = vmatprep.subr.bf16.mxu0 0
    %253 = vmatpush1.bf16.msra.mxu0 0
    %254 = vmatprep.subr.bf16.mxu0 0
    %255 = vmatpush1.bf16.msra.mxu0 0
    %256 = vmatprep.subr.bf16.mxu0 0
    %257 = vmatpush1.bf16.msra.mxu0 0
    %258 = vmatprep.subr.bf16.mxu0 0
    %259 = vmatpush1.bf16.msra.mxu0 0
    %260 = vmatprep.subr.bf16.mxu0 0
    %261 = vmatpush1.bf16.msra.mxu0 0
    %262 = vmatprep.mubr.bf16.mxu0 0
    %263 = vmatmul.mubr.bf16.gmra.mrb[0].mxu0 %v187
    %v264 = vpop.f32.mrb[0].mxu0
    %v265 = vadd.f32 %v224, %v264
    %v266 = vpop.f32.mrb[0].mxu0
    %v267 = vpop.f32.mrb[0].mxu0
    %v268 = vadd.f32 %v227, %v267
    %v269 = vpop.f32.mrb[0].mxu0
    %270 = vdwg.mxu0
    %v271 = vmax.f32 %v265, 0.0
    %v272 = vmax.f32 %v268, 0.0
    %v273 = vpack.c.bf16 %v272, %v271
    %v275 = vunpack.c.l.b16 %v273
    %v276 = vunpack.c.h.b16 %v273
    %v277 = vpack.c.b16 %v275, %v275
    %v278 = vpack.c.b16 %v276, %v276
    %281 = vst [vmem:[#allocation2] sm:$0xf] %v277
    %282 = vst [vmem:[#allocation2 + $0x4] sm:$0xf] %v278
    // Predicated region
    $region14: #{resnet_forward.16} parent=1 // pred_check
      _
    $region15: #{resnet_forward.16} parent=1 // pred_check_branch
      %284 = sbr.rel (0) target = $region17
    $region16: #{resnet_forward.16} parent=1 // pred_region
      // Predicated region
      $region18: #{resnet_forward.16} parent=16 // pred_check
        _
      $region19: #{resnet_forward.16} parent=16 // pred_check_branch
        %286 = sbr.rel (0) target = $region21
      $region20: #{resnet_forward.16} parent=16 // pred_region
        // Predicated region
        $region22: #{resnet_forward.16} parent=20 // pred_check
          _
        $region23: #{resnet_forward.16} parent=20 // pred_check_branch
          %288 = sbr.rel target = $region25
        $region24: #{resnet_forward.16} parent=20 // pred_region
          // Predicated region
          $region37: #{resnet_forward.16} parent=24 // pred_check
            _
          $region38: #{resnet_forward.16} parent=24 // pred_check_branch
            %303 = sbr.rel (0) target = $region40
          $region39: #{resnet_forward.16} parent=24 // pred_region
            loop: start=0, step=1, limit=1
            $region41: #{resnet_forward.16} parent=39 // loop_pre_header
              _
            $region42: #{resnet_forward.16} parent=39 // loop_header
              %s306 = sphi 0, %s310
              %p307 = scmp.ge.s32.totalorder %s306, 1
              %s311 = sphi [#allocation2], [#allocation2]
              %s312 = sphi %s3, %s3
            $region43: #{resnet_forward.16} parent=39 // loop_header_branch
              %309 = sbr.rel (%p307) target = $region47
            $region44: #{resnet_forward.16} parent=39 // loop_body
              %v313 = vld [vmem:[%s311] sm:$0xf]
              %314 = vst [vmem:[%s312] sm:$0xf] %v313
            $region45: #{resnet_forward.16} parent=39 // loop_footer
              %s310 = sadd.s32 1, %s306
            $region46: #{resnet_forward.16} parent=39 // loop_footer_branch
              %305 = sbr.rel target = $region42
            $region47: #{resnet_forward.16} parent=39 // loop_exit
              _
          $region40: #{resnet_forward.16} parent=24 // pred_fallthru
            _
        $region25: #{resnet_forward.16} parent=20 // pred_fallthru
          _
        // Predicated region
        $region26: #{resnet_forward.16} parent=20 // pred_check
          _
        $region27: #{resnet_forward.16} parent=20 // pred_check_branch
          %290 = sbr.rel (0) target = $region29
        $region28: #{resnet_forward.16} parent=20 // pred_region
          loop: start=0, step=1, limit=1
          $region30: #{resnet_forward.16} parent=28 // loop_pre_header
            _
          $region31: #{resnet_forward.16} parent=28 // loop_header
            %s293 = sphi 0, %s297
            %p294 = scmp.ge.s32.totalorder %s293, 1
            %s298 = sphi [#allocation2], [#allocation2]
            %s299 = sphi %s3, %s3
          $region32: #{resnet_forward.16} parent=28 // loop_header_branch
            %296 = sbr.rel (%p294) target = $region36
          $region33: #{resnet_forward.16} parent=28 // loop_body
            %v300 = vld [vmem:[%s298] sm:$0xf]
            %301 = vst [vmem:[%s299] sm:$0xf] %v300
          $region34: #{resnet_forward.16} parent=28 // loop_footer
            %s297 = sadd.s32 1, %s293
          $region35: #{resnet_forward.16} parent=28 // loop_footer_branch
            %292 = sbr.rel target = $region31
          $region36: #{resnet_forward.16} parent=28 // loop_exit
            _
        $region29: #{resnet_forward.16} parent=20 // pred_fallthru
          _
      $region21: #{resnet_forward.16} parent=16 // pred_fallthru
        _
      %315 = vnop
    $region17: #{resnet_forward.16} parent=1 // pred_fallthru
      _
    // Predicated region
    $region48: #{resnet_forward.16} parent=1 // pred_check
      _
    $region49: #{resnet_forward.16} parent=1 // pred_check_branch
      %317 = sbr.rel (0) target = $region51
    $region50: #{resnet_forward.16} parent=1 // pred_region
      _
    $region51: #{resnet_forward.16} parent=1 // pred_fallthru
      _

// kernel: resnet_forward.18
$region0: #{resnet_forward.18}
  #allocation0 [shape = 'u32[]', space=smem, size = 0x4, offset = 0x4, fixed_abs, tag = 'smem constant byte address 0x4 - core index']
  #allocation1 [shape = 'u32[144,128]{1,0:T(1,128)}', space=vmem, size = 0x12000, scoped, tag = 'internal scratch']
  %s0 = inlined_call_operand.vmem [shape: bf16[2,576], index: 0, kind: input, shape index: {}]
  %s1 = inlined_call_operand.vmem [shape: bf16[576,128], index: 1, kind: input, shape index: {}]
  %s2 = inlined_call_operand.vmem [shape: f32[1,128], index: 2, kind: input, shape index: {}]
  %s3 = inlined_call_operand.vmem [shape: bf16[2,128], index: 3, kind: output, shape index: {}]
  %s4 = sld [smem:[#allocation0]]
  $region52: #{resnet_forward.18} parent=0
    _
  %s6 = ssub.s32 1, %s4
  %s7 = scalar_select 0, %s6, %s4
  $region1: #{resnet_forward.18} parent=0
    #allocation2 [shape = 'u8[4096]{0}', space=vmem, size = 0x1000, scoped, tag = 'output window, operand 0, single buffered']
    // Predicated region
    $region2: #{resnet_forward.18} parent=1 // pred_check
      _
    $region3: #{resnet_forward.18} parent=1 // pred_check_branch
      %9 = sbr.rel (0) target = $region5
    $region4: #{resnet_forward.18} parent=1 // pred_region
      _
    $region5: #{resnet_forward.18} parent=1 // pred_fallthru
      _
    // Predicated region
    $region6: #{resnet_forward.18} parent=1 // pred_check
      _
    $region7: #{resnet_forward.18} parent=1 // pred_check_branch
      %11 = sbr.rel (0) target = $region9
    $region8: #{resnet_forward.18} parent=1 // pred_region
      _
    $region9: #{resnet_forward.18} parent=1 // pred_fallthru
      _
    // Predicated region
    $region10: #{resnet_forward.18} parent=1 // pred_check
      _
    $region11: #{resnet_forward.18} parent=1 // pred_check_branch
      %13 = sbr.rel (0) target = $region13
    $region12: #{resnet_forward.18} parent=1 // pred_region
      _
    $region13: #{resnet_forward.18} parent=1 // pred_fallthru
      _
    %v15 = vld [vmem:[%s0] sm:$0x1f]
    %v16 = vld [vmem:[%s0 + $0x5] sm:$0x1f]
    %v17 = vld [vmem:[%s0 + $0xa] sm:$0x1f]
    %v18 = vld [vmem:[%s0 + $0xf] sm:$0x1f]
    %v19 = vld [vmem:[%s0 + $0x14] sm:$0x1f]
    %v20 = vld [vmem:[%s0 + $0x19] sm:$0x1f]
    %v21 = vld [vmem:[%s0 + $0x1e] sm:$0x1f]
    %v22 = vld [vmem:[%s0 + $0x23] sm:$0x1f]
    %v23 = vld [vmem:[%s1] sm:$0xf]
    %v24 = vld [vmem:[%s1 + $0x4] sm:$0xf]
    %v25 = vld [vmem:[%s1 + $0x8] sm:$0xf]
    %v26 = vld [vmem:[%s1 + $0xc] sm:$0xf]
    %v27 = vld [vmem:[%s1 + $0x10] sm:$0xf]
    %v28 = vld [vmem:[%s1 + $0x14] sm:$0xf]
    %v29 = vld [vmem:[%s1 + $0x18] sm:$0xf]
    %v30 = vld [vmem:[%s1 + $0x1c] sm:$0xf]
    %v31 = vld [vmem:[%s1 + $0x20] sm:$0xf]
    %v32 = vld [vmem:[%s1 + $0x24] sm:$0xf]
    %v33 = vld [vmem:[%s1 + $0x28] sm:$0xf]
    %v34 = vld [vmem:[%s1 + $0x2c] sm:$0xf]
    %v35 = vld [vmem:[%s1 + $0x30] sm:$0xf]
    %v36 = vld [vmem:[%s1 + $0x34] sm:$0xf]
    %v37 = vld [vmem:[%s1 + $0x38] sm:$0xf]
    %v38 = vld [vmem:[%s1 + $0x3c] sm:$0xf]
    %v39 = vld [vmem:[%s1 + $0x40] sm:$0xf]
    %v40 = vld [vmem:[%s1 + $0x44] sm:$0xf]
    %v41 = vld [vmem:[%s1 + $0x48] sm:$0xf]
    %v42 = vld [vmem:[%s1 + $0x4c] sm:$0xf]
    %v43 = vld [vmem:[%s1 + $0x50] sm:$0xf]
    %v44 = vld [vmem:[%s1 + $0x54] sm:$0xf]
    %v45 = vld [vmem:[%s1 + $0x58] sm:$0xf]
    %v46 = vld [vmem:[%s1 + $0x5c] sm:$0xf]
    %v47 = vld [vmem:[%s1 + $0x60] sm:$0xf]
    %v48 = vld [vmem:[%s1 + $0x64] sm:$0xf]
    %v49 = vld [vmem:[%s1 + $0x68] sm:$0xf]
    %v50 = vld [vmem:[%s1 + $0x6c] sm:$0xf]
    %v51 = vld [vmem:[%s1 + $0x70] sm:$0xf]
    %v52 = vld [vmem:[%s1 + $0x74] sm:$0xf]
    %v53 = vld [vmem:[%s1 + $0x78] sm:$0xf]
    %v54 = vld [vmem:[%s1 + $0x7c] sm:$0xf]
    %v55 = vld [vmem:[%s1 + $0x80] sm:$0xf]
    %v56 = vld [vmem:[%s1 + $0x84] sm:$0xf]
    %v57 = vld [vmem:[%s1 + $0x88] sm:$0xf]
    %v58 = vld [vmem:[%s1 + $0x8c] sm:$0xf]
    %v59 = vld [vmem:[%s1 + $0x90] sm:$0xf]
    %v60 = vld [vmem:[%s1 + $0x94] sm:$0xf]
    %v61 = vld [vmem:[%s1 + $0x98] sm:$0xf]
    %v62 = vld [vmem:[%s1 + $0x9c] sm:$0xf]
    %v63 = vld [vmem:[%s1 + $0xa0] sm:$0xf]
    %v64 = vld [vmem:[%s1 + $0xa4] sm:$0xf]
    %v65 = vld [vmem:[%s1 + $0xa8] sm:$0xf]
    %v66 = vld [vmem:[%s1 + $0xac] sm:$0xf]
    %v67 = vld [vmem:[%s1 + $0xb0] sm:$0xf]
    %v68 = vld [vmem:[%s1 + $0xb4] sm:$0xf]
    %v69 = vld [vmem:[%s1 + $0xb8] sm:$0xf]
    %v70 = vld [vmem:[%s1 + $0xbc] sm:$0xf]
    %v71 = vld [vmem:[%s1 + $0xc0] sm:$0xf]
    %v72 = vld [vmem:[%s1 + $0xc4] sm:$0xf]
    %v73 = vld [vmem:[%s1 + $0xc8] sm:$0xf]
    %v74 = vld [vmem:[%s1 + $0xcc] sm:$0xf]
    %v75 = vld [vmem:[%s1 + $0xd0] sm:$0xf]
    %v76 = vld [vmem:[%s1 + $0xd4] sm:$0xf]
    %v77 = vld [vmem:[%s1 + $0xd8] sm:$0xf]
    %v78 = vld [vmem:[%s1 + $0xdc] sm:$0xf]
    %v79 = vld [vmem:[%s1 + $0xe0] sm:$0xf]
    %v80 = vld [vmem:[%s1 + $0xe4] sm:$0xf]
    %v81 = vld [vmem:[%s1 + $0xe8] sm:$0xf]
    %v82 = vld [vmem:[%s1 + $0xec] sm:$0xf]
    %v83 = vld [vmem:[%s1 + $0xf0] sm:$0xf]
    %v84 = vld [vmem:[%s1 + $0xf4] sm:$0xf]
    %v85 = vld [vmem:[%s1 + $0xf8] sm:$0xf]
    %v86 = vld [vmem:[%s1 + $0xfc] sm:$0xf]
    %v87 = vld [vmem:[%s1 + $0x100] sm:$0xf]
    %v88 = vld [vmem:[%s1 + $0x104] sm:$0xf]
    %v89 = vld [vmem:[%s1 + $0x108] sm:$0xf]
    %v90 = vld [vmem:[%s1 + $0x10c] sm:$0xf]
    %v91 = vld [vmem:[%s1 + $0x110] sm:$0xf]
    %v92 = vld [vmem:[%s1 + $0x114] sm:$0xf]
    %v93 = vld [vmem:[%s1 + $0x118] sm:$0xf]
    %v94 = vld [vmem:[%s1 + $0x11c] sm:$0xf]
    %v95 = vld [vmem:[%s2] sm:$0x1]
    %v97 = vlaneseq
    %v98 = vshrl.u32 %v97, 7
    %v99 = vsub.s32 0, %v98
    %v100 = vrot.slane %v95, %v99
    %v110 = vcombine.low %v15, %v16
    %v111 = vcombine.high %v15, %v16
    %v112 = vcombine.low %v17, %v18
    %v113 = vcombine.high %v17, %v18
    %v114 = vcombine.low %v19, %v20
    %v115 = vcombine.high %v19, %v20
    %v116 = vcombine.low %v21, %v22
    %v117 = vcombine.high %v21, %v22
    %v119 = vunpack.c.l.s4 1966171168
    %v120 = vunpack.c.0.s8 %v119
    %v121 = vlaneseq
    %v122 = vshrl.u32 %v121, 7
    %v123 = vsub.s32 %v120, %v122
    %v124 = vrot.slane %v110, %v123
    %v126 = vunpack.c.l.s4 1966171168
    %v127 = vunpack.c.0.s8 %v126
    %v128 = vlaneseq
    %v129 = vshrl.u32 %v128, 7
    %v130 = vsub.s32 %v127, %v129
    %v131 = vrot.slane %v111, %v130
    %v133 = vunpack.c.l.s4 1966171168
    %v134 = vunpack.c.0.s8 %v133
    %v135 = vlaneseq
    %v136 = vshrl.u32 %v135, 7
    %v137 = vsub.s32 %v134, %v136
    %v138 = vrot.slane %v112, %v137
    %v140 = vunpack.c.l.s4 1966171168
    %v141 = vunpack.c.0.s8 %v140
    %v142 = vlaneseq
    %v143 = vshrl.u32 %v142, 7
    %v144 = vsub.s32 %v141, %v143
    %v145 = vrot.slane %v113, %v144
    %v147 = vunpack.c.l.s4 1966171168
    %v148 = vunpack.c.0.s8 %v147
    %v149 = vlaneseq
    %v150 = vshrl.u32 %v149, 7
    %v151 = vsub.s32 %v148, %v150
    %v152 = vrot.slane %v114, %v151
    %v154 = vunpack.c.l.s4 1966171168
    %v155 = vunpack.c.0.s8 %v154
    %v156 = vlaneseq
    %v157 = vshrl.u32 %v156, 7
    %v158 = vsub.s32 %v155, %v157
    %v159 = vrot.slane %v115, %v158
    %v161 = vunpack.c.l.s4 1966171168
    %v162 = vunpack.c.0.s8 %v161
    %v163 = vlaneseq
    %v164 = vshrl.u32 %v163, 7
    %v165 = vsub.s32 %v162, %v164
    %v166 = vrot.slane %v116, %v165
    %v168 = vunpack.c.l.s4 1966171168
    %v169 = vunpack.c.0.s8 %v168
    %v170 = vlaneseq
    %v171 = vshrl.u32 %v170, 7
    %v172 = vsub.s32 %v169, %v171
    %v173 = vrot.slane %v117, %v172
    %v174 = vcombine.low %v124, %v138
    %v175 = vcombine.high %v124, %v138
    %v176 = vcombine.low %v131, %v145
    %v177 = vcombine.low %v152, %v166
    %v178 = vcombine.high %v152, %v166
    %v179 = vcombine.low %v159, %v173
    %v181 = vunpack.c.l.s4 1966171168
    %v182 = vunpack.c.0.s8 %v181
    %v183 = vlaneseq
    %v184 = vshrl.u32 %v183, 7
    %v185 = vsub.s32 %v182, %v184
    %v186 = vrot.slane %v174, %v185
    %v188 = vunpack.c.l.s4 1966171168
    %v189 = vunpack.c.0.s8 %v188
    %v190 = vlaneseq
    %v191 = vshrl.u32 %v190, 7
    %v192 = vsub.s32 %v189, %v191
    %v193 = vrot.slane %v176, %v192
    %v195 = vunpack.c.l.s4 1966171168
    %v196 = vunpack.c.0.s8 %v195
    %v197 = vlaneseq
    %v198 = vshrl.u32 %v197, 7
    %v199 = vsub.s32 %v196, %v198
    %v200 = vrot.slane %v175, %v199
    %v202 = vunpack.c.l.s4 1966171168
    %v203 = vunpack.c.0.s8 %v202
    %v204 = vlaneseq
    %v205 = vshrl.u32 %v204, 7
    %v206 = vsub.s32 %v203, %v205
    %v207 = vrot.slane %v177, %v206
    %v209 = vunpack.c.l.s4 1966171168
    %v210 = vunpack.c.0.s8 %v209
    %v211 = vlaneseq
    %v212 = vshrl.u32 %v211, 7
    %v213 = vsub.s32 %v210, %v212
    %v214 = vrot.slane %v179, %v213
    %v216 = vunpack.c.l.s4 1966171168
    %v217 = vunpack.c.0.s8 %v216
    %v218 = vlaneseq
    %v219 = vshrl.u32 %v218, 7
    %v220 = vsub.s32 %v217, %v219
    %v221 = vrot.slane %v178, %v220
    %v222 = vcombine.low %v186, %v207
    %v223 = vcombine.high %v186, %v207
    %v224 = vcombine.low %v193, %v214
    %v225 = vcombine.low %v200, %v221
    %v226 = vcombine.high %v200, %v221
    %v303 = vunpack.c.l.b16 %v23
    %v304 = vunpack.c.l.b16 %v24
    %v305 = vunpack.c.l.b16 %v25
    %v306 = vunpack.c.l.b16 %v26
    %v307 = vunpack.c.l.b16 %v27
    %v308 = vunpack.c.l.b16 %v28
    %v309 = vunpack.c.l.b16 %v29
    %v310 = vunpack.c.l.b16 %v30
    %v311 = vunpack.c.l.b16 %v31
    %v312 = vunpack.c.l.b16 %v32
    %v313 = vunpack.c.l.b16 %v33
    %v314 = vunpack.c.l.b16 %v34
    %v315 = vunpack.c.l.b16 %v35
    %v316 = vunpack.c.l.b16 %v36
    %v317 = vunpack.c.l.b16 %v37
    %v318 = vunpack.c.l.b16 %v38
    %v319 = vunpack.c.l.b16 %v39
    %v320 = vunpack.c.l.b16 %v40
    %v321 = vunpack.c.l.b16 %v41
    %v322 = vunpack.c.l.b16 %v42
    %v323 = vunpack.c.l.b16 %v43
    %v324 = vunpack.c.l.b16 %v44
    %v325 = vunpack.c.l.b16 %v45
    %v326 = vunpack.c.l.b16 %v46
    %v327 = vunpack.c.l.b16 %v47
    %v328 = vunpack.c.l.b16 %v48
    %v329 = vunpack.c.l.b16 %v49
    %v330 = vunpack.c.l.b16 %v50
    %v331 = vunpack.c.l.b16 %v51
    %v332 = vunpack.c.l.b16 %v52
    %v333 = vunpack.c.l.b16 %v53
    %v334 = vunpack.c.l.b16 %v54
    %v335 = vunpack.c.l.b16 %v55
    %v336 = vunpack.c.l.b16 %v56
    %v337 = vunpack.c.l.b16 %v57
    %v338 = vunpack.c.l.b16 %v58
    %v339 = vunpack.c.l.b16 %v59
    %v340 = vunpack.c.l.b16 %v60
    %v341 = vunpack.c.l.b16 %v61
    %v342 = vunpack.c.l.b16 %v62
    %v343 = vunpack.c.l.b16 %v63
    %v344 = vunpack.c.l.b16 %v64
    %v345 = vunpack.c.l.b16 %v65
    %v346 = vunpack.c.l.b16 %v66
    %v347 = vunpack.c.l.b16 %v67
    %v348 = vunpack.c.l.b16 %v68
    %v349 = vunpack.c.l.b16 %v69
    %v350 = vunpack.c.l.b16 %v70
    %v351 = vunpack.c.l.b16 %v71
    %v352 = vunpack.c.l.b16 %v72
    %v353 = vunpack.c.l.b16 %v73
    %v354 = vunpack.c.l.b16 %v74
    %v355 = vunpack.c.l.b16 %v75
    %v356 = vunpack.c.l.b16 %v76
    %v357 = vunpack.c.l.b16 %v77
    %v358 = vunpack.c.l.b16 %v78
    %v359 = vunpack.c.l.b16 %v79
    %v360 = vunpack.c.l.b16 %v80
    %v361 = vunpack.c.l.b16 %v81
    %v362 = vunpack.c.l.b16 %v82
    %v363 = vunpack.c.l.b16 %v83
    %v364 = vunpack.c.l.b16 %v84
    %v365 = vunpack.c.l.b16 %v85
    %v366 = vunpack.c.l.b16 %v86
    %v367 = vunpack.c.l.b16 %v87
    %v368 = vunpack.c.l.b16 %v88
    %v369 = vunpack.c.l.b16 %v89
    %v370 = vunpack.c.l.b16 %v90
    %v371 = vunpack.c.l.b16 %v91
    %v372 = vunpack.c.l.b16 %v92
    %v373 = vunpack.c.l.b16 %v93
    %v374 = vunpack.c.l.b16 %v94
    %v375 = vpack.c.b16 %v304, %v303
    %v376 = vpack.c.b16 %v306, %v305
    %v377 = vpack.c.b16 %v308, %v307
    %v378 = vpack.c.b16 %v310, %v309
    %v379 = vpack.c.b16 %v312, %v311
    %v380 = vpack.c.b16 %v314, %v313
    %v381 = vpack.c.b16 %v316, %v315
    %v382 = vpack.c.b16 %v318, %v317
    %v383 = vpack.c.b16 %v320, %v319
    %v384 = vpack.c.b16 %v322, %v321
    %v385 = vpack.c.b16 %v324, %v323
    %v386 = vpack.c.b16 %v326, %v325
    %v387 = vpack.c.b16 %v328, %v327
    %v388 = vpack.c.b16 %v330, %v329
    %v389 = vpack.c.b16 %v332, %v331
    %v390 = vpack.c.b16 %v334, %v333
    %v391 = vpack.c.b16 %v336, %v335
    %v392 = vpack.c.b16 %v338, %v337
    %v393 = vpack.c.b16 %v340, %v339
    %v394 = vpack.c.b16 %v342, %v341
    %v395 = vpack.c.b16 %v344, %v343
    %v396 = vpack.c.b16 %v346, %v345
    %v397 = vpack.c.b16 %v348, %v347
    %v398 = vpack.c.b16 %v350, %v349
    %v399 = vpack.c.b16 %v352, %v351
    %v400 = vpack.c.b16 %v354, %v353
    %v401 = vpack.c.b16 %v356, %v355
    %v402 = vpack.c.b16 %v358, %v357
    %v403 = vpack.c.b16 %v360, %v359
    %v404 = vpack.c.b16 %v362, %v361
    %v405 = vpack.c.b16 %v364, %v363
    %v406 = vpack.c.b16 %v366, %v365
    %v407 = vpack.c.b16 %v368, %v367
    %v408 = vpack.c.b16 %v370, %v369
    %v409 = vpack.c.b16 %v372, %v371
    %v410 = vpack.c.b16 %v374, %v373
    %vm447 = vcmask 523264
    %v449 = vsel %vm447, %v224, 0
    %451 = vmatprep.subr.bf16.mxu0 0
    %452 = vmatpush1.bf16.msra.mxu0 %v375
    %453 = vmatprep.subr.bf16.mxu0 0
    %454 = vmatpush1.bf16.msra.mxu0 %v376
    %455 = vmatprep.subr.bf16.mxu0 0
    %456 = vmatpush1.bf16.msra.mxu0 %v377
    %457 = vmatprep.subr.bf16.mxu0 0
    %458 = vmatpush1.bf16.msra.mxu0 %v378
    %459 = vmatprep.subr.bf16.mxu0 0
    %460 = vmatpush1.bf16.msra.mxu0 %v379
    %461 = vmatprep.subr.bf16.mxu0 0
    %462 = vmatpush1.bf16.msra.mxu0 %v380
    %463 = vmatprep.subr.bf16.mxu0 0
    %464 = vmatpush1.bf16.msra.mxu0 %v381
    %465 = vmatprep.subr.bf16.mxu0 0
    %466 = vmatpush1.bf16.msra.mxu0 %v382
    %467 = vmatprep.subr.bf16.mxu0 0
    %468 = vmatpush1.bf16.msra.mxu0 %v383
    %469 = vmatprep.subr.bf16.mxu0 0
    %470 = vmatpush1.bf16.msra.mxu0 %v384
    %471 = vmatprep.subr.bf16.mxu0 0
    %472 = vmatpush1.bf16.msra.mxu0 %v385
    %473 = vmatprep.subr.bf16.mxu0 0
    %474 = vmatpush1.bf16.msra.mxu0 %v386
    %475 = vmatprep.subr.bf16.mxu0 0
    %476 = vmatpush1.bf16.msra.mxu0 %v387
    %477 = vmatprep.subr.bf16.mxu0 0
    %478 = vmatpush1.bf16.msra.mxu0 %v388
    %479 = vmatprep.subr.bf16.mxu0 0
    %480 = vmatpush1.bf16.msra.mxu0 %v389
    %481 = vmatprep.subr.bf16.mxu0 0
    %482 = vmatpush1.bf16.msra.mxu0 %v390
    %483 = vmatprep.mubr.bf16.mxu0 %v225
    %484 = vmatmul.mubr.bf16.gmra.mrb[0].mxu0 %v222
    %v485 = vpop.f32.mrb[0].mxu0
    %v486 = vadd.f32 %v100, %v485
    %v487 = vpop.f32.mrb[0].mxu0
    %v488 = vpop.f32.mrb[0].mxu0
    %v489 = vadd.f32 %v100, %v488
    %v490 = vpop.f32.mrb[0].mxu0
    %491 = vdwg.mxu0
    %492 = vmatprep.subr.bf16.mxu0 0
    %493 = vmatpush1.bf16.msra.mxu0 %v391
    %494 = vmatprep.subr.bf16.mxu0 0
    %495 = vmatpush1.bf16.msra.mxu0 %v392
    %496 = vmatprep.subr.bf16.mxu0 0
    %497 = vmatpush1.bf16.msra.mxu0 %v393
    %498 = vmatprep.subr.bf16.mxu0 0
    %499 = vmatpush1.bf16.msra.mxu0 %v394
    %500 = vmatprep.subr.bf16.mxu0 0
    %501 = vmatpush1.bf16.msra.mxu0 %v395
    %502 = vmatprep.subr.bf16.mxu0 0
    %503 = vmatpush1.bf16.msra.mxu0 %v396
    %504 = vmatprep.subr.bf16.mxu0 0
    %505 = vmatpush1.bf16.msra.mxu0 %v397
    %506 = vmatprep.subr.bf16.mxu0 0
    %507 = vmatpush1.bf16.msra.mxu0 %v398
    %508 = vmatprep.subr.bf16.mxu0 0
    %509 = vmatpush1.bf16.msra.mxu0 %v399
    %510 = vmatprep.subr.bf16.mxu0 0
    %511 = vmatpush1.bf16.msra.mxu0 %v400
    %512 = vmatprep.subr.bf16.mxu0 0
    %513 = vmatpush1.bf16.msra.mxu0 %v401
    %514 = vmatprep.subr.bf16.mxu0 0
    %515 = vmatpush1.bf16.msra.mxu0 %v402
    %516 = vmatprep.subr.bf16.mxu0 0
    %517 = vmatpush1.bf16.msra.mxu0 %v403
    %518 = vmatprep.subr.bf16.mxu0 0
    %519 = vmatpush1.bf16.msra.mxu0 %v404
    %520 = vmatprep.subr.bf16.mxu0 0
    %521 = vmatpush1.bf16.msra.mxu0 %v405
    %522 = vmatprep.subr.bf16.mxu0 0
    %523 = vmatpush1.bf16.msra.mxu0 %v406
    %524 = vmatprep.mubr.bf16.mxu0 %v226
    %525 = vmatmul.mubr.bf16.gmra.mrb[0].mxu0 %v223
    %v526 = vpop.f32.mrb[0].mxu0
    %v527 = vadd.f32 %v486, %v526
    %v528 = vpop.f32.mrb[0].mxu0
    %v529 = vpop.f32.mrb[0].mxu0
    %v530 = vadd.f32 %v489, %v529
    %v531 = vpop.f32.mrb[0].mxu0
    %532 = vdwg.mxu0
    %533 = vmatprep.subr.bf16.mxu0 0
    %534 = vmatpush1.bf16.msra.mxu0 %v407
    %535 = vmatprep.subr.bf16.mxu0 0
    %536 = vmatpush1.bf16.msra.mxu0 %v408
    %537 = vmatprep.subr.bf16.mxu0 0
    %538 = vmatpush1.bf16.msra.mxu0 %v409
    %539 = vmatprep.subr.bf16.mxu0 0
    %540 = vmatpush1.bf16.msra.mxu0 %v410
    %541 = vmatprep.subr.bf16.mxu0 0
    %542 = vmatpush1.bf16.msra.mxu0 0
    %543 = vmatprep.subr.bf16.mxu0 0
    %544 = vmatpush1.bf16.msra.mxu0 0
    %545 = vmatprep.subr.bf16.mxu0 0
    %546 = vmatpush1.bf16.msra.mxu0 0
    %547 = vmatprep.subr.bf16.mxu0 0
    %548 = vmatpush1.bf16.msra.mxu0 0
    %549 = vmatprep.subr.bf16.mxu0 0
    %550 = vmatpush1.bf16.msra.mxu0 0
    %551 = vmatprep.subr.bf16.mxu0 0
    %552 = vmatpush1.bf16.msra.mxu0 0
    %553 = vmatprep.subr.bf16.mxu0 0
    %554 = vmatpush1.bf16.msra.mxu0 0
    %555 = vmatprep.subr.bf16.mxu0 0
    %556 = vmatpush1.bf16.msra.mxu0 0
    %557 = vmatprep.subr.bf16.mxu0 0
    %558 = vmatpush1.bf16.msra.mxu0 0
    %559 = vmatprep.subr.bf16.mxu0 0
    %560 = vmatpush1.bf16.msra.mxu0 0
    %561 = vmatprep.subr.bf16.mxu0 0
    %562 = vmatpush1.bf16.msra.mxu0 0
    %563 = vmatprep.subr.bf16.mxu0 0
    %564 = vmatpush1.bf16.msra.mxu0 0
    %565 = vmatprep.mubr.bf16.mxu0 0
    %566 = vmatmul.mubr.bf16.gmra.mrb[0].mxu0 %v449
    %v567 = vpop.f32.mrb[0].mxu0
    %v568 = vadd.f32 %v527, %v567
    %v569 = vpop.f32.mrb[0].mxu0
    %v570 = vpop.f32.mrb[0].mxu0
    %v571 = vadd.f32 %v530, %v570
    %v572 = vpop.f32.mrb[0].mxu0
    %573 = vdwg.mxu0
    %v574 = vmax.f32 %v568, 0.0
    %v575 = vmax.f32 %v571, 0.0
    %v576 = vpack.c.bf16 %v575, %v574
    %v578 = vcombine.high %v576, %v576
    %v580 = vunpack.c.l.s4 1966171168
    %v581 = vunpack.c.0.s8 %v580
    %v582 = vlaneseq
    %v583 = vshrl.u32 %v582, 7
    %v584 = vsub.s32 %v581, %v583
    %v585 = vrot.slane %v576, %v584
    %v587 = vunpack.c.l.s4 1966171168
    %v588 = vunpack.c.0.s8 %v587
    %v589 = vlaneseq
    %v590 = vshrl.u32 %v589, 7
    %v591 = vsub.s32 %v588, %v590
    %v592 = vrot.slane %v578, %v591
    %v593 = vcombine.high %v585, %v585
    %v594 = vcombine.high %v592, %v592
    %v596 = vunpack.c.l.s4 1966171168
    %v597 = vunpack.c.0.s8 %v596
    %v598 = vlaneseq
    %v599 = vshrl.u32 %v598, 7
    %v600 = vsub.s32 %v597, %v599
    %v601 = vrot.slane %v585, %v600
    %v603 = vunpack.c.l.s4 1966171168
    %v604 = vunpack.c.0.s8 %v603
    %v605 = vlaneseq
    %v606 = vshrl.u32 %v605, 7
    %v607 = vsub.s32 %v604, %v606
    %v608 = vrot.slane %v592, %v607
    %v610 = vunpack.c.l.s4 1966171168
    %v611 = vunpack.c.0.s8 %v610
    %v612 = vlaneseq
    %v613 = vshrl.u32 %v612, 7
    %v614 = vsub.s32 %v611, %v613
    %v615 = vrot.slane %v593, %v614
    %v617 = vunpack.c.l.s4 1966171168
    %v618 = vunpack.c.0.s8 %v617
    %v619 = vlaneseq
    %v620 = vshrl.u32 %v619, 7
    %v621 = vsub.s32 %v618, %v620
    %v622 = vrot.slane %v594, %v621
    %v623 = vcombine.high %v601, %v601
    %v624 = vcombine.high %v608, %v608
    %v625 = vcombine.high %v615, %v615
    %v626 = vcombine.high %v622, %v622
    %635 = vst [vmem:[#allocation2] sm:$0x1] %v601
    %636 = vst [vmem:[#allocation2 + $0x1] sm:$0x1] %v615
    %637 = vst [vmem:[#allocation2 + $0x2] sm:$0x1] %v623
    %638 = vst [vmem:[#allocation2 + $0x3] sm:$0x1] %v625
    %639 = vst [vmem:[#allocation2 + $0x4] sm:$0x1] %v608
    %640 = vst [vmem:[#allocation2 + $0x5] sm:$0x1] %v622
    %641 = vst [vmem:[#allocation2 + $0x6] sm:$0x1] %v624
    %642 = vst [vmem:[#allocation2 + $0x7] sm:$0x1] %v626
    // Predicated region
    $region14: #{resnet_forward.18} parent=1 // pred_check
      _
    $region15: #{resnet_forward.18} parent=1 // pred_check_branch
      %644 = sbr.rel (0) target = $region17
    $region16: #{resnet_forward.18} parent=1 // pred_region
      // Predicated region
      $region18: #{resnet_forward.18} parent=16 // pred_check
        _
      $region19: #{resnet_forward.18} parent=16 // pred_check_branch
        %646 = sbr.rel (0) target = $region21
      $region20: #{resnet_forward.18} parent=16 // pred_region
        // Predicated region
        $region22: #{resnet_forward.18} parent=20 // pred_check
          _
        $region23: #{resnet_forward.18} parent=20 // pred_check_branch
          %648 = sbr.rel target = $region25
        $region24: #{resnet_forward.18} parent=20 // pred_region
          // Predicated region
          $region37: #{resnet_forward.18} parent=24 // pred_check
            _
          $region38: #{resnet_forward.18} parent=24 // pred_check_branch
            %663 = sbr.rel (0) target = $region40
          $region39: #{resnet_forward.18} parent=24 // pred_region
            loop: start=0, step=1, limit=1
            $region41: #{resnet_forward.18} parent=39 // loop_pre_header
              _
            $region42: #{resnet_forward.18} parent=39 // loop_header
              %s666 = sphi 0, %s670
              %p667 = scmp.ge.s32.totalorder %s666, 1
              %s671 = sphi [#allocation2], [#allocation2]
              %s672 = sphi %s3, %s3
            $region43: #{resnet_forward.18} parent=39 // loop_header_branch
              %669 = sbr.rel (%p667) target = $region47
            $region44: #{resnet_forward.18} parent=39 // loop_body
              %v673 = vld [vmem:[%s671] sm:$0x1]
              %674 = vst [vmem:[%s672] sm:$0x1] %v673
            $region45: #{resnet_forward.18} parent=39 // loop_footer
              %s670 = sadd.s32 1, %s666
            $region46: #{resnet_forward.18} parent=39 // loop_footer_branch
              %665 = sbr.rel target = $region42
            $region47: #{resnet_forward.18} parent=39 // loop_exit
              _
          $region40: #{resnet_forward.18} parent=24 // pred_fallthru
            _
        $region25: #{resnet_forward.18} parent=20 // pred_fallthru
          _
        // Predicated region
        $region26: #{resnet_forward.18} parent=20 // pred_check
          _
        $region27: #{resnet_forward.18} parent=20 // pred_check_branch
          %650 = sbr.rel (0) target = $region29
        $region28: #{resnet_forward.18} parent=20 // pred_region
          loop: start=0, step=1, limit=1
          $region30: #{resnet_forward.18} parent=28 // loop_pre_header
            _
          $region31: #{resnet_forward.18} parent=28 // loop_header
            %s653 = sphi 0, %s657
            %p654 = scmp.ge.s32.totalorder %s653, 1
            %s658 = sphi [#allocation2], [#allocation2]
            %s659 = sphi %s3, %s3
          $region32: #{resnet_forward.18} parent=28 // loop_header_branch
            %656 = sbr.rel (%p654) target = $region36
          $region33: #{resnet_forward.18} parent=28 // loop_body
            %v660 = vld [vmem:[%s658] sm:$0x1]
            %661 = vst [vmem:[%s659] sm:$0x1] %v660
          $region34: #{resnet_forward.18} parent=28 // loop_footer
            %s657 = sadd.s32 1, %s653
          $region35: #{resnet_forward.18} parent=28 // loop_footer_branch
            %652 = sbr.rel target = $region31
          $region36: #{resnet_forward.18} parent=28 // loop_exit
            _
        $region29: #{resnet_forward.18} parent=20 // pred_fallthru
          _
      $region21: #{resnet_forward.18} parent=16 // pred_fallthru
        _
      %675 = vnop
    $region17: #{resnet_forward.18} parent=1 // pred_fallthru
      _
    // Predicated region
    $region48: #{resnet_forward.18} parent=1 // pred_check
      _
    $region49: #{resnet_forward.18} parent=1 // pred_check_branch
      %677 = sbr.rel (0) target = $region51
    $region50: #{resnet_forward.18} parent=1 // pred_region
      _
    $region51: #{resnet_forward.18} parent=1 // pred_fallthru
      _

// kernel: resnet_forward.17
$region0: #{resnet_forward.17}
  #allocation0 [shape = 'u32[]', space=smem, size = 0x4, offset = 0x4, fixed_abs, tag = 'smem constant byte address 0x4 - core index']
  #allocation1 [shape = 'u32[144,128]{1,0:T(1,128)}', space=vmem, size = 0x12000, scoped, tag = 'internal scratch']
  %s0 = inlined_call_operand.vmem [shape: bf16[8,608], index: 0, kind: input, shape index: {}]
  %s1 = inlined_call_operand.vmem [shape: bf16[608,128], index: 1, kind: input, shape index: {}]
  %s2 = inlined_call_operand.vmem [shape: f32[1,128], index: 2, kind: input, shape index: {}]
  %s3 = inlined_call_operand.vmem [shape: bf16[8,128], index: 3, kind: output, shape index: {}]
  %s4 = sld [smem:[#allocation0]]
  $region52: #{resnet_forward.17} parent=0
    _
  %s6 = ssub.s32 1, %s4
  %s7 = scalar_select 0, %s6, %s4
  $region1: #{resnet_forward.17} parent=0
    #allocation2 [shape = 'u8[4096]{0}', space=vmem, size = 0x1000, scoped, tag = 'output window, operand 0, single buffered']
    // Predicated region
    $region2: #{resnet_forward.17} parent=1 // pred_check
      _
    $region3: #{resnet_forward.17} parent=1 // pred_check_branch
      %9 = sbr.rel (0) target = $region5
    $region4: #{resnet_forward.17} parent=1 // pred_region
      _
    $region5: #{resnet_forward.17} parent=1 // pred_fallthru
      _
    // Predicated region
    $region6: #{resnet_forward.17} parent=1 // pred_check
      _
    $region7: #{resnet_forward.17} parent=1 // pred_check_branch
      %11 = sbr.rel (0) target = $region9
    $region8: #{resnet_forward.17} parent=1 // pred_region
      _
    $region9: #{resnet_forward.17} parent=1 // pred_fallthru
      _
    // Predicated region
    $region10: #{resnet_forward.17} parent=1 // pred_check
      _
    $region11: #{resnet_forward.17} parent=1 // pred_check_branch
      %13 = sbr.rel (0) target = $region13
    $region12: #{resnet_forward.17} parent=1 // pred_region
      _
    $region13: #{resnet_forward.17} parent=1 // pred_fallthru
      _
    %v15 = vld [vmem:[%s0] sm:$0xff]
    %v16 = vld [vmem:[%s0 + $0x8] sm:$0xff]
    %v17 = vld [vmem:[%s0 + $0x10] sm:$0xf]
    %v18 = vld [vmem:[%s0 + $0x14] sm:$0xff]
    %v19 = vld [vmem:[%s0 + $0x1c] sm:$0xff]
    %v20 = vld [vmem:[%s0 + $0x24] sm:$0xf]
    %v21 = vld [vmem:[%s1] sm:$0xf]
    %v22 = vld [vmem:[%s1 + $0x4] sm:$0xf]
    %v23 = vld [vmem:[%s1 + $0x8] sm:$0xf]
    %v24 = vld [vmem:[%s1 + $0xc] sm:$0xf]
    %v25 = vld [vmem:[%s1 + $0x10] sm:$0xf]
    %v26 = vld [vmem:[%s1 + $0x14] sm:$0xf]
    %v27 = vld [vmem:[%s1 + $0x18] sm:$0xf]
    %v28 = vld [vmem:[%s1 + $0x1c] sm:$0xf]
    %v29 = vld [vmem:[%s1 + $0x20] sm:$0xf]
    %v30 = vld [vmem:[%s1 + $0x24] sm:$0xf]
    %v31 = vld [vmem:[%s1 + $0x28] sm:$0xf]
    %v32 = vld [vmem:[%s1 + $0x2c] sm:$0xf]
    %v33 = vld [vmem:[%s1 + $0x30] sm:$0xf]
    %v34 = vld [vmem:[%s1 + $0x34] sm:$0xf]
    %v35 = vld [vmem:[%s1 + $0x38] sm:$0xf]
    %v36 = vld [vmem:[%s1 + $0x3c] sm:$0xf]
    %v37 = vld [vmem:[%s1 + $0x40] sm:$0xf]
    %v38 = vld [vmem:[%s1 + $0x44] sm:$0xf]
    %v39 = vld [vmem:[%s1 + $0x48] sm:$0xf]
    %v40 = vld [vmem:[%s1 + $0x4c] sm:$0xf]
    %v41 = vld [vmem:[%s1 + $0x50] sm:$0xf]
    %v42 = vld [vmem:[%s1 + $0x54] sm:$0xf]
    %v43 = vld [vmem:[%s1 + $0x58] sm:$0xf]
    %v44 = vld [vmem:[%s1 + $0x5c] sm:$0xf]
    %v45 = vld [vmem:[%s1 + $0x60] sm:$0xf]
    %v46 = vld [vmem:[%s1 + $0x64] sm:$0xf]
    %v47 = vld [vmem:[%s1 + $0x68] sm:$0xf]
    %v48 = vld [vmem:[%s1 + $0x6c] sm:$0xf]
    %v49 = vld [vmem:[%s1 + $0x70] sm:$0xf]
    %v50 = vld [vmem:[%s1 + $0x74] sm:$0xf]
    %v51 = vld [vmem:[%s1 + $0x78] sm:$0xf]
    %v52 = vld [vmem:[%s1 + $0x7c] sm:$0xf]
    %v53 = vld [vmem:[%s1 + $0x80] sm:$0xf]
    %v54 = vld [vmem:[%s1 + $0x84] sm:$0xf]
    %v55 = vld [vmem:[%s1 + $0x88] sm:$0xf]
    %v56 = vld [vmem:[%s1 + $0x8c] sm:$0xf]
    %v57 = vld [vmem:[%s1 + $0x90] sm:$0xf]
    %v58 = vld [vmem:[%s1 + $0x94] sm:$0xf]
    %v59 = vld [vmem:[%s1 + $0x98] sm:$0xf]
    %v60 = vld [vmem:[%s1 + $0x9c] sm:$0xf]
    %v61 = vld [vmem:[%s1 + $0xa0] sm:$0xf]
    %v62 = vld [vmem:[%s1 + $0xa4] sm:$0xf]
    %v63 = vld [vmem:[%s1 + $0xa8] sm:$0xf]
    %v64 = vld [vmem:[%s1 + $0xac] sm:$0xf]
    %v65 = vld [vmem:[%s1 + $0xb0] sm:$0xf]
    %v66 = vld [vmem:[%s1 + $0xb4] sm:$0xf]
    %v67 = vld [vmem:[%s1 + $0xb8] sm:$0xf]
    %v68 = vld [vmem:[%s1 + $0xbc] sm:$0xf]
    %v69 = vld [vmem:[%s1 + $0xc0] sm:$0xf]
    %v70 = vld [vmem:[%s1 + $0xc4] sm:$0xf]
    %v71 = vld [vmem:[%s1 + $0xc8] sm:$0xf]
    %v72 = vld [vmem:[%s1 + $0xcc] sm:$0xf]
    %v73 = vld [vmem:[%s1 + $0xd0] sm:$0xf]
    %v74 = vld [vmem:[%s1 + $0xd4] sm:$0xf]
    %v75 = vld [vmem:[%s1 + $0xd8] sm:$0xf]
    %v76 = vld [vmem:[%s1 + $0xdc] sm:$0xf]
    %v77 = vld [vmem:[%s1 + $0xe0] sm:$0xf]
    %v78 = vld [vmem:[%s1 + $0xe4] sm:$0xf]
    %v79 = vld [vmem:[%s1 + $0xe8] sm:$0xf]
    %v80 = vld [vmem:[%s1 + $0xec] sm:$0xf]
    %v81 = vld [vmem:[%s1 + $0xf0] sm:$0xf]
    %v82 = vld [vmem:[%s1 + $0xf4] sm:$0xf]
    %v83 = vld [vmem:[%s1 + $0xf8] sm:$0xf]
    %v84 = vld [vmem:[%s1 + $0xfc] sm:$0xf]
    %v85 = vld [vmem:[%s1 + $0x100] sm:$0xf]
    %v86 = vld [vmem:[%s1 + $0x104] sm:$0xf]
    %v87 = vld [vmem:[%s1 + $0x108] sm:$0xf]
    %v88 = vld [vmem:[%s1 + $0x10c] sm:$0xf]
    %v89 = vld [vmem:[%s1 + $0x110] sm:$0xf]
    %v90 = vld [vmem:[%s1 + $0x114] sm:$0xf]
    %v91 = vld [vmem:[%s1 + $0x118] sm:$0xf]
    %v92 = vld [vmem:[%s1 + $0x11c] sm:$0xf]
    %v93 = vld [vmem:[%s1 + $0x120] sm:$0xf]
    %v94 = vld [vmem:[%s1 + $0x124] sm:$0xf]
    %v95 = vld [vmem:[%s1 + $0x128] sm:$0xf]
    %v96 = vld [vmem:[%s1 + $0x12c] sm:$0xf]
    %v97 = vld [vmem:[%s2] sm:$0x1]
    %v99 = vlaneseq
    %v100 = vshrl.u32 %v99, 7
    %v101 = vsub.s32 0, %v100
    %v102 = vrot.slane %v97, %v101
    %v110 = vunpack.c.l.b16 %v15
    %v111 = vunpack.c.h.b16 %v15
    %v112 = vunpack.c.l.b16 %v16
    %v113 = vunpack.c.h.b16 %v16
    %v114 = vunpack.c.l.b16 %v17
    %v115 = vunpack.c.l.b16 %v18
    %v116 = vunpack.c.h.b16 %v18
    %v117 = vunpack.c.l.b16 %v19
    %v118 = vunpack.c.h.b16 %v19
    %v119 = vunpack.c.l.b16 %v20
    %v120 = vpack.c.b16 %v115, %v110
    %v121 = vpack.c.b16 %v116, %v111
    %v122 = vpack.c.b16 %v117, %v112
    %v123 = vpack.c.b16 %v118, %v113
    %v124 = vpack.c.b16 %v119, %v114
    %v205 = vunpack.c.l.b16 %v21
    %v206 = vunpack.c.l.b16 %v22
    %v207 = vunpack.c.l.b16 %v23
    %v208 = vunpack.c.l.b16 %v24
    %v209 = vunpack.c.l.b16 %v25
    %v210 = vunpack.c.l.b16 %v26
    %v211 = vunpack.c.l.b16 %v27
    %v212 = vunpack.c.l.b16 %v28
    %v213 = vunpack.c.l.b16 %v29
    %v214 = vunpack.c.l.b16 %v30
    %v215 = vunpack.c.l.b16 %v31
    %v216 = vunpack.c.l.b16 %v32
    %v217 = vunpack.c.l.b16 %v33
    %v218 = vunpack.c.l.b16 %v34
    %v219 = vunpack.c.l.b16 %v35
    %v220 = vunpack.c.l.b16 %v36
    %v221 = vunpack.c.l.b16 %v37
    %v222 = vunpack.c.l.b16 %v38
    %v223 = vunpack.c.l.b16 %v39
    %v224 = vunpack.c.l.b16 %v40
    %v225 = vunpack.c.l.b16 %v41
    %v226 = vunpack.c.l.b16 %v42
    %v227 = vunpack.c.l.b16 %v43
    %v228 = vunpack.c.l.b16 %v44
    %v229 = vunpack.c.l.b16 %v45
    %v230 = vunpack.c.l.b16 %v46
    %v231 = vunpack.c.l.b16 %v47
    %v232 = vunpack.c.l.b16 %v48
    %v233 = vunpack.c.l.b16 %v49
    %v234 = vunpack.c.l.b16 %v50
    %v235 = vunpack.c.l.b16 %v51
    %v236 = vunpack.c.l.b16 %v52
    %v237 = vunpack.c.l.b16 %v53
    %v238 = vunpack.c.l.b16 %v54
    %v239 = vunpack.c.l.b16 %v55
    %v240 = vunpack.c.l.b16 %v56
    %v241 = vunpack.c.l.b16 %v57
    %v242 = vunpack.c.l.b16 %v58
    %v243 = vunpack.c.l.b16 %v59
    %v244 = vunpack.c.l.b16 %v60
    %v245 = vunpack.c.l.b16 %v61
    %v246 = vunpack.c.l.b16 %v62
    %v247 = vunpack.c.l.b16 %v63
    %v248 = vunpack.c.l.b16 %v64
    %v249 = vunpack.c.l.b16 %v65
    %v250 = vunpack.c.l.b16 %v66
    %v251 = vunpack.c.l.b16 %v67
    %v252 = vunpack.c.l.b16 %v68
    %v253 = vunpack.c.l.b16 %v69
    %v254 = vunpack.c.l.b16 %v70
    %v255 = vunpack.c.l.b16 %v71
    %v256 = vunpack.c.l.b16 %v72
    %v257 = vunpack.c.l.b16 %v73
    %v258 = vunpack.c.l.b16 %v74
    %v259 = vunpack.c.l.b16 %v75
    %v260 = vunpack.c.l.b16 %v76
    %v261 = vunpack.c.l.b16 %v77
    %v262 = vunpack.c.l.b16 %v78
    %v263 = vunpack.c.l.b16 %v79
    %v264 = vunpack.c.l.b16 %v80
    %v265 = vunpack.c.l.b16 %v81
    %v266 = vunpack.c.l.b16 %v82
    %v267 = vunpack.c.l.b16 %v83
    %v268 = vunpack.c.l.b16 %v84
    %v269 = vunpack.c.l.b16 %v85
    %v270 = vunpack.c.l.b16 %v86
    %v271 = vunpack.c.l.b16 %v87
    %v272 = vunpack.c.l.b16 %v88
    %v273 = vunpack.c.l.b16 %v89
    %v274 = vunpack.c.l.b16 %v90
    %v275 = vunpack.c.l.b16 %v91
    %v276 = vunpack.c.l.b16 %v92
    %v277 = vunpack.c.l.b16 %v93
    %v278 = vunpack.c.l.b16 %v94
    %v279 = vunpack.c.l.b16 %v95
    %v280 = vunpack.c.l.b16 %v96
    %v281 = vpack.c.b16 %v206, %v205
    %v282 = vpack.c.b16 %v208, %v207
    %v283 = vpack.c.b16 %v210, %v209
    %v284 = vpack.c.b16 %v212, %v211
    %v285 = vpack.c.b16 %v214, %v213
    %v286 = vpack.c.b16 %v216, %v215
    %v287 = vpack.c.b16 %v218, %v217
    %v288 = vpack.c.b16 %v220, %v219
    %v289 = vpack.c.b16 %v222, %v221
    %v290 = vpack.c.b16 %v224, %v223
    %v291 = vpack.c.b16 %v226, %v225
    %v292 = vpack.c.b16 %v228, %v227
    %v293 = vpack.c.b16 %v230, %v229
    %v294 = vpack.c.b16 %v232, %v231
    %v295 = vpack.c.b16 %v234, %v233
    %v296 = vpack.c.b16 %v236, %v235
    %v297 = vpack.c.b16 %v238, %v237
    %v298 = vpack.c.b16 %v240, %v239
    %v299 = vpack.c.b16 %v242, %v241
    %v300 = vpack.c.b16 %v244, %v243
    %v301 = vpack.c.b16 %v246, %v245
    %v302 = vpack.c.b16 %v248, %v247
    %v303 = vpack.c.b16 %v250, %v249
    %v304 = vpack.c.b16 %v252, %v251
    %v305 = vpack.c.b16 %v254, %v253
    %v306 = vpack.c.b16 %v256, %v255
    %v307 = vpack.c.b16 %v258, %v257
    %v308 = vpack.c.b16 %v260, %v259
    %v309 = vpack.c.b16 %v262, %v261
    %v310 = vpack.c.b16 %v264, %v263
    %v311 = vpack.c.b16 %v266, %v265
    %v312 = vpack.c.b16 %v268, %v267
    %v313 = vpack.c.b16 %v270, %v269
    %v314 = vpack.c.b16 %v272, %v271
    %v315 = vpack.c.b16 %v274, %v273
    %v316 = vpack.c.b16 %v276, %v275
    %v317 = vpack.c.b16 %v278, %v277
    %v318 = vpack.c.b16 %v280, %v279
    %vm357 = vcmask 785408
    %v359 = vsel %vm357, %v124, 0
    %361 = vmatprep.subr.bf16.mxu0 0
    %362 = vmatpush1.bf16.msra.mxu0 %v281
    %363 = vmatprep.subr.bf16.mxu0 0
    %364 = vmatpush1.bf16.msra.mxu0 %v282
    %365 = vmatprep.subr.bf16.mxu0 0
    %366 = vmatpush1.bf16.msra.mxu0 %v283
    %367 = vmatprep.subr.bf16.mxu0 0
    %368 = vmatpush1.bf16.msra.mxu0 %v284
    %369 = vmatprep.subr.bf16.mxu0 0
    %370 = vmatpush1.bf16.msra.mxu0 %v285
    %371 = vmatprep.subr.bf16.mxu0 0
    %372 = vmatpush1.bf16.msra.mxu0 %v286
    %373 = vmatprep.subr.bf16.mxu0 0
    %374 = vmatpush1.bf16.msra.mxu0 %v287
    %375 = vmatprep.subr.bf16.mxu0 0
    %376 = vmatpush1.bf16.msra.mxu0 %v288
    %377 = vmatprep.subr.bf16.mxu0 0
    %378 = vmatpush1.bf16.msra.mxu0 %v289
    %379 = vmatprep.subr.bf16.mxu0 0
    %380 = vmatpush1.bf16.msra.mxu0 %v290
    %381 = vmatprep.subr.bf16.mxu0 0
    %382 = vmatpush1.bf16.msra.mxu0 %v291
    %383 = vmatprep.subr.bf16.mxu0 0
    %384 = vmatpush1.bf16.msra.mxu0 %v292
    %385 = vmatprep.subr.bf16.mxu0 0
    %386 = vmatpush1.bf16.msra.mxu0 %v293
    %387 = vmatprep.subr.bf16.mxu0 0
    %388 = vmatpush1.bf16.msra.mxu0 %v294
    %389 = vmatprep.subr.bf16.mxu0 0
    %390 = vmatpush1.bf16.msra.mxu0 %v295
    %391 = vmatprep.subr.bf16.mxu0 0
    %392 = vmatpush1.bf16.msra.mxu0 %v296
    %393 = vmatprep.mubr.bf16.mxu0 %v121
    %394 = vmatmul.mubr.bf16.gmra.mrb[0].mxu0 %v120
    %v395 = vpop.f32.mrb[0].mxu0
    %v396 = vadd.f32 %v102, %v395
    %v397 = vpop.f32.mrb[0].mxu0
    %v398 = vpop.f32.mrb[0].mxu0
    %v399 = vadd.f32 %v102, %v398
    %v400 = vpop.f32.mrb[0].mxu0
    %401 = vdwg.mxu0
    %402 = vmatprep.subr.bf16.mxu0 0
    %403 = vmatpush1.bf16.msra.mxu0 %v297
    %404 = vmatprep.subr.bf16.mxu0 0
    %405 = vmatpush1.bf16.msra.mxu0 %v298
    %406 = vmatprep.subr.bf16.mxu0 0
    %407 = vmatpush1.bf16.msra.mxu0 %v299
    %408 = vmatprep.subr.bf16.mxu0 0
    %409 = vmatpush1.bf16.msra.mxu0 %v300
    %410 = vmatprep.subr.bf16.mxu0 0
    %411 = vmatpush1.bf16.msra.mxu0 %v301
    %412 = vmatprep.subr.bf16.mxu0 0
    %413 = vmatpush1.bf16.msra.mxu0 %v302
    %414 = vmatprep.subr.bf16.mxu0 0
    %415 = vmatpush1.bf16.msra.mxu0 %v303
    %416 = vmatprep.subr.bf16.mxu0 0
    %417 = vmatpush1.bf16.msra.mxu0 %v304
    %418 = vmatprep.subr.bf16.mxu0 0
    %419 = vmatpush1.bf16.msra.mxu0 %v305
    %420 = vmatprep.subr.bf16.mxu0 0
    %421 = vmatpush1.bf16.msra.mxu0 %v306
    %422 = vmatprep.subr.bf16.mxu0 0
    %423 = vmatpush1.bf16.msra.mxu0 %v307
    %424 = vmatprep.subr.bf16.mxu0 0
    %425 = vmatpush1.bf16.msra.mxu0 %v308
    %426 = vmatprep.subr.bf16.mxu0 0
    %427 = vmatpush1.bf16.msra.mxu0 %v309
    %428 = vmatprep.subr.bf16.mxu0 0
    %429 = vmatpush1.bf16.msra.mxu0 %v310
    %430 = vmatprep.subr.bf16.mxu0 0
    %431 = vmatpush1.bf16.msra.mxu0 %v311
    %432 = vmatprep.subr.bf16.mxu0 0
    %433 = vmatpush1.bf16.msra.mxu0 %v312
    %434 = vmatprep.mubr.bf16.mxu0 %v123
    %435 = vmatmul.mubr.bf16.gmra.mrb[0].mxu0 %v122
    %v436 = vpop.f32.mrb[0].mxu0
    %v437 = vadd.f32 %v396, %v436
    %v438 = vpop.f32.mrb[0].mxu0
    %v439 = vpop.f32.mrb[0].mxu0
    %v440 = vadd.f32 %v399, %v439
    %v441 = vpop.f32.mrb[0].mxu0
    %442 = vdwg.mxu0
    %443 = vmatprep.subr.bf16.mxu0 0
    %444 = vmatpush1.bf16.msra.mxu0 %v313
    %445 = vmatprep.subr.bf16.mxu0 0
    %446 = vmatpush1.bf16.msra.mxu0 %v314
    %447 = vmatprep.subr.bf16.mxu0 0
    %448 = vmatpush1.bf16.msra.mxu0 %v315
    %449 = vmatprep.subr.bf16.mxu0 0
    %450 = vmatpush1.bf16.msra.mxu0 %v316
    %451 = vmatprep.subr.bf16.mxu0 0
    %452 = vmatpush1.bf16.msra.mxu0 %v317
    %453 = vmatprep.subr.bf16.mxu0 0
    %454 = vmatpush1.bf16.msra.mxu0 %v318
    %455 = vmatprep.subr.bf16.mxu0 0
    %456 = vmatpush1.bf16.msra.mxu0 0
    %457 = vmatprep.subr.bf16.mxu0 0
    %458 = vmatpush1.bf16.msra.mxu0 0
    %459 = vmatprep.subr.bf16.mxu0 0
    %460 = vmatpush1.bf16.msra.mxu0 0
    %461 = vmatprep.subr.bf16.mxu0 0
    %462 = vmatpush1.bf16.msra.mxu0 0
    %463 = vmatprep.subr.bf16.mxu0 0
    %464 = vmatpush1.bf16.msra.mxu0 0
    %465 = vmatprep.subr.bf16.mxu0 0
    %466 = vmatpush1.bf16.msra.mxu0 0
    %467 = vmatprep.subr.bf16.mxu0 0
    %468 = vmatpush1.bf16.msra.mxu0 0
    %469 = vmatprep.subr.bf16.mxu0 0
    %470 = vmatpush1.bf16.msra.mxu0 0
    %471 = vmatprep.subr.bf16.mxu0 0
    %472 = vmatpush1.bf16.msra.mxu0 0
    %473 = vmatprep.subr.bf16.mxu0 0
    %474 = vmatpush1.bf16.msra.mxu0 0
    %475 = vmatprep.mubr.bf16.mxu0 0
    %476 = vmatmul.mubr.bf16.gmra.mrb[0].mxu0 %v359
    %v477 = vpop.f32.mrb[0].mxu0
    %v478 = vadd.f32 %v437, %v477
    %v479 = vpop.f32.mrb[0].mxu0
    %v480 = vpop.f32.mrb[0].mxu0
    %v481 = vadd.f32 %v440, %v480
    %v482 = vpop.f32.mrb[0].mxu0
    %483 = vdwg.mxu0
    %v484 = vmax.f32 %v478, 0.0
    %v485 = vmax.f32 %v481, 0.0
    %v486 = vpack.c.bf16 %v485, %v484
    %v488 = vunpack.c.l.b16 %v486
    %v489 = vunpack.c.h.b16 %v486
    %v490 = vpack.c.b16 %v488, %v488
    %v491 = vpack.c.b16 %v489, %v489
    %494 = vst [vmem:[#allocation2] sm:$0xf] %v490
    %495 = vst [vmem:[#allocation2 + $0x4] sm:$0xf] %v491
    // Predicated region
    $region14: #{resnet_forward.17} parent=1 // pred_check
      _
    $region15: #{resnet_forward.17} parent=1 // pred_check_branch
      %497 = sbr.rel (0) target = $region17
    $region16: #{resnet_forward.17} parent=1 // pred_region
      // Predicated region
      $region18: #{resnet_forward.17} parent=16 // pred_check
        _
      $region19: #{resnet_forward.17} parent=16 // pred_check_branch
        %499 = sbr.rel (0) target = $region21
      $region20: #{resnet_forward.17} parent=16 // pred_region
        // Predicated region
        $region22: #{resnet_forward.17} parent=20 // pred_check
          _
        $region23: #{resnet_forward.17} parent=20 // pred_check_branch
          %501 = sbr.rel target = $region25
        $region24: #{resnet_forward.17} parent=20 // pred_region
          // Predicated region
          $region37: #{resnet_forward.17} parent=24 // pred_check
            _
          $region38: #{resnet_forward.17} parent=24 // pred_check_branch
            %516 = sbr.rel (0) target = $region40
          $region39: #{resnet_forward.17} parent=24 // pred_region
            loop: start=0, step=1, limit=1
            $region41: #{resnet_forward.17} parent=39 // loop_pre_header
              _
            $region42: #{resnet_forward.17} parent=39 // loop_header
              %s519 = sphi 0, %s523
              %p520 = scmp.ge.s32.totalorder %s519, 1
              %s524 = sphi [#allocation2], [#allocation2]
              %s525 = sphi %s3, %s3
            $region43: #{resnet_forward.17} parent=39 // loop_header_branch
              %522 = sbr.rel (%p520) target = $region47
            $region44: #{resnet_forward.17} parent=39 // loop_body
              %v526 = vld [vmem:[%s524] sm:$0xf]
              %527 = vst [vmem:[%s525] sm:$0xf] %v526
            $region45: #{resnet_forward.17} parent=39 // loop_footer
              %s523 = sadd.s32 1, %s519
            $region46: #{resnet_forward.17} parent=39 // loop_footer_branch
              %518 = sbr.rel target = $region42
            $region47: #{resnet_forward.17} parent=39 // loop_exit
              _
          $region40: #{resnet_forward.17} parent=24 // pred_fallthru
            _
        $region25: #{resnet_forward.17} parent=20 // pred_fallthru
          _
        // Predicated region
        $region26: #{resnet_forward.17} parent=20 // pred_check
          _
        $region27: #{resnet_forward.17} parent=20 // pred_check_branch
          %503 = sbr.rel (0) target = $region29
        $region28: #{resnet_forward.17} parent=20 // pred_region
          loop: start=0, step=1, limit=1
          $region30: #{resnet_forward.17} parent=28 // loop_pre_header
            _
          $region31: #{resnet_forward.17} parent=28 // loop_header
            %s506 = sphi 0, %s510
            %p507 = scmp.ge.s32.totalorder %s506, 1
            %s511 = sphi [#allocation2], [#allocation2]
            %s512 = sphi %s3, %s3
          $region32: #{resnet_forward.17} parent=28 // loop_header_branch
            %509 = sbr.rel (%p507) target = $region36
          $region33: #{resnet_forward.17} parent=28 // loop_body
            %v513 = vld [vmem:[%s511] sm:$0xf]
            %514 = vst [vmem:[%s512] sm:$0xf] %v513
          $region34: #{resnet_forward.17} parent=28 // loop_footer
            %s510 = sadd.s32 1, %s506
          $region35: #{resnet_forward.17} parent=28 // loop_footer_branch
            %505 = sbr.rel target = $region31
          $region36: #{resnet_forward.17} parent=28 // loop_exit
            _
        $region29: #{resnet_forward.17} parent=20 // pred_fallthru
          _
      $region21: #{resnet_forward.17} parent=16 // pred_fallthru
        _
      %528 = vnop
    $region17: #{resnet_forward.17} parent=1 // pred_fallthru
      _
    // Predicated region
    $region48: #{resnet_forward.17} parent=1 // pred_check
      _
    $region49: #{resnet_forward.17} parent=1 // pred_check_branch
      %530 = sbr.rel (0) target = $region51
    $region50: #{resnet_forward.17} parent=1 // pred_region
      _
    $region51: #{resnet_forward.17} parent=1 // pred_fallthru
      _

// kernel: resnet_forward.19
$region0: #{resnet_forward.19}
  #allocation0 [shape = 'u32[]', space=smem, size = 0x4, offset = 0x4, fixed_abs, tag = 'smem constant byte address 0x4 - core index']
  #allocation1 [shape = 'u32[144,128]{1,0:T(1,128)}', space=vmem, size = 0x12000, scoped, tag = 'internal scratch']
  %s0 = inlined_call_operand.vmem [shape: bf16[2,1216], index: 0, kind: input, shape index: {}]
  %s1 = inlined_call_operand.vmem [shape: bf16[1216,128], index: 1, kind: input, shape index: {}]
  %s2 = inlined_call_operand.vmem [shape: f32[1,128], index: 2, kind: input, shape index: {}]
  %s3 = inlined_call_operand.vmem [shape: bf16[128,128], index: 3, kind: input, shape index: {}]
  %s4 = inlined_call_operand.vmem [shape: f32[1,128], index: 4, kind: input, shape index: {}]
  %s5 = inlined_call_operand.hbm [shape: f32[2,128], index: 5, kind: output, shape index: {}]
  %s6 = sld [smem:[#allocation0]]
  $region30: #{resnet_forward.19} parent=0
    _
  %s8 = ssub.s32 1, %s6
  %s9 = scalar_select 0, %s8, %s6
  $region1: #{resnet_forward.19} parent=0
    #allocation2 [shape = 'u8[8192]{0}', space=vmem, size = 0x2000, scoped, tag = 'output window, operand 0, single buffered']
    #allocation3 [shape = 's32[1]{0}', space=sflag, size = 0x4, scoped, tag = 'scoped memory for resnet_forward.19']
    %10 = vsyncpa [#allocation3], 0
    // Predicated region
    $region2: #{resnet_forward.19} parent=1 // pred_check
      _
    $region3: #{resnet_forward.19} parent=1 // pred_check_branch
      %12 = sbr.rel (0) target = $region5
    $region4: #{resnet_forward.19} parent=1 // pred_region
      _
    $region5: #{resnet_forward.19} parent=1 // pred_fallthru
      _
    // Predicated region
    $region6: #{resnet_forward.19} parent=1 // pred_check
      _
    $region7: #{resnet_forward.19} parent=1 // pred_check_branch
      %14 = sbr.rel (0) target = $region9
    $region8: #{resnet_forward.19} parent=1 // pred_region
      _
    $region9: #{resnet_forward.19} parent=1 // pred_fallthru
      _
    // Predicated region
    $region10: #{resnet_forward.19} parent=1 // pred_check
      _
    $region11: #{resnet_forward.19} parent=1 // pred_check_branch
      %16 = sbr.rel (0) target = $region13
    $region12: #{resnet_forward.19} parent=1 // pred_region
      _
    $region13: #{resnet_forward.19} parent=1 // pred_fallthru
      _
    // Predicated region
    $region14: #{resnet_forward.19} parent=1 // pred_check
      _
    $region15: #{resnet_forward.19} parent=1 // pred_check_branch
      %18 = sbr.rel (0) target = $region17
    $region16: #{resnet_forward.19} parent=1 // pred_region
      _
    $region17: #{resnet_forward.19} parent=1 // pred_fallthru
      _
    // Predicated region
    $region18: #{resnet_forward.19} parent=1 // pred_check
      _
    $region19: #{resnet_forward.19} parent=1 // pred_check_branch
      %20 = sbr.rel (0) target = $region21
    $region20: #{resnet_forward.19} parent=1 // pred_region
      _
    $region21: #{resnet_forward.19} parent=1 // pred_fallthru
      _
    %v22 = vld [vmem:[%s0] sm:$0xff]
    %v23 = vld [vmem:[%s0 + $0x8] sm:$0x3]
    %v24 = vld [vmem:[%s0 + $0xa] sm:$0xff]
    %v25 = vld [vmem:[%s0 + $0x12] sm:$0x3]
    %v26 = vld [vmem:[%s0 + $0x14] sm:$0xff]
    %v27 = vld [vmem:[%s0 + $0x1c] sm:$0x3]
    %v28 = vld [vmem:[%s0 + $0x1e] sm:$0xff]
    %v29 = vld [vmem:[%s0 + $0x26] sm:$0x3]
    %v30 = vld [vmem:[%s0 + $0x28] sm:$0xff]
    %v31 = vld [vmem:[%s0 + $0x30] sm:$0x3]
    %v32 = vld [vmem:[%s0 + $0x32] sm:$0xff]
    %v33 = vld [vmem:[%s0 + $0x3a] sm:$0x3]
    %v34 = vld [vmem:[%s0 + $0x3c] sm:$0xff]
    %v35 = vld [vmem:[%s0 + $0x44] sm:$0x3]
    %v36 = vld [vmem:[%s0 + $0x46] sm:$0xff]
    %v37 = vld [vmem:[%s0 + $0x4e] sm:$0x3]
    %v38 = vld [vmem:[%s1] sm:$0xf]
    %v39 = vld [vmem:[%s1 + $0x4] sm:$0xf]
    %v40 = vld [vmem:[%s1 + $0x8] sm:$0xf]
    %v41 = vld [vmem:[%s1 + $0xc] sm:$0xf]
    %v42 = vld [vmem:[%s1 + $0x10] sm:$0xf]
    %v43 = vld [vmem:[%s1 + $0x14] sm:$0xf]
    %v44 = vld [vmem:[%s1 + $0x18] sm:$0xf]
    %v45 = vld [vmem:[%s1 + $0x1c] sm:$0xf]
    %v46 = vld [vmem:[%s1 + $0x20] sm:$0xf]
    %v47 = vld [vmem:[%s1 + $0x24] sm:$0xf]
    %v48 = vld [vmem:[%s1 + $0x28] sm:$0xf]
    %v49 = vld [vmem:[%s1 + $0x2c] sm:$0xf]
    %v50 = vld [vmem:[%s1 + $0x30] sm:$0xf]
    %v51 = vld [vmem:[%s1 + $0x34] sm:$0xf]
    %v52 = vld [vmem:[%s1 + $0x38] sm:$0xf]
    %v53 = vld [vmem:[%s1 + $0x3c] sm:$0xf]
    %v54 = vld [vmem:[%s1 + $0x40] sm:$0xf]
    %v55 = vld [vmem:[%s1 + $0x44] sm:$0xf]
    %v56 = vld [vmem:[%s1 + $0x48] sm:$0xf]
    %v57 = vld [vmem:[%s1 + $0x4c] sm:$0xf]
    %v58 = vld [vmem:[%s1 + $0x50] sm:$0xf]
    %v59 = vld [vmem:[%s1 + $0x54] sm:$0xf]
    %v60 = vld [vmem:[%s1 + $0x58] sm:$0xf]
    %v61 = vld [vmem:[%s1 + $0x5c] sm:$0xf]
    %v62 = vld [vmem:[%s1 + $0x60] sm:$0xf]
    %v63 = vld [vmem:[%s1 + $0x64] sm:$0xf]
    %v64 = vld [vmem:[%s1 + $0x68] sm:$0xf]
    %v65 = vld [vmem:[%s1 + $0x6c] sm:$0xf]
    %v66 = vld [vmem:[%s1 + $0x70] sm:$0xf]
    %v67 = vld [vmem:[%s1 + $0x74] sm:$0xf]
    %v68 = vld [vmem:[%s1 + $0x78] sm:$0xf]
    %v69 = vld [vmem:[%s1 + $0x7c] sm:$0xf]
    %v70 = vld [vmem:[%s1 + $0x80] sm:$0xf]
    %v71 = vld [vmem:[%s1 + $0x84] sm:$0xf]
    %v72 = vld [vmem:[%s1 + $0x88] sm:$0xf]
    %v73 = vld [vmem:[%s1 + $0x8c] sm:$0xf]
    %v74 = vld [vmem:[%s1 + $0x90] sm:$0xf]
    %v75 = vld [vmem:[%s1 + $0x94] sm:$0xf]
    %v76 = vld [vmem:[%s1 + $0x98] sm:$0xf]
    %v77 = vld [vmem:[%s1 + $0x9c] sm:$0xf]
    %v78 = vld [vmem:[%s1 + $0xa0] sm:$0xf]
    %v79 = vld [vmem:[%s1 + $0xa4] sm:$0xf]
    %v80 = vld [vmem:[%s1 + $0xa8] sm:$0xf]
    %v81 = vld [vmem:[%s1 + $0xac] sm:$0xf]
    %v82 = vld [vmem:[%s1 + $0xb0] sm:$0xf]
    %v83 = vld [vmem:[%s1 + $0xb4] sm:$0xf]
    %v84 = vld [vmem:[%s1 + $0xb8] sm:$0xf]
    %v85 = vld [vmem:[%s1 + $0xbc] sm:$0xf]
    %v86 = vld [vmem:[%s1 + $0xc0] sm:$0xf]
    %v87 = vld [vmem:[%s1 + $0xc4] sm:$0xf]
    %v88 = vld [vmem:[%s1 + $0xc8] sm:$0xf]
    %v89 = vld [vmem:[%s1 + $0xcc] sm:$0xf]
    %v90 = vld [vmem:[%s1 + $0xd0] sm:$0xf]
    %v91 = vld [vmem:[%s1 + $0xd4] sm:$0xf]
    %v92 = vld [vmem:[%s1 + $0xd8] sm:$0xf]
    %v93 = vld [vmem:[%s1 + $0xdc] sm:$0xf]
    %v94 = vld [vmem:[%s1 + $0xe0] sm:$0xf]
    %v95 = vld [vmem:[%s1 + $0xe4] sm:$0xf]
    %v96 = vld [vmem:[%s1 + $0xe8] sm:$0xf]
    %v97 = vld [vmem:[%s1 + $0xec] sm:$0xf]
    %v98 = vld [vmem:[%s1 + $0xf0] sm:$0xf]
    %v99 = vld [vmem:[%s1 + $0xf4] sm:$0xf]
    %v100 = vld [vmem:[%s1 + $0xf8] sm:$0xf]
    %v101 = vld [vmem:[%s1 + $0xfc] sm:$0xf]
    %v102 = vld [vmem:[%s1 + $0x100] sm:$0xf]
    %v103 = vld [vmem:[%s1 + $0x104] sm:$0xf]
    %v104 = vld [vmem:[%s1 + $0x108] sm:$0xf]
    %v105 = vld [vmem:[%s1 + $0x10c] sm:$0xf]
    %v106 = vld [vmem:[%s1 + $0x110] sm:$0xf]
    %v107 = vld [vmem:[%s1 + $0x114] sm:$0xf]
    %v108 = vld [vmem:[%s1 + $0x118] sm:$0xf]
    %v109 = vld [vmem:[%s1 + $0x11c] sm:$0xf]
    %v110 = vld [vmem:[%s1 + $0x120] sm:$0xf]
    %v111 = vld [vmem:[%s1 + $0x124] sm:$0xf]
    %v112 = vld [vmem:[%s1 + $0x128] sm:$0xf]
    %v113 = vld [vmem:[%s1 + $0x12c] sm:$0xf]
    %v114 = vld [vmem:[%s1 + $0x130] sm:$0xf]
    %v115 = vld [vmem:[%s1 + $0x134] sm:$0xf]
    %v116 = vld [vmem:[%s1 + $0x138] sm:$0xf]
    %v117 = vld [vmem:[%s1 + $0x13c] sm:$0xf]
    %v118 = vld [vmem:[%s1 + $0x140] sm:$0xf]
    %v119 = vld [vmem:[%s1 + $0x144] sm:$0xf]
    %v120 = vld [vmem:[%s1 + $0x148] sm:$0xf]
    %v121 = vld [vmem:[%s1 + $0x14c] sm:$0xf]
    %v122 = vld [vmem:[%s1 + $0x150] sm:$0xf]
    %v123 = vld [vmem:[%s1 + $0x154] sm:$0xf]
    %v124 = vld [vmem:[%s1 + $0x158] sm:$0xf]
    %v125 = vld [vmem:[%s1 + $0x15c] sm:$0xf]
    %v126 = vld [vmem:[%s1 + $0x160] sm:$0xf]
    %v127 = vld [vmem:[%s1 + $0x164] sm:$0xf]
    %v128 = vld [vmem:[%s1 + $0x168] sm:$0xf]
    %v129 = vld [vmem:[%s1 + $0x16c] sm:$0xf]
    %v130 = vld [vmem:[%s1 + $0x170] sm:$0xf]
    %v131 = vld [vmem:[%s1 + $0x174] sm:$0xf]
    %v132 = vld [vmem:[%s1 + $0x178] sm:$0xf]
    %v133 = vld [vmem:[%s1 + $0x17c] sm:$0xf]
    %v134 = vld [vmem:[%s1 + $0x180] sm:$0xf]
    %v135 = vld [vmem:[%s1 + $0x184] sm:$0xf]
    %v136 = vld [vmem:[%s1 + $0x188] sm:$0xf]
    %v137 = vld [vmem:[%s1 + $0x18c] sm:$0xf]
    %v138 = vld [vmem:[%s1 + $0x190] sm:$0xf]
    %v139 = vld [vmem:[%s1 + $0x194] sm:$0xf]
    %v140 = vld [vmem:[%s1 + $0x198] sm:$0xf]
    %v141 = vld [vmem:[%s1 + $0x19c] sm:$0xf]
    %v142 = vld [vmem:[%s1 + $0x1a0] sm:$0xf]
    %v143 = vld [vmem:[%s1 + $0x1a4] sm:$0xf]
    %v144 = vld [vmem:[%s1 + $0x1a8] sm:$0xf]
    %v145 = vld [vmem:[%s1 + $0x1ac] sm:$0xf]
    %v146 = vld [vmem:[%s1 + $0x1b0] sm:$0xf]
    %v147 = vld [vmem:[%s1 + $0x1b4] sm:$0xf]
    %v148 = vld [vmem:[%s1 + $0x1b8] sm:$0xf]
    %v149 = vld [vmem:[%s1 + $0x1bc] sm:$0xf]
    %v150 = vld [vmem:[%s1 + $0x1c0] sm:$0xf]
    %v151 = vld [vmem:[%s1 + $0x1c4] sm:$0xf]
    %v152 = vld [vmem:[%s1 + $0x1c8] sm:$0xf]
    %v153 = vld [vmem:[%s1 + $0x1cc] sm:$0xf]
    %v154 = vld [vmem:[%s1 + $0x1d0] sm:$0xf]
    %v155 = vld [vmem:[%s1 + $0x1d4] sm:$0xf]
    %v156 = vld [vmem:[%s1 + $0x1d8] sm:$0xf]
    %v157 = vld [vmem:[%s1 + $0x1dc] sm:$0xf]
    %v158 = vld [vmem:[%s1 + $0x1e0] sm:$0xf]
    %v159 = vld [vmem:[%s1 + $0x1e4] sm:$0xf]
    %v160 = vld [vmem:[%s1 + $0x1e8] sm:$0xf]
    %v161 = vld [vmem:[%s1 + $0x1ec] sm:$0xf]
    %v162 = vld [vmem:[%s1 + $0x1f0] sm:$0xf]
    %v163 = vld [vmem:[%s1 + $0x1f4] sm:$0xf]
    %v164 = vld [vmem:[%s1 + $0x1f8] sm:$0xf]
    %v165 = vld [vmem:[%s1 + $0x1fc] sm:$0xf]
    %v166 = vld [vmem:[%s1 + $0x200] sm:$0xf]
    %v167 = vld [vmem:[%s1 + $0x204] sm:$0xf]
    %v168 = vld [vmem:[%s1 + $0x208] sm:$0xf]
    %v169 = vld [vmem:[%s1 + $0x20c] sm:$0xf]
    %v170 = vld [vmem:[%s1 + $0x210] sm:$0xf]
    %v171 = vld [vmem:[%s1 + $0x214] sm:$0xf]
    %v172 = vld [vmem:[%s1 + $0x218] sm:$0xf]
    %v173 = vld [vmem:[%s1 + $0x21c] sm:$0xf]
    %v174 = vld [vmem:[%s1 + $0x220] sm:$0xf]
    %v175 = vld [vmem:[%s1 + $0x224] sm:$0xf]
    %v176 = vld [vmem:[%s1 + $0x228] sm:$0xf]
    %v177 = vld [vmem:[%s1 + $0x22c] sm:$0xf]
    %v178 = vld [vmem:[%s1 + $0x230] sm:$0xf]
    %v179 = vld [vmem:[%s1 + $0x234] sm:$0xf]
    %v180 = vld [vmem:[%s1 + $0x238] sm:$0xf]
    %v181 = vld [vmem:[%s1 + $0x23c] sm:$0xf]
    %v182 = vld [vmem:[%s1 + $0x240] sm:$0xf]
    %v183 = vld [vmem:[%s1 + $0x244] sm:$0xf]
    %v184 = vld [vmem:[%s1 + $0x248] sm:$0xf]
    %v185 = vld [vmem:[%s1 + $0x24c] sm:$0xf]
    %v186 = vld [vmem:[%s1 + $0x250] sm:$0xf]
    %v187 = vld [vmem:[%s1 + $0x254] sm:$0xf]
    %v188 = vld [vmem:[%s1 + $0x258] sm:$0xf]
    %v189 = vld [vmem:[%s1 + $0x25c] sm:$0xf]
    %v190 = vld [vmem:[%s2] sm:$0x1]
    %v192 = vlaneseq
    %v193 = vshrl.u32 %v192, 7
    %v194 = vsub.s32 0, %v193
    %v195 = vrot.slane %v190, %v194
    %v213 = vcombine.low %v22, %v24
    %v214 = vcombine.high %v22, %v24
    %v215 = vcombine.low %v26, %v28
    %v216 = vcombine.high %v26, %v28
    %v217 = vcombine.low %v30, %v32
    %v218 = vcombine.high %v30, %v32
    %v219 = vcombine.low %v34, %v36
    %v220 = vcombine.high %v34, %v36
    %v222 = vunpack.c.l.s4 1966171168
    %v223 = vunpack.c.0.s8 %v222
    %v224 = vlaneseq
    %v225 = vshrl.u32 %v224, 7
    %v226 = vsub.s32 %v223, %v225
    %v227 = vrot.slane %v213, %v226
    %v229 = vunpack.c.l.s4 1966171168
    %v230 = vunpack.c.0.s8 %v229
    %v231 = vlaneseq
    %v232 = vshrl.u32 %v231, 7
    %v233 = vsub.s32 %v230, %v232
    %v234 = vrot.slane %v214, %v233
    %v236 = vunpack.c.l.s4 1966171168
    %v237 = vunpack.c.0.s8 %v236
    %v238 = vlaneseq
    %v239 = vshrl.u32 %v238, 7
    %v240 = vsub.s32 %v237, %v239
    %v241 = vrot.slane %v215, %v240
    %v243 = vunpack.c.l.s4 1966171168
    %v244 = vunpack.c.0.s8 %v243
    %v245 = vlaneseq
    %v246 = vshrl.u32 %v245, 7
    %v247 = vsub.s32 %v244, %v246
    %v248 = vrot.slane %v216, %v247
    %v250 = vunpack.c.l.s4 1966171168
    %v251 = vunpack.c.0.s8 %v250
    %v252 = vlaneseq
    %v253 = vshrl.u32 %v252, 7
    %v254 = vsub.s32 %v251, %v253
    %v255 = vrot.slane %v217, %v254
    %v257 = vunpack.c.l.s4 1966171168
    %v258 = vunpack.c.0.s8 %v257
    %v259 = vlaneseq
    %v260 = vshrl.u32 %v259, 7
    %v261 = vsub.s32 %v258, %v260
    %v262 = vrot.slane %v218, %v261
    %v264 = vunpack.c.l.s4 1966171168
    %v265 = vunpack.c.0.s8 %v264
    %v266 = vlaneseq
    %v267 = vshrl.u32 %v266, 7
    %v268 = vsub.s32 %v265, %v267
    %v269 = vrot.slane %v219, %v268
    %v271 = vunpack.c.l.s4 1966171168
    %v272 = vunpack.c.0.s8 %v271
    %v273 = vlaneseq
    %v274 = vshrl.u32 %v273, 7
    %v275 = vsub.s32 %v272, %v274
    %v276 = vrot.slane %v220, %v275
    %v277 = vcombine.low %v227, %v241
    %v278 = vcombine.high %v227, %v241
    %v279 = vcombine.low %v234, %v248
    %v280 = vcombine.high %v234, %v248
    %v281 = vcombine.low %v255, %v269
    %v282 = vcombine.high %v255, %v269
    %v283 = vcombine.low %v262, %v276
    %v284 = vcombine.high %v262, %v276
    %v286 = vunpack.c.l.s4 1966171168
    %v287 = vunpack.c.0.s8 %v286
    %v288 = vlaneseq
    %v289 = vshrl.u32 %v288, 7
    %v290 = vsub.s32 %v287, %v289
    %v291 = vrot.slane %v277, %v290
    %v293 = vunpack.c.l.s4 1966171168
    %v294 = vunpack.c.0.s8 %v293
    %v295 = vlaneseq
    %v296 = vshrl.u32 %v295, 7
    %v297 = vsub.s32 %v294, %v296
    %v298 = vrot.slane %v279, %v297
    %v300 = vunpack.c.l.s4 1966171168
    %v301 = vunpack.c.0.s8 %v300
    %v302 = vlaneseq
    %v303 = vshrl.u32 %v302, 7
    %v304 = vsub.s32 %v301, %v303
    %v305 = vrot.slane %v278, %v304
    %v307 = vunpack.c.l.s4 1966171168
    %v308 = vunpack.c.0.s8 %v307
    %v309 = vlaneseq
    %v310 = vshrl.u32 %v309, 7
    %v311 = vsub.s32 %v308, %v310
    %v312 = vrot.slane %v280, %v311
    %v314 = vunpack.c.l.s4 1966171168
    %v315 = vunpack.c.0.s8 %v314
    %v316 = vlaneseq
    %v317 = vshrl.u32 %v316, 7
    %v318 = vsub.s32 %v315, %v317
    %v319 = vrot.slane %v281, %v318
    %v321 = vunpack.c.l.s4 1966171168
    %v322 = vunpack.c.0.s8 %v321
    %v323 = vlaneseq
    %v324 = vshrl.u32 %v323, 7
    %v325 = vsub.s32 %v322, %v324
    %v326 = vrot.slane %v283, %v325
    %v328 = vunpack.c.l.s4 1966171168
    %v329 = vunpack.c.0.s8 %v328
    %v330 = vlaneseq
    %v331 = vshrl.u32 %v330, 7
    %v332 = vsub.s32 %v329, %v331
    %v333 = vrot.slane %v282, %v332
    %v335 = vunpack.c.l.s4 1966171168
    %v336 = vunpack.c.0.s8 %v335
    %v337 = vlaneseq
    %v338 = vshrl.u32 %v337, 7
    %v339 = vsub.s32 %v336, %v338
    %v340 = vrot.slane %v284, %v339
    %v341 = vcombine.low %v291, %v319
    %v342 = vcombine.high %v291, %v319
    %v343 = vcombine.low %v298, %v326
    %v344 = vcombine.high %v298, %v326
    %v345 = vcombine.low %v305, %v333
    %v346 = vcombine.high %v305, %v333
    %v347 = vcombine.low %v312, %v340
    %v348 = vcombine.high %v312, %v340
    %v349 = vcombine.low %v23, %v25
    %v350 = vcombine.low %v27, %v29
    %v351 = vcombine.low %v31, %v33
    %v352 = vcombine.low %v35, %v37
    %v354 = vunpack.c.l.s4 1966171168
    %v355 = vunpack.c.0.s8 %v354
    %v356 = vlaneseq
    %v357 = vshrl.u32 %v356, 7
    %v358 = vsub.s32 %v355, %v357
    %v359 = vrot.slane %v349, %v358
    %v361 = vunpack.c.l.s4 1966171168
    %v362 = vunpack.c.0.s8 %v361
    %v363 = vlaneseq
    %v364 = vshrl.u32 %v363, 7
    %v365 = vsub.s32 %v362, %v364
    %v366 = vrot.slane %v350, %v365
    %v368 = vunpack.c.l.s4 1966171168
    %v369 = vunpack.c.0.s8 %v368
    %v370 = vlaneseq
    %v371 = vshrl.u32 %v370, 7
    %v372 = vsub.s32 %v369, %v371
    %v373 = vrot.slane %v351, %v372
    %v375 = vunpack.c.l.s4 1966171168
    %v376 = vunpack.c.0.s8 %v375
    %v377 = vlaneseq
    %v378 = vshrl.u32 %v377, 7
    %v379 = vsub.s32 %v376, %v378
    %v380 = vrot.slane %v352, %v379
    %v381 = vcombine.low %v359, %v366
    %v382 = vcombine.high %v359, %v366
    %v383 = vcombine.low %v373, %v380
    %v384 = vcombine.high %v373, %v380
    %v386 = vunpack.c.l.s4 1966171168
    %v387 = vunpack.c.0.s8 %v386
    %v388 = vlaneseq
    %v389 = vshrl.u32 %v388, 7
    %v390 = vsub.s32 %v387, %v389
    %v391 = vrot.slane %v381, %v390
    %v393 = vunpack.c.l.s4 1966171168
    %v394 = vunpack.c.0.s8 %v393
    %v395 = vlaneseq
    %v396 = vshrl.u32 %v395, 7
    %v397 = vsub.s32 %v394, %v396
    %v398 = vrot.slane %v382, %v397
    %v400 = vunpack.c.l.s4 1966171168
    %v401 = vunpack.c.0.s8 %v400
    %v402 = vlaneseq
    %v403 = vshrl.u32 %v402, 7
    %v404 = vsub.s32 %v401, %v403
    %v405 = vrot.slane %v383, %v404
    %v407 = vunpack.c.l.s4 1966171168
    %v408 = vunpack.c.0.s8 %v407
    %v409 = vlaneseq
    %v410 = vshrl.u32 %v409, 7
    %v411 = vsub.s32 %v408, %v410
    %v412 = vrot.slane %v384, %v411
    %v413 = vcombine.low %v391, %v405
    %v414 = vcombine.low %v398, %v412
    %v576 = vunpack.c.l.b16 %v38
    %v577 = vunpack.c.l.b16 %v39
    %v578 = vunpack.c.l.b16 %v40
    %v579 = vunpack.c.l.b16 %v41
    %v580 = vunpack.c.l.b16 %v42
    %v581 = vunpack.c.l.b16 %v43
    %v582 = vunpack.c.l.b16 %v44
    %v583 = vunpack.c.l.b16 %v45
    %v584 = vunpack.c.l.b16 %v46
    %v585 = vunpack.c.l.b16 %v47
    %v586 = vunpack.c.l.b16 %v48
    %v587 = vunpack.c.l.b16 %v49
    %v588 = vunpack.c.l.b16 %v50
    %v589 = vunpack.c.l.b16 %v51
    %v590 = vunpack.c.l.b16 %v52
    %v591 = vunpack.c.l.b16 %v53
    %v592 = vunpack.c.l.b16 %v54
    %v593 = vunpack.c.l.b16 %v55
    %v594 = vunpack.c.l.b16 %v56
    %v595 = vunpack.c.l.b16 %v57
    %v596 = vunpack.c.l.b16 %v58
    %v597 = vunpack.c.l.b16 %v59
    %v598 = vunpack.c.l.b16 %v60
    %v599 = vunpack.c.l.b16 %v61
    %v600 = vunpack.c.l.b16 %v62
    %v601 = vunpack.c.l.b16 %v63
    %v602 = vunpack.c.l.b16 %v64
    %v603 = vunpack.c.l.b16 %v65
    %v604 = vunpack.c.l.b16 %v66
    %v605 = vunpack.c.l.b16 %v67
    %v606 = vunpack.c.l.b16 %v68
    %v607 = vunpack.c.l.b16 %v69
    %v608 = vunpack.c.l.b16 %v70
    %v609 = vunpack.c.l.b16 %v71
    %v610 = vunpack.c.l.b16 %v72
    %v611 = vunpack.c.l.b16 %v73
    %v612 = vunpack.c.l.b16 %v74
    %v613 = vunpack.c.l.b16 %v75
    %v614 = vunpack.c.l.b16 %v76
    %v615 = vunpack.c.l.b16 %v77
    %v616 = vunpack.c.l.b16 %v78
    %v617 = vunpack.c.l.b16 %v79
    %v618 = vunpack.c.l.b16 %v80
    %v619 = vunpack.c.l.b16 %v81
    %v620 = vunpack.c.l.b16 %v82
    %v621 = vunpack.c.l.b16 %v83
    %v622 = vunpack.c.l.b16 %v84
    %v623 = vunpack.c.l.b16 %v85
    %v624 = vunpack.c.l.b16 %v86
    %v625 = vunpack.c.l.b16 %v87
    %v626 = vunpack.c.l.b16 %v88
    %v627 = vunpack.c.l.b16 %v89
    %v628 = vunpack.c.l.b16 %v90
    %v629 = vunpack.c.l.b16 %v91
    %v630 = vunpack.c.l.b16 %v92
    %v631 = vunpack.c.l.b16 %v93
    %v632 = vunpack.c.l.b16 %v94
    %v633 = vunpack.c.l.b16 %v95
    %v634 = vunpack.c.l.b16 %v96
    %v635 = vunpack.c.l.b16 %v97
    %v636 = vunpack.c.l.b16 %v98
    %v637 = vunpack.c.l.b16 %v99
    %v638 = vunpack.c.l.b16 %v100
    %v639 = vunpack.c.l.b16 %v101
    %v640 = vunpack.c.l.b16 %v102
    %v641 = vunpack.c.l.b16 %v103
    %v642 = vunpack.c.l.b16 %v104
    %v643 = vunpack.c.l.b16 %v105
    %v644 = vunpack.c.l.b16 %v106
    %v645 = vunpack.c.l.b16 %v107
    %v646 = vunpack.c.l.b16 %v108
    %v647 = vunpack.c.l.b16 %v109
    %v648 = vunpack.c.l.b16 %v110
    %v649 = vunpack.c.l.b16 %v111
    %v650 = vunpack.c.l.b16 %v112
    %v651 = vunpack.c.l.b16 %v113
    %v652 = vunpack.c.l.b16 %v114
    %v653 = vunpack.c.l.b16 %v115
    %v654 = vunpack.c.l.b16 %v116
    %v655 = vunpack.c.l.b16 %v117
    %v656 = vunpack.c.l.b16 %v118
    %v657 = vunpack.c.l.b16 %v119
    %v658 = vunpack.c.l.b16 %v120
    %v659 = vunpack.c.l.b16 %v121
    %v660 = vunpack.c.l.b16 %v122
    %v661 = vunpack.c.l.b16 %v123
    %v662 = vunpack.c.l.b16 %v124
    %v663 = vunpack.c.l.b16 %v125
    %v664 = vunpack.c.l.b16 %v126
    %v665 = vunpack.c.l.b16 %v127
    %v666 = vunpack.c.l.b16 %v128
    %v667 = vunpack.c.l.b16 %v129
    %v668 = vunpack.c.l.b16 %v130
    %v669 = vunpack.c.l.b16 %v131
    %v670 = vunpack.c.l.b16 %v132
    %v671 = vunpack.c.l.b16 %v133
    %v672 = vunpack.c.l.b16 %v134
    %v673 = vunpack.c.l.b16 %v135
    %v674 = vunpack.c.l.b16 %v136
    %v675 = vunpack.c.l.b16 %v137
    %v676 = vunpack.c.l.b16 %v138
    %v677 = vunpack.c.l.b16 %v139
    %v678 = vunpack.c.l.b16 %v140
    %v679 = vunpack.c.l.b16 %v141
    %v680 = vunpack.c.l.b16 %v142
    %v681 = vunpack.c.l.b16 %v143
    %v682 = vunpack.c.l.b16 %v144
    %v683 = vunpack.c.l.b16 %v145
    %v684 = vunpack.c.l.b16 %v146
    %v685 = vunpack.c.l.b16 %v147
    %v686 = vunpack.c.l.b16 %v148
    %v687 = vunpack.c.l.b16 %v149
    %v688 = vunpack.c.l.b16 %v150
    %v689 = vunpack.c.l.b16 %v151
    %v690 = vunpack.c.l.b16 %v152
    %v691 = vunpack.c.l.b16 %v153
    %v692 = vunpack.c.l.b16 %v154
    %v693 = vunpack.c.l.b16 %v155
    %v694 = vunpack.c.l.b16 %v156
    %v695 = vunpack.c.l.b16 %v157
    %v696 = vunpack.c.l.b16 %v158
    %v697 = vunpack.c.l.b16 %v159
    %v698 = vunpack.c.l.b16 %v160
    %v699 = vunpack.c.l.b16 %v161
    %v700 = vunpack.c.l.b16 %v162
    %v701 = vunpack.c.l.b16 %v163
    %v702 = vunpack.c.l.b16 %v164
    %v703 = vunpack.c.l.b16 %v165
    %v704 = vunpack.c.l.b16 %v166
    %v705 = vunpack.c.l.b16 %v167
    %v706 = vunpack.c.l.b16 %v168
    %v707 = vunpack.c.l.b16 %v169
    %v708 = vunpack.c.l.b16 %v170
    %v709 = vunpack.c.l.b16 %v171
    %v710 = vunpack.c.l.b16 %v172
    %v711 = vunpack.c.l.b16 %v173
    %v712 = vunpack.c.l.b16 %v174
    %v713 = vunpack.c.l.b16 %v175
    %v714 = vunpack.c.l.b16 %v176
    %v715 = vunpack.c.l.b16 %v177
    %v716 = vunpack.c.l.b16 %v178
    %v717 = vunpack.c.l.b16 %v179
    %v718 = vunpack.c.l.b16 %v180
    %v719 = vunpack.c.l.b16 %v181
    %v720 = vunpack.c.l.b16 %v182
    %v721 = vunpack.c.l.b16 %v183
    %v722 = vunpack.c.l.b16 %v184
    %v723 = vunpack.c.l.b16 %v185
    %v724 = vunpack.c.l.b16 %v186
    %v725 = vunpack.c.l.b16 %v187
    %v726 = vunpack.c.l.b16 %v188
    %v727 = vunpack.c.l.b16 %v189
    %v728 = vpack.c.b16 %v577, %v576
    %v729 = vpack.c.b16 %v579, %v578
    %v730 = vpack.c.b16 %v581, %v580
    %v731 = vpack.c.b16 %v583, %v582
    %v732 = vpack.c.b16 %v585, %v584
    %v733 = vpack.c.b16 %v587, %v586
    %v734 = vpack.c.b16 %v589, %v588
    %v735 = vpack.c.b16 %v591, %v590
    %v736 = vpack.c.b16 %v593, %v592
    %v737 = vpack.c.b16 %v595, %v594
    %v738 = vpack.c.b16 %v597, %v596
    %v739 = vpack.c.b16 %v599, %v598
    %v740 = vpack.c.b16 %v601, %v600
    %v741 = vpack.c.b16 %v603, %v602
    %v742 = vpack.c.b16 %v605, %v604
    %v743 = vpack.c.b16 %v607, %v606
    %v744 = vpack.c.b16 %v609, %v608
    %v745 = vpack.c.b16 %v611, %v610
    %v746 = vpack.c.b16 %v613, %v612
    %v747 = vpack.c.b16 %v615, %v614
    %v748 = vpack.c.b16 %v617, %v616
    %v749 = vpack.c.b16 %v619, %v618
    %v750 = vpack.c.b16 %v621, %v620
    %v751 = vpack.c.b16 %v623, %v622
    %v752 = vpack.c.b16 %v625, %v624
    %v753 = vpack.c.b16 %v627, %v626
    %v754 = vpack.c.b16 %v629, %v628
    %v755 = vpack.c.b16 %v631, %v630
    %v756 = vpack.c.b16 %v633, %v632
    %v757 = vpack.c.b16 %v635, %v634
    %v758 = vpack.c.b16 %v637, %v636
    %v759 = vpack.c.b16 %v639, %v638
    %v760 = vpack.c.b16 %v641, %v640
    %v761 = vpack.c.b16 %v643, %v642
    %v762 = vpack.c.b16 %v645, %v644
    %v763 = vpack.c.b16 %v647, %v646
    %v764 = vpack.c.b16 %v649, %v648
    %v765 = vpack.c.b16 %v651, %v650
    %v766 = vpack.c.b16 %v653, %v652
    %v767 = vpack.c.b16 %v655, %v654
    %v768 = vpack.c.b16 %v657, %v656
    %v769 = vpack.c.b16 %v659, %v658
    %v770 = vpack.c.b16 %v661, %v660
    %v771 = vpack.c.b16 %v663, %v662
    %v772 = vpack.c.b16 %v665, %v664
    %v773 = vpack.c.b16 %v667, %v666
    %v774 = vpack.c.b16 %v669, %v668
    %v775 = vpack.c.b16 %v671, %v670
    %v776 = vpack.c.b16 %v673, %v672
    %v777 = vpack.c.b16 %v675, %v674
    %v778 = vpack.c.b16 %v677, %v676
    %v779 = vpack.c.b16 %v679, %v678
    %v780 = vpack.c.b16 %v681, %v680
    %v781 = vpack.c.b16 %v683, %v682
    %v782 = vpack.c.b16 %v685, %v684
    %v783 = vpack.c.b16 %v687, %v686
    %v784 = vpack.c.b16 %v689, %v688
    %v785 = vpack.c.b16 %v691, %v690
    %v786 = vpack.c.b16 %v693, %v692
    %v787 = vpack.c.b16 %v695, %v694
    %v788 = vpack.c.b16 %v697, %v696
    %v789 = vpack.c.b16 %v699, %v698
    %v790 = vpack.c.b16 %v701, %v700
    %v791 = vpack.c.b16 %v703, %v702
    %v792 = vpack.c.b16 %v705, %v704
    %v793 = vpack.c.b16 %v707, %v706
    %v794 = vpack.c.b16 %v709, %v708
    %v795 = vpack.c.b16 %v711, %v710
    %v796 = vpack.c.b16 %v713, %v712
    %v797 = vpack.c.b16 %v715, %v714
    %v798 = vpack.c.b16 %v717, %v716
    %v799 = vpack.c.b16 %v719, %v718
    %v800 = vpack.c.b16 %v721, %v720
    %v801 = vpack.c.b16 %v723, %v722
    %v802 = vpack.c.b16 %v725, %v724
    %v803 = vpack.c.b16 %v727, %v726
    %vm880 = vcmask 523264
    %v882 = vsel %vm880, %v414, 0
    %884 = vmatprep.subr.bf16.mxu0 0
    %885 = vmatpush1.bf16.msra.mxu0 %v728
    %886 = vmatprep.subr.bf16.mxu0 0
    %887 = vmatpush1.bf16.msra.mxu0 %v729
    %888 = vmatprep.subr.bf16.mxu0 0
    %889 = vmatpush1.bf16.msra.mxu0 %v730
    %890 = vmatprep.subr.bf16.mxu0 0
    %891 = vmatpush1.bf16.msra.mxu0 %v731
    %892 = vmatprep.subr.bf16.mxu0 0
    %893 = vmatpush1.bf16.msra.mxu0 %v732
    %894 = vmatprep.subr.bf16.mxu0 0
    %895 = vmatpush1.bf16.msra.mxu0 %v733
    %896 = vmatprep.subr.bf16.mxu0 0
    %897 = vmatpush1.bf16.msra.mxu0 %v734
    %898 = vmatprep.subr.bf16.mxu0 0
    %899 = vmatpush1.bf16.msra.mxu0 %v735
    %900 = vmatprep.subr.bf16.mxu0 0
    %901 = vmatpush1.bf16.msra.mxu0 %v736
    %902 = vmatprep.subr.bf16.mxu0 0
    %903 = vmatpush1.bf16.msra.mxu0 %v737
    %904 = vmatprep.subr.bf16.mxu0 0
    %905 = vmatpush1.bf16.msra.mxu0 %v738
    %906 = vmatprep.subr.bf16.mxu0 0
    %907 = vmatpush1.bf16.msra.mxu0 %v739
    %908 = vmatprep.subr.bf16.mxu0 0
    %909 = vmatpush1.bf16.msra.mxu0 %v740
    %910 = vmatprep.subr.bf16.mxu0 0
    %911 = vmatpush1.bf16.msra.mxu0 %v741
    %912 = vmatprep.subr.bf16.mxu0 0
    %913 = vmatpush1.bf16.msra.mxu0 %v742
    %914 = vmatprep.subr.bf16.mxu0 0
    %915 = vmatpush1.bf16.msra.mxu0 %v743
    %916 = vmatprep.mubr.bf16.mxu0 %v345
    %917 = vmatmul.mubr.bf16.gmra.mrb[0].mxu0 %v341
    %v918 = vpop.f32.mrb[0].mxu0
    %v919 = vadd.f32 %v195, %v918
    %v920 = vpop.f32.mrb[0].mxu0
    %v921 = vpop.f32.mrb[0].mxu0
    %v922 = vadd.f32 %v195, %v921
    %v923 = vpop.f32.mrb[0].mxu0
    %924 = vdwg.mxu0
    %925 = vmatprep.subr.bf16.mxu0 0
    %926 = vmatpush1.bf16.msra.mxu0 %v744
    %927 = vmatprep.subr.bf16.mxu0 0
    %928 = vmatpush1.bf16.msra.mxu0 %v745
    %929 = vmatprep.subr.bf16.mxu0 0
    %930 = vmatpush1.bf16.msra.mxu0 %v746
    %931 = vmatprep.subr.bf16.mxu0 0
    %932 = vmatpush1.bf16.msra.mxu0 %v747
    %933 = vmatprep.subr.bf16.mxu0 0
    %934 = vmatpush1.bf16.msra.mxu0 %v748
    %935 = vmatprep.subr.bf16.mxu0 0
    %936 = vmatpush1.bf16.msra.mxu0 %v749
    %937 = vmatprep.subr.bf16.mxu0 0
    %938 = vmatpush1.bf16.msra.mxu0 %v750
    %939 = vmatprep.subr.bf16.mxu0 0
    %940 = vmatpush1.bf16.msra.mxu0 %v751
    %941 = vmatprep.subr.bf16.mxu0 0
    %942 = vmatpush1.bf16.msra.mxu0 %v752
    %943 = vmatprep.subr.bf16.mxu0 0
    %944 = vmatpush1.bf16.msra.mxu0 %v753
    %945 = vmatprep.subr.bf16.mxu0 0
    %946 = vmatpush1.bf16.msra.mxu0 %v754
    %947 = vmatprep.subr.bf16.mxu0 0
    %948 = vmatpush1.bf16.msra.mxu0 %v755
    %949 = vmatprep.subr.bf16.mxu0 0
    %950 = vmatpush1.bf16.msra.mxu0 %v756
    %951 = vmatprep.subr.bf16.mxu0 0
    %952 = vmatpush1.bf16.msra.mxu0 %v757
    %953 = vmatprep.subr.bf16.mxu0 0
    %954 = vmatpush1.bf16.msra.mxu0 %v758
    %955 = vmatprep.subr.bf16.mxu0 0
    %956 = vmatpush1.bf16.msra.mxu0 %v759
    %957 = vmatprep.mubr.bf16.mxu0 %v346
    %958 = vmatmul.mubr.bf16.gmra.mrb[0].mxu0 %v342
    %v959 = vpop.f32.mrb[0].mxu0
    %v960 = vadd.f32 %v919, %v959
    %v961 = vpop.f32.mrb[0].mxu0
    %v962 = vpop.f32.mrb[0].mxu0
    %v963 = vadd.f32 %v922, %v962
    %v964 = vpop.f32.mrb[0].mxu0
    %965 = vdwg.mxu0
    %966 = vmatprep.subr.bf16.mxu0 0
    %967 = vmatpush1.bf16.msra.mxu0 %v760
    %968 = vmatprep.subr.bf16.mxu0 0
    %969 = vmatpush1.bf16.msra.mxu0 %v761
    %970 = vmatprep.subr.bf16.mxu0 0
    %971 = vmatpush1.bf16.msra.mxu0 %v762
    %972 = vmatprep.subr.bf16.mxu0 0
    %973 = vmatpush1.bf16.msra.mxu0 %v763
    %974 = vmatprep.subr.bf16.mxu0 0
    %975 = vmatpush1.bf16.msra.mxu0 %v764
    %976 = vmatprep.subr.bf16.mxu0 0
    %977 = vmatpush1.bf16.msra.mxu0 %v765
    %978 = vmatprep.subr.bf16.mxu0 0
    %979 = vmatpush1.bf16.msra.mxu0 %v766
    %980 = vmatprep.subr.bf16.mxu0 0
    %981 = vmatpush1.bf16.msra.mxu0 %v767
    %982 = vmatprep.subr.bf16.mxu0 0
    %983 = vmatpush1.bf16.msra.mxu0 %v768
    %984 = vmatprep.subr.bf16.mxu0 0
    %985 = vmatpush1.bf16.msra.mxu0 %v769
    %986 = vmatprep.subr.bf16.mxu0 0
    %987 = vmatpush1.bf16.msra.mxu0 %v770
    %988 = vmatprep.subr.bf16.mxu0 0
    %989 = vmatpush1.bf16.msra.mxu0 %v771
    %990 = vmatprep.subr.bf16.mxu0 0
    %991 = vmatpush1.bf16.msra.mxu0 %v772
    %992 = vmatprep.subr.bf16.mxu0 0
    %993 = vmatpush1.bf16.msra.mxu0 %v773
    %994 = vmatprep.subr.bf16.mxu0 0
    %995 = vmatpush1.bf16.msra.mxu0 %v774
    %996 = vmatprep.subr.bf16.mxu0 0
    %997 = vmatpush1.bf16.msra.mxu0 %v775
    %998 = vmatprep.mubr.bf16.mxu0 %v347
    %999 = vmatmul.mubr.bf16.gmra.mrb[0].mxu0 %v343
    %v1000 = vpop.f32.mrb[0].mxu0
    %v1001 = vadd.f32 %v960, %v1000
    %v1002 = vpop.f32.mrb[0].mxu0
    %v1003 = vpop.f32.mrb[0].mxu0
    %v1004 = vadd.f32 %v963, %v1003
    %v1005 = vpop.f32.mrb[0].mxu0
    %1006 = vdwg.mxu0
    %1007 = vmatprep.subr.bf16.mxu0 0
    %1008 = vmatpush1.bf16.msra.mxu0 %v776
    %1009 = vmatprep.subr.bf16.mxu0 0
    %1010 = vmatpush1.bf16.msra.mxu0 %v777
    %1011 = vmatprep.subr.bf16.mxu0 0
    %1012 = vmatpush1.bf16.msra.mxu0 %v778
    %1013 = vmatprep.subr.bf16.mxu0 0
    %1014 = vmatpush1.bf16.msra.mxu0 %v779
    %1015 = vmatprep.subr.bf16.mxu0 0
    %1016 = vmatpush1.bf16.msra.mxu0 %v780
    %1017 = vmatprep.subr.bf16.mxu0 0
    %1018 = vmatpush1.bf16.msra.mxu0 %v781
    %1019 = vmatprep.subr.bf16.mxu0 0
    %1020 = vmatpush1.bf16.msra.mxu0 %v782
    %1021 = vmatprep.subr.bf16.mxu0 0
    %1022 = vmatpush1.bf16.msra.mxu0 %v783
    %1023 = vmatprep.subr.bf16.mxu0 0
    %1024 = vmatpush1.bf16.msra.mxu0 %v784
    %1025 = vmatprep.subr.bf16.mxu0 0
    %1026 = vmatpush1.bf16.msra.mxu0 %v785
    %1027 = vmatprep.subr.bf16.mxu0 0
    %1028 = vmatpush1.bf16.msra.mxu0 %v786
    %1029 = vmatprep.subr.bf16.mxu0 0
    %1030 = vmatpush1.bf16.msra.mxu0 %v787
    %1031 = vmatprep.subr.bf16.mxu0 0
    %1032 = vmatpush1.bf16.msra.mxu0 %v788
    %1033 = vmatprep.subr.bf16.mxu0 0
    %1034 = vmatpush1.bf16.msra.mxu0 %v789
    %1035 = vmatprep.subr.bf16.mxu0 0
    %1036 = vmatpush1.bf16.msra.mxu0 %v790
    %1037 = vmatprep.subr.bf16.mxu0 0
    %1038 = vmatpush1.bf16.msra.mxu0 %v791
    %1039 = vmatprep.mubr.bf16.mxu0 %v348
    %1040 = vmatmul.mubr.bf16.gmra.mrb[0].mxu0 %v344
    %v1041 = vpop.f32.mrb[0].mxu0
    %v1042 = vadd.f32 %v1001, %v1041
    %v1043 = vpop.f32.mrb[0].mxu0
    %v1044 = vpop.f32.mrb[0].mxu0
    %v1045 = vadd.f32 %v1004, %v1044
    %v1046 = vpop.f32.mrb[0].mxu0
    %1047 = vdwg.mxu0
    %1048 = vmatprep.subr.bf16.mxu0 0
    %1049 = vmatpush1.bf16.msra.mxu0 %v792
    %1050 = vmatprep.subr.bf16.mxu0 0
    %1051 = vmatpush1.bf16.msra.mxu0 %v793
    %1052 = vmatprep.subr.bf16.mxu0 0
    %1053 = vmatpush1.bf16.msra.mxu0 %v794
    %1054 = vmatprep.subr.bf16.mxu0 0
    %1055 = vmatpush1.bf16.msra.mxu0 %v795
    %1056 = vmatprep.subr.bf16.mxu0 0
    %1057 = vmatpush1.bf16.msra.mxu0 %v796
    %1058 = vmatprep.subr.bf16.mxu0 0
    %1059 = vmatpush1.bf16.msra.mxu0 %v797
    %1060 = vmatprep.subr.bf16.mxu0 0
    %1061 = vmatpush1.bf16.msra.mxu0 %v798
    %1062 = vmatprep.subr.bf16.mxu0 0
    %1063 = vmatpush1.bf16.msra.mxu0 %v799
    %1064 = vmatprep.subr.bf16.mxu0 0
    %1065 = vmatpush1.bf16.msra.mxu0 %v800
    %1066 = vmatprep.subr.bf16.mxu0 0
    %1067 = vmatpush1.bf16.msra.mxu0 %v801
    %1068 = vmatprep.subr.bf16.mxu0 0
    %1069 = vmatpush1.bf16.msra.mxu0 %v802
    %1070 = vmatprep.subr.bf16.mxu0 0
    %1071 = vmatpush1.bf16.msra.mxu0 %v803
    %1072 = vmatprep.subr.bf16.mxu0 0
    %1073 = vmatpush1.bf16.msra.mxu0 0
    %1074 = vmatprep.subr.bf16.mxu0 0
    %1075 = vmatpush1.bf16.msra.mxu0 0
    %1076 = vmatprep.subr.bf16.mxu0 0
    %1077 = vmatpush1.bf16.msra.mxu0 0
    %1078 = vmatprep.subr.bf16.mxu0 0
    %1079 = vmatpush1.bf16.msra.mxu0 0
    %1080 = vmatprep.mubr.bf16.mxu0 %v882
    %1081 = vmatmul.mubr.bf16.gmra.mrb[0].mxu0 %v413
    %v1082 = vpop.f32.mrb[0].mxu0
    %v1083 = vadd.f32 %v1042, %v1082
    %v1084 = vpop.f32.mrb[0].mxu0
    %v1085 = vpop.f32.mrb[0].mxu0
    %v1086 = vadd.f32 %v1045, %v1085
    %v1087 = vpop.f32.mrb[0].mxu0
    %1088 = vdwg.mxu0
    %v1089 = vmax.f32 %v1083, 0.0
    %v1090 = vmax.f32 %v1086, 0.0
    %v1091 = vpack.c.bf16 %v1090, %v1089
    %v1092 = vld [vmem:[%s3] sm:$0xf]
    %v1093 = vld [vmem:[%s3 + $0x4] sm:$0xf]
    %v1094 = vld [vmem:[%s3 + $0x8] sm:$0xf]
    %v1095 = vld [vmem:[%s3 + $0xc] sm:$0xf]
    %v1096 = vld [vmem:[%s3 + $0x10] sm:$0xf]
    %v1097 = vld [vmem:[%s3 + $0x14] sm:$0xf]
    %v1098 = vld [vmem:[%s3 + $0x18] sm:$0xf]
    %v1099 = vld [vmem:[%s3 + $0x1c] sm:$0xf]
    %v1100 = vld [vmem:[%s3 + $0x20] sm:$0xf]
    %v1101 = vld [vmem:[%s3 + $0x24] sm:$0xf]
    %v1102 = vld [vmem:[%s3 + $0x28] sm:$0xf]
    %v1103 = vld [vmem:[%s3 + $0x2c] sm:$0xf]
    %v1104 = vld [vmem:[%s3 + $0x30] sm:$0xf]
    %v1105 = vld [vmem:[%s3 + $0x34] sm:$0xf]
    %v1106 = vld [vmem:[%s3 + $0x38] sm:$0xf]
    %v1107 = vld [vmem:[%s3 + $0x3c] sm:$0xf]
    %v1108 = vld [vmem:[%s4] sm:$0x1]
    %v1110 = vlaneseq
    %v1111 = vshrl.u32 %v1110, 7
    %v1112 = vsub.s32 0, %v1111
    %v1113 = vrot.slane %v1108, %v1112
    %v1131 = vunpack.c.l.b16 %v1092
    %v1132 = vunpack.c.l.b16 %v1093
    %v1133 = vunpack.c.l.b16 %v1094
    %v1134 = vunpack.c.l.b16 %v1095
    %v1135 = vunpack.c.l.b16 %v1096
    %v1136 = vunpack.c.l.b16 %v1097
    %v1137 = vunpack.c.l.b16 %v1098
    %v1138 = vunpack.c.l.b16 %v1099
    %v1139 = vunpack.c.l.b16 %v1100
    %v1140 = vunpack.c.l.b16 %v1101
    %v1141 = vunpack.c.l.b16 %v1102
    %v1142 = vunpack.c.l.b16 %v1103
    %v1143 = vunpack.c.l.b16 %v1104
    %v1144 = vunpack.c.l.b16 %v1105
    %v1145 = vunpack.c.l.b16 %v1106
    %v1146 = vunpack.c.l.b16 %v1107
    %v1147 = vpack.c.b16 %v1132, %v1131
    %v1148 = vpack.c.b16 %v1134, %v1133
    %v1149 = vpack.c.b16 %v1136, %v1135
    %v1150 = vpack.c.b16 %v1138, %v1137
    %v1151 = vpack.c.b16 %v1140, %v1139
    %v1152 = vpack.c.b16 %v1142, %v1141
    %v1153 = vpack.c.b16 %v1144, %v1143
    %v1154 = vpack.c.b16 %v1146, %v1145
    %1163 = vmatprep.subr.bf16.mxu0 0
    %1164 = vmatpush1.bf16.msra.mxu0 %v1147
    %1165 = vmatprep.subr.bf16.mxu0 0
    %1166 = vmatpush1.bf16.msra.mxu0 %v1148
    %1167 = vmatprep.subr.bf16.mxu0 0
    %1168 = vmatpush1.bf16.msra.mxu0 %v1149
    %1169 = vmatprep.subr.bf16.mxu0 0
    %1170 = vmatpush1.bf16.msra.mxu0 %v1150
    %1171 = vmatprep.subr.bf16.mxu0 0
    %1172 = vmatpush1.bf16.msra.mxu0 %v1151
    %1173 = vmatprep.subr.bf16.mxu0 0
    %1174 = vmatpush1.bf16.msra.mxu0 %v1152
    %1175 = vmatprep.subr.bf16.mxu0 0
    %1176 = vmatpush1.bf16.msra.mxu0 %v1153
    %1177 = vmatprep.subr.bf16.mxu0 0
    %1178 = vmatpush1.bf16.msra.mxu0 %v1154
    %1179 = vmatprep.subr.bf16.mxu0 0
    %1180 = vmatpush1.bf16.msra.mxu0 0
    %1181 = vmatprep.subr.bf16.mxu0 0
    %1182 = vmatpush1.bf16.msra.mxu0 0
    %1183 = vmatprep.subr.bf16.mxu0 0
    %1184 = vmatpush1.bf16.msra.mxu0 0
    %1185 = vmatprep.subr.bf16.mxu0 0
    %1186 = vmatpush1.bf16.msra.mxu0 0
    %1187 = vmatprep.subr.bf16.mxu0 0
    %1188 = vmatpush1.bf16.msra.mxu0 0
    %1189 = vmatprep.subr.bf16.mxu0 0
    %1190 = vmatpush1.bf16.msra.mxu0 0
    %1191 = vmatprep.subr.bf16.mxu0 0
    %1192 = vmatpush1.bf16.msra.mxu0 0
    %1193 = vmatprep.subr.bf16.mxu0 0
    %1194 = vmatpush1.bf16.msra.mxu0 0
    %1195 = vmatprep.mubr.bf16.mxu0 0
    %1196 = vmatmul.mubr.bf16.gmra.mrb[0].mxu0 %v1091
    %v1197 = vpop.f32.mrb[0].mxu0
    %v1198 = vadd.f32 %v1113, %v1197
    %v1199 = vpop.f32.mrb[0].mxu0
    %v1200 = vpop.f32.mrb[0].mxu0
    %v1201 = vadd.f32 %v1113, %v1200
    %v1202 = vpop.f32.mrb[0].mxu0
    %1203 = vdwg.mxu0
    %1204 = vst [vmem:[#allocation2] sm:$0xff] %v1198
    %1205 = vst [vmem:[#allocation2 + $0x8] sm:$0xff] %v1201
    // Predicated region
    $region22: #{resnet_forward.19} parent=1 // pred_check
      _
    $region23: #{resnet_forward.19} parent=1 // pred_check_branch
      %1207 = sbr.rel (0) target = $region25
    $region24: #{resnet_forward.19} parent=1 // pred_region
      %s1209 = ssub.s32 256, 32
      %1210 = vsyncadd [#allocation3], %s1209
      %s1211 = sshll.u32 [#allocation2], 4
      %s1212 = int_to_ptr.vmem [resolvable:$true] %s1211
      %1217 = dma.vmem_to_hbm [thread:$0]  %s1212, 32, %s5, [#allocation3], 32, 32, 2
    $region25: #{resnet_forward.19} parent=1 // pred_fallthru
      _
    // Predicated region
    $region26: #{resnet_forward.19} parent=1 // pred_check
      _
    $region27: #{resnet_forward.19} parent=1 // pred_check_branch
      %1219 = sbr.rel (0) target = $region29
    $region28: #{resnet_forward.19} parent=1 // pred_region
      %1220 = dma.done [#allocation3], 256
    $region29: #{resnet_forward.19} parent=1 // pred_fallthru
      _
    %1221 = vsyncpa [#allocation3], 1

</llo_original>
